<compile_context>
chip_gen: v7x
topology: tpu7x:2x2x1
jax: 0.10.0
libtpu: 0.0.40
codegen_flags: <defaults>
</compile_context>

<pallas_src>
import jax
import jax.numpy as jnp
from jax.experimental import pallas as pl
from jax.experimental.pallas import tpu as pltpu


def basic_block_kernel(x_ref, w1_ref, w2_ref, b1_ref, b2_ref, o_ref,
                       pad_ref, patch_ref):
    # x_ref    : (1, C, H*W)   f32   one channel-major image (also residual)
    # w1_ref   : (9*C, C)      bf16  conv1 weights, BN1 scale folded, (tap,ci) rows
    # w2_ref   : (9*C, C)      bf16  conv2 weights, BN2 scale folded
    # b1_ref   : (1, C)        f32   folded BN1 bias
    # b2_ref   : (1, C)        f32   folded BN2 bias
    # o_ref    : (1, C, H*W)   f32   output, channel-major
    # pad_ref  : (H+2, W+2, C) bf16  VMEM scratch: spatially padded activation
    # patch_ref: (H*W, 9*C)    bf16  VMEM scratch: im2col matmul operand
    _, C, HW = x_ref.shape
    Hp2, Wp2, _ = pad_ref.shape
    H, W = Hp2 - 2, Wp2 - 2
    taps = [(dh, dw) for dh in range(3) for dw in range(3)]

    # Zero only the top/bottom halo rows (left/right zero columns are written
    # together with the interior below).  Done every grid step so per-core
    # scratch is always initialized when the batch axis is split across TCs.
    zrow = jnp.zeros((1, W + 2, C), pad_ref.dtype)
    pad_ref[0:1, :, :] = zrow
    pad_ref[H + 1:H + 2, :, :] = zrow

    x_cm = x_ref[0]                      # (C, HW) f32 (residual stays f32)
    x_hwc = x_cm.T                       # (HW, C) f32 -- in-kernel relayout

    zcol_f32 = jnp.zeros((H, 1, C), jnp.float32)

    def set_interior(a_hwc_f32):
        # Write rows 1..H of the padded buffer in one go, with the zero side
        # columns baked into the value: full-extent store on the packed minor
        # dims, offset only on the untiled leading (H) dim.
        v = jnp.concatenate(
            [zcol_f32, a_hwc_f32.reshape(H, W, C), zcol_f32], axis=1)
        pad_ref[1:H + 1, :, :] = v.astype(pad_ref.dtype)

    def conv3x3(w_ref):
        # im2col: gather the 9 shifted views of the padded activation into one
        # (HW, 9*C) bf16 operand.  Taps are stored in pairs so each store is
        # 2*C lanes wide (a full 128-lane unmasked store at C=64).
        for p in range(4):
            (dh0, dw0), (dh1, dw1) = taps[2 * p], taps[2 * p + 1]
            s0 = pad_ref[dh0:dh0 + H, dw0:dw0 + W, :].reshape(HW, C)
            s1 = pad_ref[dh1:dh1 + H, dw1:dw1 + W, :].reshape(HW, C)
            patch_ref[:, 2 * p * C:(2 * p + 2) * C] = jnp.concatenate(
                [s0, s1], axis=-1)
        dh, dw = taps[8]
        patch_ref[:, 8 * C:9 * C] = (
            pad_ref[dh:dh + H, dw:dw + W, :].reshape(HW, C))
        # Single MXU matmul, contraction = 9*C, f32 accumulation.
        return jnp.dot(patch_ref[...], w_ref[...],
                       preferred_element_type=jnp.float32)      # (HW, C) f32

    # ---- conv1 + bn1 (scale folded into w1) + relu ----
    set_interior(x_hwc)
    y = jnp.maximum(conv3x3(w1_ref) + b1_ref[...], 0.0)

    # ---- conv2 + bn2 (scale folded into w2) ----
    set_interior(y)
    z = conv3x3(w2_ref) + b2_ref[...]

    # ---- residual add (f32) + relu; emit channel-major (C, HW) ----
    out = jnp.maximum(z + x_hwc, 0.0)
    o_ref[0] = out.T.astype(o_ref.dtype)


@jax.jit
def basic_block(x_nchw, w1, w2, s1, b1, s2, b2):
    """Fused BasicBlock forward (stride=1, no downsample).

    x_nchw: (N, C, H, W) f32.  w1/w2: (3, 3, C, C) HWIO.  s*/b*: (C,) folded
    inference-mode BatchNorm scale / bias.  Returns (N, C, H, W) f32.
    """
    N, C, H, W = x_nchw.shape
    assert w1.shape == (3, 3, C, C) and w2.shape == (3, 3, C, C)
    HW = H * W

    # Channel-major (N, C, H*W): a free reshape of NCHW -- no HBM transpose.
    x_cm = x_nchw.reshape(N, C, HW)

    # Fold BN scale into the conv weights, reshape to im2col form, cast bf16.
    w1f = (w1 * s1.reshape(1, 1, 1, C)).reshape(9 * C, C).astype(jnp.bfloat16)
    w2f = (w2 * s2.reshape(1, 1, 1, C)).reshape(9 * C, C).astype(jnp.bfloat16)
    b1f = b1.reshape(1, C).astype(jnp.float32)
    b2f = b2.reshape(1, C).astype(jnp.float32)

    # Derive the VMEM budget from actual block + scratch sizes (with headroom)
    # instead of hardcoding; inputs/outputs counted double-buffered.
    itemsize = jnp.dtype(x_nchw.dtype).itemsize
    scratch_bytes = ((H + 2) * (W + 2) * C * 2          # bf16 pad
                     + HW * 9 * C * 2)                  # bf16 patch
    io_bytes = 2 * (2 * C * HW * itemsize)              # x block + o block, x2
    wgt_bytes = 2 * (2 * 9 * C * C * 2 + 2 * C * 4)     # weights + biases, x2
    vmem_limit = int(min(96 * 2**20,
                         max(16 * 2**20,
                             2 * (scratch_bytes + io_bytes + wgt_bytes))))

    grid_spec = pltpu.PrefetchScalarGridSpec(
        num_scalar_prefetch=0,
        grid=(N,),
        in_specs=[
            pl.BlockSpec((1, C, HW), lambda n: (n, 0, 0)),
            pl.BlockSpec((9 * C, C), lambda n: (0, 0)),
            pl.BlockSpec((9 * C, C), lambda n: (0, 0)),
            pl.BlockSpec((1, C), lambda n: (0, 0)),
            pl.BlockSpec((1, C), lambda n: (0, 0)),
        ],
        out_specs=pl.BlockSpec((1, C, HW), lambda n: (n, 0, 0)),
        scratch_shapes=[
            pltpu.VMEM((H + 2, W + 2, C), jnp.bfloat16),   # padded activation
            pltpu.VMEM((HW, 9 * C), jnp.bfloat16),         # im2col operand
        ],
    )

    out_flat = pl.pallas_call(
        basic_block_kernel,
        out_shape=jax.ShapeDtypeStruct((N, C, HW), x_nchw.dtype),
        grid_spec=grid_spec,
        compiler_params=pltpu.CompilerParams(
            dimension_semantics=("parallel",),   # batch across TCs
            vmem_limit_bytes=vmem_limit,
        ),
    )(x_cm, w1f, w2f, b1f, b2f)

    # Free reshape back to NCHW.
    return out_flat.reshape(N, C, H, W)


def _reference(x_nchw, w1, w2, s1, b1, s2, b2):
    """Pure-JAX (f32) reference of the same fused BasicBlock, NCHW."""
    dn = jax.lax.conv_dimension_numbers(x_nchw.shape, w1.shape,
                                        ("NCHW", "HWIO", "NCHW"))

    def bn(t, s, b):
        return t * s.reshape(1, -1, 1, 1) + b.reshape(1, -1, 1, 1)

    y = jax.lax.conv_general_dilated(x_nchw, w1, (1, 1), "SAME",
                                     dimension_numbers=dn)
    y = jnp.maximum(bn(y, s1, b1), 0.0)
    z = jax.lax.conv_general_dilated(y, w2, (1, 1), "SAME",
                                     dimension_numbers=dn)
    z = bn(z, s2, b2)
    return jnp.maximum(z + x_nchw, 0.0)


if __name__ == "__main__":
    key = jax.random.PRNGKey(0)
    N, C, Hs, Ws = 2, 4, 16, 16          # inplanes = planes = 4, stride = 1
    eps = 1e-5

    ks = jax.random.split(key, 8)
    x_nchw = jax.random.normal(ks[0], (N, C, Hs, Ws), jnp.float32)

    # conv weights (kh, kw, Cin, Cout)
    w1 = 0.1 * jax.random.normal(ks[1], (3, 3, C, C), jnp.float32)
    w2 = 0.1 * jax.random.normal(ks[2], (3, 3, C, C), jnp.float32)

    # BatchNorm (inference mode, running stats) folded into scale/bias.
    gamma1 = 1.0 + 0.1 * jax.random.normal(ks[3], (C,), jnp.float32)
    beta1 = 0.1 * jax.random.normal(ks[4], (C,), jnp.float32)
    mean1 = 0.05 * jax.random.normal(ks[5], (C,), jnp.float32)
    var1 = 1.0 + 0.1 * jnp.abs(jax.random.normal(ks[6], (C,), jnp.float32))
    gamma2 = jnp.ones((C,), jnp.float32)
    beta2 = jnp.zeros((C,), jnp.float32)
    mean2 = 0.05 * jax.random.normal(ks[7], (C,), jnp.float32)
    var2 = jnp.ones((C,), jnp.float32) * 1.2

    s1 = gamma1 / jnp.sqrt(var1 + eps)
    b1 = beta1 - mean1 * s1
    s2 = gamma2 / jnp.sqrt(var2 + eps)
    b2 = beta2 - mean2 * s2

    out = basic_block(x_nchw, w1, w2, s1, b1, s2, b2)
    out = jax.block_until_ready(out)

    ref = _reference(x_nchw, w1, w2, s1, b1, s2, b2)
    assert out.shape == (N, C, Hs, Ws)
    # Kernel uses bf16 activations/weights on the MXU (f32 accumulation,
    # f32 residual) vs. pure-f32 reference -> relaxed tolerance.
    assert jnp.allclose(out, ref, atol=5e-2, rtol=5e-2), (
        float(jnp.max(jnp.abs(out - ref))))

    print("KERNEL_OK")
</pallas_src>

<mosaic_0001>
module attributes {stable_mosaic.version = 11 : i64} {
  func.func @basic_block_kernel(%arg0: i32, %arg1: memref<1x4x256xf32, #tpu.memory_space<vmem>>, %arg2: memref<36x4xbf16, #tpu.memory_space<vmem>>, %arg3: memref<36x4xbf16, #tpu.memory_space<vmem>>, %arg4: memref<1x4xf32, #tpu.memory_space<vmem>>, %arg5: memref<1x4xf32, #tpu.memory_space<vmem>>, %arg6: memref<1x4x256xf32, #tpu.memory_space<vmem>>, %arg7: memref<18x18x4xbf16, #tpu.memory_space<vmem>>, %arg8: memref<256x36xbf16, #tpu.memory_space<vmem>>) attributes {dimension_semantics = [#tpu.dimension_semantics<parallel>], iteration_bounds = array<i64: 2>, scalar_prefetch = 0 : i64, scratch_operands = 2 : i64, tpu.core_type = #tpu.core_type<tc>, window_params = [{transform_indices = @transform_0, window_bounds = array<i64: 1, 4, 256>}, {pipeline_mode = #tpu.pipeline_mode<synchronous>, transform_indices = @transform_1, window_bounds = array<i64: 36, 4>}, {pipeline_mode = #tpu.pipeline_mode<synchronous>, transform_indices = @transform_2, window_bounds = array<i64: 36, 4>}, {pipeline_mode = #tpu.pipeline_mode<synchronous>, transform_indices = @transform_3, window_bounds = array<i64: 1, 4>}, {pipeline_mode = #tpu.pipeline_mode<synchronous>, transform_indices = @transform_4, window_bounds = array<i64: 1, 4>}, {transform_indices = @transform_5, window_bounds = array<i64: 1, 4, 256>}]} {
    %cst = arith.constant 0.000000e+00 : bf16
    %0 = vector.broadcast %cst : bf16 to vector<1x18x4xbf16>
    %c0 = arith.constant 0 : index
    %c0_0 = arith.constant 0 : index
    %c0_1 = arith.constant 0 : index
    %1 = vector.load %arg7[%c0, %c0_0, %c0_1] : memref<18x18x4xbf16, #tpu.memory_space<vmem>>, vector<1x18x4xbf16>
    tpu.vector_store %arg7[%c0, %c0_0, %c0_1], %0 {strides = array<i32>} : memref<18x18x4xbf16, #tpu.memory_space<vmem>>, vector<1x18x4xbf16>,
    %c17 = arith.constant 17 : index
    %c0_2 = arith.constant 0 : index
    %c0_3 = arith.constant 0 : index
    %2 = vector.load %arg7[%c17, %c0_2, %c0_3] : memref<18x18x4xbf16, #tpu.memory_space<vmem>>, vector<1x18x4xbf16>
    tpu.vector_store %arg7[%c17, %c0_2, %c0_3], %0 {strides = array<i32>} : memref<18x18x4xbf16, #tpu.memory_space<vmem>>, vector<1x18x4xbf16>,
    %c0_4 = arith.constant 0 : index
    %c0_5 = arith.constant 0 : index
    %c0_6 = arith.constant 0 : index
    %3 = vector.load %arg1[%c0_4, %c0_5, %c0_6] : memref<1x4x256xf32, #tpu.memory_space<vmem>>, vector<1x4x256xf32>
    %4 = vector.shape_cast %3 : vector<1x4x256xf32> to vector<4x256xf32>
    %5 = tpu.transpose %4, [1, 0] : vector<4x256xf32> -> vector<256x4xf32>
    %cst_7 = arith.constant 0.000000e+00 : f32
    %6 = vector.broadcast %cst_7 : f32 to vector<16x1x4xf32>
    %7 = vector.shape_cast %5 : vector<256x4xf32> to vector<16x16x4xf32>
    %8 = tpu.concatenate %6, %7, %6 in 1 : vector<16x1x4xf32>, vector<16x16x4xf32>, vector<16x1x4xf32> -> vector<16x18x4xf32>
    %9 = arith.truncf %8 : vector<16x18x4xf32> to vector<16x18x4xbf16>
    %c1 = arith.constant 1 : index
    %c0_8 = arith.constant 0 : index
    %c0_9 = arith.constant 0 : index
    %10 = vector.load %arg7[%c1, %c0_8, %c0_9] : memref<18x18x4xbf16, #tpu.memory_space<vmem>>, vector<16x18x4xbf16>
    tpu.vector_store %arg7[%c1, %c0_8, %c0_9], %9 {strides = array<i32>} : memref<18x18x4xbf16, #tpu.memory_space<vmem>>, vector<16x18x4xbf16>,
    %c0_10 = arith.constant 0 : index
    %c0_11 = arith.constant 0 : index
    %c0_12 = arith.constant 0 : index
    %11 = vector.load %arg7[%c0_10, %c0_11, %c0_12] : memref<18x18x4xbf16, #tpu.memory_space<vmem>>, vector<16x16x4xbf16>
    %12 = vector.shape_cast %11 : vector<16x16x4xbf16> to vector<256x4xbf16>
    %c0_13 = arith.constant 0 : index
    %c1_14 = arith.constant 1 : index
    %c0_15 = arith.constant 0 : index
    %13 = vector.load %arg7[%c0_13, %c1_14, %c0_15] : memref<18x18x4xbf16, #tpu.memory_space<vmem>>, vector<16x16x4xbf16>
    %14 = vector.shape_cast %13 : vector<16x16x4xbf16> to vector<256x4xbf16>
    %15 = tpu.concatenate %12, %14 in 1 : vector<256x4xbf16>, vector<256x4xbf16> -> vector<256x8xbf16>
    %c0_16 = arith.constant 0 : index
    %c0_17 = arith.constant 0 : index
    %16 = vector.load %arg8[%c0_16, %c0_17] : memref<256x36xbf16, #tpu.memory_space<vmem>>, vector<256x8xbf16>
    tpu.vector_store %arg8[%c0_16, %c0_17], %15 {strides = array<i32>} : memref<256x36xbf16, #tpu.memory_space<vmem>>, vector<256x8xbf16>,
    %c0_18 = arith.constant 0 : index
    %c2 = arith.constant 2 : index
    %c0_19 = arith.constant 0 : index
    %17 = vector.load %arg7[%c0_18, %c2, %c0_19] : memref<18x18x4xbf16, #tpu.memory_space<vmem>>, vector<16x16x4xbf16>
    %18 = vector.shape_cast %17 : vector<16x16x4xbf16> to vector<256x4xbf16>
    %c1_20 = arith.constant 1 : index
    %c0_21 = arith.constant 0 : index
    %c0_22 = arith.constant 0 : index
    %19 = vector.load %arg7[%c1_20, %c0_21, %c0_22] : memref<18x18x4xbf16, #tpu.memory_space<vmem>>, vector<16x16x4xbf16>
    %20 = vector.shape_cast %19 : vector<16x16x4xbf16> to vector<256x4xbf16>
    %21 = tpu.concatenate %18, %20 in 1 : vector<256x4xbf16>, vector<256x4xbf16> -> vector<256x8xbf16>
    %c0_23 = arith.constant 0 : index
    %c8 = arith.constant 8 : index
    %22 = vector.load %arg8[%c0_23, %c8] : memref<256x36xbf16, #tpu.memory_space<vmem>>, vector<256x8xbf16>
    tpu.vector_store %arg8[%c0_23, %c8], %21 {strides = array<i32>} : memref<256x36xbf16, #tpu.memory_space<vmem>>, vector<256x8xbf16>,
    %c1_24 = arith.constant 1 : index
    %c1_25 = arith.constant 1 : index
    %c0_26 = arith.constant 0 : index
    %23 = vector.load %arg7[%c1_24, %c1_25, %c0_26] : memref<18x18x4xbf16, #tpu.memory_space<vmem>>, vector<16x16x4xbf16>
    %24 = vector.shape_cast %23 : vector<16x16x4xbf16> to vector<256x4xbf16>
    %c1_27 = arith.constant 1 : index
    %c2_28 = arith.constant 2 : index
    %c0_29 = arith.constant 0 : index
    %25 = vector.load %arg7[%c1_27, %c2_28, %c0_29] : memref<18x18x4xbf16, #tpu.memory_space<vmem>>, vector<16x16x4xbf16>
    %26 = vector.shape_cast %25 : vector<16x16x4xbf16> to vector<256x4xbf16>
    %27 = tpu.concatenate %24, %26 in 1 : vector<256x4xbf16>, vector<256x4xbf16> -> vector<256x8xbf16>
    %c0_30 = arith.constant 0 : index
    %c16 = arith.constant 16 : index
    %28 = vector.load %arg8[%c0_30, %c16] : memref<256x36xbf16, #tpu.memory_space<vmem>>, vector<256x8xbf16>
    tpu.vector_store %arg8[%c0_30, %c16], %27 {strides = array<i32>} : memref<256x36xbf16, #tpu.memory_space<vmem>>, vector<256x8xbf16>,
    %c2_31 = arith.constant 2 : index
    %c0_32 = arith.constant 0 : index
    %c0_33 = arith.constant 0 : index
    %29 = vector.load %arg7[%c2_31, %c0_32, %c0_33] : memref<18x18x4xbf16, #tpu.memory_space<vmem>>, vector<16x16x4xbf16>
    %30 = vector.shape_cast %29 : vector<16x16x4xbf16> to vector<256x4xbf16>
    %c2_34 = arith.constant 2 : index
    %c1_35 = arith.constant 1 : index
    %c0_36 = arith.constant 0 : index
    %31 = vector.load %arg7[%c2_34, %c1_35, %c0_36] : memref<18x18x4xbf16, #tpu.memory_space<vmem>>, vector<16x16x4xbf16>
    %32 = vector.shape_cast %31 : vector<16x16x4xbf16> to vector<256x4xbf16>
    %33 = tpu.concatenate %30, %32 in 1 : vector<256x4xbf16>, vector<256x4xbf16> -> vector<256x8xbf16>
    %c0_37 = arith.constant 0 : index
    %c24 = arith.constant 24 : index
    %34 = vector.load %arg8[%c0_37, %c24] : memref<256x36xbf16, #tpu.memory_space<vmem>>, vector<256x8xbf16>
    tpu.vector_store %arg8[%c0_37, %c24], %33 {strides = array<i32>} : memref<256x36xbf16, #tpu.memory_space<vmem>>, vector<256x8xbf16>,
    %c2_38 = arith.constant 2 : index
    %c2_39 = arith.constant 2 : index
    %c0_40 = arith.constant 0 : index
    %35 = vector.load %arg7[%c2_38, %c2_39, %c0_40] : memref<18x18x4xbf16, #tpu.memory_space<vmem>>, vector<16x16x4xbf16>
    %36 = vector.shape_cast %35 : vector<16x16x4xbf16> to vector<256x4xbf16>
    %c0_41 = arith.constant 0 : index
    %c32 = arith.constant 32 : index
    %37 = vector.load %arg8[%c0_41, %c32] : memref<256x36xbf16, #tpu.memory_space<vmem>>, vector<256x4xbf16>
    tpu.vector_store %arg8[%c0_41, %c32], %36 {strides = array<i32>} : memref<256x36xbf16, #tpu.memory_space<vmem>>, vector<256x4xbf16>,
    %c0_42 = arith.constant 0 : index
    %c0_43 = arith.constant 0 : index
    %38 = vector.load %arg8[%c0_42, %c0_43] : memref<256x36xbf16, #tpu.memory_space<vmem>>, vector<256x36xbf16>
    %c0_44 = arith.constant 0 : index
    %c0_45 = arith.constant 0 : index
    %39 = vector.load %arg2[%c0_44, %c0_45] : memref<36x4xbf16, #tpu.memory_space<vmem>>, vector<36x4xbf16>
    %cst_46 = arith.constant dense<0.000000e+00> : vector<256x4xf32>
    %40 = tpu.matmul %38, %39, %cst_46 {dimension_numbers = #tpu.dot_dimension_numbers<[1], [0], [0], [1], [0, 0, 1, 1], [], []>} : vector<256x36xbf16>, vector<36x4xbf16>, vector<256x4xf32> -> vector<256x4xf32>
    %c0_47 = arith.constant 0 : index
    %c0_48 = arith.constant 0 : index
    %41 = vector.load %arg4[%c0_47, %c0_48] : memref<1x4xf32, #tpu.memory_space<vmem>>, vector<1x4xf32>
    %42 = vector.broadcast %41 : vector<1x4xf32> to vector<256x4xf32>
    %43 = arith.addf %40, %42 : vector<256x4xf32>
    %cst_49 = arith.constant 0.000000e+00 : f32
    %44 = vector.broadcast %cst_49 : f32 to vector<256x4xf32>
    %45 = arith.maximumf %43, %44 : vector<256x4xf32>
    %46 = vector.shape_cast %45 : vector<256x4xf32> to vector<16x16x4xf32>
    %47 = tpu.concatenate %6, %46, %6 in 1 : vector<16x1x4xf32>, vector<16x16x4xf32>, vector<16x1x4xf32> -> vector<16x18x4xf32>
    %48 = arith.truncf %47 : vector<16x18x4xf32> to vector<16x18x4xbf16>
    %c1_50 = arith.constant 1 : index
    %c0_51 = arith.constant 0 : index
    %c0_52 = arith.constant 0 : index
    %49 = vector.load %arg7[%c1_50, %c0_51, %c0_52] : memref<18x18x4xbf16, #tpu.memory_space<vmem>>, vector<16x18x4xbf16>
    tpu.vector_store %arg7[%c1_50, %c0_51, %c0_52], %48 {strides = array<i32>} : memref<18x18x4xbf16, #tpu.memory_space<vmem>>, vector<16x18x4xbf16>,
    %c0_53 = arith.constant 0 : index
    %c0_54 = arith.constant 0 : index
    %c0_55 = arith.constant 0 : index
    %50 = vector.load %arg7[%c0_53, %c0_54, %c0_55] : memref<18x18x4xbf16, #tpu.memory_space<vmem>>, vector<16x16x4xbf16>
    %51 = vector.shape_cast %50 : vector<16x16x4xbf16> to vector<256x4xbf16>
    %c0_56 = arith.constant 0 : index
    %c1_57 = arith.constant 1 : index
    %c0_58 = arith.constant 0 : index
    %52 = vector.load %arg7[%c0_56, %c1_57, %c0_58] : memref<18x18x4xbf16, #tpu.memory_space<vmem>>, vector<16x16x4xbf16>
    %53 = vector.shape_cast %52 : vector<16x16x4xbf16> to vector<256x4xbf16>
    %54 = tpu.concatenate %51, %53 in 1 : vector<256x4xbf16>, vector<256x4xbf16> -> vector<256x8xbf16>
    %c0_59 = arith.constant 0 : index
    %c0_60 = arith.constant 0 : index
    %55 = vector.load %arg8[%c0_59, %c0_60] : memref<256x36xbf16, #tpu.memory_space<vmem>>, vector<256x8xbf16>
    tpu.vector_store %arg8[%c0_59, %c0_60], %54 {strides = array<i32>} : memref<256x36xbf16, #tpu.memory_space<vmem>>, vector<256x8xbf16>,
    %c0_61 = arith.constant 0 : index
    %c2_62 = arith.constant 2 : index
    %c0_63 = arith.constant 0 : index
    %56 = vector.load %arg7[%c0_61, %c2_62, %c0_63] : memref<18x18x4xbf16, #tpu.memory_space<vmem>>, vector<16x16x4xbf16>
    %57 = vector.shape_cast %56 : vector<16x16x4xbf16> to vector<256x4xbf16>
    %c1_64 = arith.constant 1 : index
    %c0_65 = arith.constant 0 : index
    %c0_66 = arith.constant 0 : index
    %58 = vector.load %arg7[%c1_64, %c0_65, %c0_66] : memref<18x18x4xbf16, #tpu.memory_space<vmem>>, vector<16x16x4xbf16>
    %59 = vector.shape_cast %58 : vector<16x16x4xbf16> to vector<256x4xbf16>
    %60 = tpu.concatenate %57, %59 in 1 : vector<256x4xbf16>, vector<256x4xbf16> -> vector<256x8xbf16>
    %c0_67 = arith.constant 0 : index
    %c8_68 = arith.constant 8 : index
    %61 = vector.load %arg8[%c0_67, %c8_68] : memref<256x36xbf16, #tpu.memory_space<vmem>>, vector<256x8xbf16>
    tpu.vector_store %arg8[%c0_67, %c8_68], %60 {strides = array<i32>} : memref<256x36xbf16, #tpu.memory_space<vmem>>, vector<256x8xbf16>,
    %c1_69 = arith.constant 1 : index
    %c1_70 = arith.constant 1 : index
    %c0_71 = arith.constant 0 : index
    %62 = vector.load %arg7[%c1_69, %c1_70, %c0_71] : memref<18x18x4xbf16, #tpu.memory_space<vmem>>, vector<16x16x4xbf16>
    %63 = vector.shape_cast %62 : vector<16x16x4xbf16> to vector<256x4xbf16>
    %c1_72 = arith.constant 1 : index
    %c2_73 = arith.constant 2 : index
    %c0_74 = arith.constant 0 : index
    %64 = vector.load %arg7[%c1_72, %c2_73, %c0_74] : memref<18x18x4xbf16, #tpu.memory_space<vmem>>, vector<16x16x4xbf16>
    %65 = vector.shape_cast %64 : vector<16x16x4xbf16> to vector<256x4xbf16>
    %66 = tpu.concatenate %63, %65 in 1 : vector<256x4xbf16>, vector<256x4xbf16> -> vector<256x8xbf16>
    %c0_75 = arith.constant 0 : index
    %c16_76 = arith.constant 16 : index
    %67 = vector.load %arg8[%c0_75, %c16_76] : memref<256x36xbf16, #tpu.memory_space<vmem>>, vector<256x8xbf16>
    tpu.vector_store %arg8[%c0_75, %c16_76], %66 {strides = array<i32>} : memref<256x36xbf16, #tpu.memory_space<vmem>>, vector<256x8xbf16>,
    %c2_77 = arith.constant 2 : index
    %c0_78 = arith.constant 0 : index
    %c0_79 = arith.constant 0 : index
    %68 = vector.load %arg7[%c2_77, %c0_78, %c0_79] : memref<18x18x4xbf16, #tpu.memory_space<vmem>>, vector<16x16x4xbf16>
    %69 = vector.shape_cast %68 : vector<16x16x4xbf16> to vector<256x4xbf16>
    %c2_80 = arith.constant 2 : index
    %c1_81 = arith.constant 1 : index
    %c0_82 = arith.constant 0 : index
    %70 = vector.load %arg7[%c2_80, %c1_81, %c0_82] : memref<18x18x4xbf16, #tpu.memory_space<vmem>>, vector<16x16x4xbf16>
    %71 = vector.shape_cast %70 : vector<16x16x4xbf16> to vector<256x4xbf16>
    %72 = tpu.concatenate %69, %71 in 1 : vector<256x4xbf16>, vector<256x4xbf16> -> vector<256x8xbf16>
    %c0_83 = arith.constant 0 : index
    %c24_84 = arith.constant 24 : index
    %73 = vector.load %arg8[%c0_83, %c24_84] : memref<256x36xbf16, #tpu.memory_space<vmem>>, vector<256x8xbf16>
    tpu.vector_store %arg8[%c0_83, %c24_84], %72 {strides = array<i32>} : memref<256x36xbf16, #tpu.memory_space<vmem>>, vector<256x8xbf16>,
    %c2_85 = arith.constant 2 : index
    %c2_86 = arith.constant 2 : index
    %c0_87 = arith.constant 0 : index
    %74 = vector.load %arg7[%c2_85, %c2_86, %c0_87] : memref<18x18x4xbf16, #tpu.memory_space<vmem>>, vector<16x16x4xbf16>
    %75 = vector.shape_cast %74 : vector<16x16x4xbf16> to vector<256x4xbf16>
    %c0_88 = arith.constant 0 : index
    %c32_89 = arith.constant 32 : index
    %76 = vector.load %arg8[%c0_88, %c32_89] : memref<256x36xbf16, #tpu.memory_space<vmem>>, vector<256x4xbf16>
    tpu.vector_store %arg8[%c0_88, %c32_89], %75 {strides = array<i32>} : memref<256x36xbf16, #tpu.memory_space<vmem>>, vector<256x4xbf16>,
    %c0_90 = arith.constant 0 : index
    %c0_91 = arith.constant 0 : index
    %77 = vector.load %arg8[%c0_90, %c0_91] : memref<256x36xbf16, #tpu.memory_space<vmem>>, vector<256x36xbf16>
    %c0_92 = arith.constant 0 : index
    %c0_93 = arith.constant 0 : index
    %78 = vector.load %arg3[%c0_92, %c0_93] : memref<36x4xbf16, #tpu.memory_space<vmem>>, vector<36x4xbf16>
    %cst_94 = arith.constant dense<0.000000e+00> : vector<256x4xf32>
    %79 = tpu.matmul %77, %78, %cst_94 {dimension_numbers = #tpu.dot_dimension_numbers<[1], [0], [0], [1], [0, 0, 1, 1], [], []>} : vector<256x36xbf16>, vector<36x4xbf16>, vector<256x4xf32> -> vector<256x4xf32>
    %c0_95 = arith.constant 0 : index
    %c0_96 = arith.constant 0 : index
    %80 = vector.load %arg5[%c0_95, %c0_96] : memref<1x4xf32, #tpu.memory_space<vmem>>, vector<1x4xf32>
    %81 = vector.broadcast %80 : vector<1x4xf32> to vector<256x4xf32>
    %82 = arith.addf %79, %81 : vector<256x4xf32>
    %83 = arith.addf %82, %5 : vector<256x4xf32>
    %cst_97 = arith.constant 0.000000e+00 : f32
    %84 = vector.broadcast %cst_97 : f32 to vector<256x4xf32>
    %85 = arith.maximumf %83, %84 : vector<256x4xf32>
    %86 = tpu.transpose %85, [1, 0] : vector<256x4xf32> -> vector<4x256xf32>
    %c0_98 = arith.constant 0 : index
    %c0_99 = arith.constant 0 : index
    %c0_100 = arith.constant 0 : index
    %87 = vector.load %arg6[%c0_98, %c0_99, %c0_100] : memref<1x4x256xf32, #tpu.memory_space<vmem>>, vector<1x4x256xf32>
    %88 = vector.shape_cast %87 : vector<1x4x256xf32> to vector<4x256xf32>
    %89 = vector.shape_cast %86 : vector<4x256xf32> to vector<1x4x256xf32>
    tpu.vector_store %arg6[%c0_98, %c0_99, %c0_100], %89 {strides = array<i32>} : memref<1x4x256xf32, #tpu.memory_space<vmem>>, vector<1x4x256xf32>,
    return
  }
  func.func @transform_0(%arg0: i32) -> (i32, i32, i32) {
    %c0_i32 = arith.constant 0 : i32
    %c0_i32_0 = arith.constant 0 : i32
    %c0_i32_1 = arith.constant 0 : i32
    return %arg0, %c0_i32, %c0_i32_0 : i32, i32, i32
  }
  func.func @transform_1(%arg0: i32) -> (i32, i32) {
    %c0_i32 = arith.constant 0 : i32
    %c0_i32_0 = arith.constant 0 : i32
    %c0_i32_1 = arith.constant 0 : i32
    return %c0_i32, %c0_i32_0 : i32, i32
  }
  func.func @transform_2(%arg0: i32) -> (i32, i32) {
    %c0_i32 = arith.constant 0 : i32
    %c0_i32_0 = arith.constant 0 : i32
    %c0_i32_1 = arith.constant 0 : i32
    return %c0_i32, %c0_i32_0 : i32, i32
  }
  func.func @transform_3(%arg0: i32) -> (i32, i32) {
    %c0_i32 = arith.constant 0 : i32
    %c0_i32_0 = arith.constant 0 : i32
    %c0_i32_1 = arith.constant 0 : i32
    return %c0_i32, %c0_i32_0 : i32, i32
  }
  func.func @transform_4(%arg0: i32) -> (i32, i32) {
    %c0_i32 = arith.constant 0 : i32
    %c0_i32_0 = arith.constant 0 : i32
    %c0_i32_1 = arith.constant 0 : i32
    return %c0_i32, %c0_i32_0 : i32, i32
  }
  func.func @transform_5(%arg0: i32) -> (i32, i32, i32) {
    %c0_i32 = arith.constant 0 : i32
    %c0_i32_0 = arith.constant 0 : i32
    %c0_i32_1 = arith.constant 0 : i32
    return %arg0, %c0_i32, %c0_i32_0 : i32, i32, i32
  }
}

</mosaic_0001>

<llo_original>
// kernel: basic_block.1
$region0: #{basic_block.1}
  #allocation0 [shape = 'u32[]', space=smem, size = 0x4, offset = 0x4, fixed_abs, tag = 'smem constant byte address 0x4 - core index']
  #allocation1 [shape = 'u32[144,128]{1,0:T(1,128)}', space=vmem, size = 0x12000, scoped, tag = 'internal scratch']
  #allocation2 [shape = 'bf16[18,18,4]{2,1,0:T(8,128)(2,1)}', space=vmem, size = 0x1b000, scoped, tag = 'scratch operand']
  #allocation3 [shape = 'bf16[256,36]{1,0:T(16,128)(2,1)}', space=vmem, size = 0x10000, scoped, tag = 'scratch operand']
  %s0 = inlined_call_operand.vmem [shape: f32[2,4,256], index: 0, kind: input, shape index: {}]
  %s1 = inlined_call_operand.vmem [shape: bf16[36,4], index: 1, kind: input, shape index: {}]
  %s2 = inlined_call_operand.vmem [shape: bf16[36,4], index: 2, kind: input, shape index: {}]
  %s3 = inlined_call_operand.vmem [shape: f32[1,4], index: 3, kind: input, shape index: {}]
  %s4 = inlined_call_operand.vmem [shape: f32[1,4], index: 4, kind: input, shape index: {}]
  %s5 = inlined_call_operand.vmem [shape: f32[2,4,256], index: 5, kind: output, shape index: {}]
  %s6 = sld [smem:[#allocation0]]
  $region53: #{basic_block.1} parent=0
    _
  %s8 = ssub.s32 1, %s6
  %s9 = scalar_select 0, %s8, %s6
  loop: start=0, step=1, limit=4
  $region2: #{basic_block.1} parent=0 // loop_pre_header
    _
  $region3: #{basic_block.1} parent=0 // loop_header
    %s11 = sphi 0, %s15
    %p12 = scmp.ge.s32.totalorder %s11, 4
    %s21 = sphi 0, %s23
    %s24 = sphi 0, %s21
    %s25 = sphi 0, %s24
    %s41 = sphi 0, %s25
    %s45 = sphi 0, %s45
    %s47 = sphi 0, %s45
    %s48 = sphi 0, %s47
    %s62 = sphi 0, %s48
    %s66 = sphi 0, %s66
    %s68 = sphi 0, %s66
    %s69 = sphi 0, %s68
    %s83 = sphi 0, %s69
    %s87 = sphi 0, %s87
    %s89 = sphi 0, %s87
    %s90 = sphi 0, %s89
    %s104 = sphi 0, %s90
    %s108 = sphi 0, %s108
    %s110 = sphi 0, %s108
    %s111 = sphi 0, %s110
    %s125 = sphi 0, %s111
    %s131 = sphi 0, %s133
    %s134 = sphi 0, %s131
    %s135 = sphi 0, %s134
    %s151 = sphi 0, %s135
  $region4: #{basic_block.1} parent=0 // loop_header_branch
    %14 = sbr.rel (%p12) target = $region8
  $region5: #{basic_block.1} parent=0 // loop_body
    %s16 = ssub.s32 %s11, 1
    %s17 = ssub.s32 %s11, 2
    %s18 = sadd.s32 %s11, 1
    %s19 = ssub.s32 %s11, %s18
    %p20 = scmp.eq.s32.totalorder %s19, 0
    %s22 = sadd.s32 %s21, 1
    %s23 = scalar_select %p20, %s21, %s22
    %p26 = pneg %p20
    %p27 = scmp.eq.s32.totalorder %s11, 1
    %p28 = por %p26, %p27
    %p29 = scmp.ne.s32.totalorder %s21, %s24
    %p30 = scmp.eq.s32.totalorder %s11, 0
    %p31 = por %p29, %p30
    %p32 = scmp.ne.s32.totalorder %s21, %s24
    %p33 = scmp.eq.s32.totalorder %s16, 1
    %p34 = por %p32, %p33
    %p35 = scmp.ne.s32.totalorder %s24, %s25
    %p36 = scmp.eq.s32.totalorder %s16, 0
    %p37 = por %p35, %p36
    %p38 = scmp.ne.s32.totalorder %s24, %s25
    %p39 = scmp.eq.s32.totalorder %s17, 1
    %p40 = por %p38, %p39
    %p42 = scmp.ne.s32.totalorder %s25, %s41
    %p43 = scmp.eq.s32.totalorder %s17, 0
    %p44 = por %p42, %p43
    %s46 = sadd.s32 %s45, 1
    %p49 = scmp.eq.s32.totalorder %s11, 1
    %p50 = scmp.ne.s32.totalorder %s45, %s47
    %p51 = scmp.eq.s32.totalorder %s11, 0
    %p52 = por %p50, %p51
    %p53 = scmp.ne.s32.totalorder %s45, %s47
    %p54 = scmp.eq.s32.totalorder %s16, 1
    %p55 = por %p53, %p54
    %p56 = scmp.ne.s32.totalorder %s47, %s48
    %p57 = scmp.eq.s32.totalorder %s16, 0
    %p58 = por %p56, %p57
    %p59 = scmp.ne.s32.totalorder %s47, %s48
    %p60 = scmp.eq.s32.totalorder %s17, 1
    %p61 = por %p59, %p60
    %p63 = scmp.ne.s32.totalorder %s48, %s62
    %p64 = scmp.eq.s32.totalorder %s17, 0
    %p65 = por %p63, %p64
    %s67 = sadd.s32 %s66, 1
    %p70 = scmp.eq.s32.totalorder %s11, 1
    %p71 = scmp.ne.s32.totalorder %s66, %s68
    %p72 = scmp.eq.s32.totalorder %s11, 0
    %p73 = por %p71, %p72
    %p74 = scmp.ne.s32.totalorder %s66, %s68
    %p75 = scmp.eq.s32.totalorder %s16, 1
    %p76 = por %p74, %p75
    %p77 = scmp.ne.s32.totalorder %s68, %s69
    %p78 = scmp.eq.s32.totalorder %s16, 0
    %p79 = por %p77, %p78
    %p80 = scmp.ne.s32.totalorder %s68, %s69
    %p81 = scmp.eq.s32.totalorder %s17, 1
    %p82 = por %p80, %p81
    %p84 = scmp.ne.s32.totalorder %s69, %s83
    %p85 = scmp.eq.s32.totalorder %s17, 0
    %p86 = por %p84, %p85
    %s88 = sadd.s32 %s87, 1
    %p91 = scmp.eq.s32.totalorder %s11, 1
    %p92 = scmp.ne.s32.totalorder %s87, %s89
    %p93 = scmp.eq.s32.totalorder %s11, 0
    %p94 = por %p92, %p93
    %p95 = scmp.ne.s32.totalorder %s87, %s89
    %p96 = scmp.eq.s32.totalorder %s16, 1
    %p97 = por %p95, %p96
    %p98 = scmp.ne.s32.totalorder %s89, %s90
    %p99 = scmp.eq.s32.totalorder %s16, 0
    %p100 = por %p98, %p99
    %p101 = scmp.ne.s32.totalorder %s89, %s90
    %p102 = scmp.eq.s32.totalorder %s17, 1
    %p103 = por %p101, %p102
    %p105 = scmp.ne.s32.totalorder %s90, %s104
    %p106 = scmp.eq.s32.totalorder %s17, 0
    %p107 = por %p105, %p106
    %s109 = sadd.s32 %s108, 1
    %p112 = scmp.eq.s32.totalorder %s11, 1
    %p113 = scmp.ne.s32.totalorder %s108, %s110
    %p114 = scmp.eq.s32.totalorder %s11, 0
    %p115 = por %p113, %p114
    %p116 = scmp.ne.s32.totalorder %s108, %s110
    %p117 = scmp.eq.s32.totalorder %s16, 1
    %p118 = por %p116, %p117
    %p119 = scmp.ne.s32.totalorder %s110, %s111
    %p120 = scmp.eq.s32.totalorder %s16, 0
    %p121 = por %p119, %p120
    %p122 = scmp.ne.s32.totalorder %s110, %s111
    %p123 = scmp.eq.s32.totalorder %s17, 1
    %p124 = por %p122, %p123
    %p126 = scmp.ne.s32.totalorder %s111, %s125
    %p127 = scmp.eq.s32.totalorder %s17, 0
    %p128 = por %p126, %p127
    %s129 = ssub.s32 %s11, %s18
    %p130 = scmp.eq.s32.totalorder %s129, 0
    %s132 = sadd.s32 %s131, 1
    %s133 = scalar_select %p130, %s131, %s132
    %p136 = pneg %p130
    %p137 = scmp.eq.s32.totalorder %s11, 1
    %p138 = por %p136, %p137
    %p139 = scmp.ne.s32.totalorder %s131, %s134
    %p140 = scmp.eq.s32.totalorder %s11, 0
    %p141 = por %p139, %p140
    %p142 = scmp.ne.s32.totalorder %s131, %s134
    %p143 = scmp.eq.s32.totalorder %s16, 1
    %p144 = por %p142, %p143
    %p145 = scmp.ne.s32.totalorder %s134, %s135
    %p146 = scmp.eq.s32.totalorder %s16, 0
    %p147 = por %p145, %p146
    %p148 = scmp.ne.s32.totalorder %s134, %s135
    %p149 = scmp.eq.s32.totalorder %s17, 1
    %p150 = por %p148, %p149
    %p152 = scmp.ne.s32.totalorder %s135, %s151
    %p153 = scmp.eq.s32.totalorder %s17, 0
    %p154 = por %p152, %p153
    %p155 = scmp.le.s32.totalorder 1, %s11
    %p156 = scmp.lt.s32.totalorder %s11, 3
    %p157 = pnand %p155, %p156
    %p158 = pneg %p157
    // Predicated region
    $region9: #{basic_block.1} parent=5 // pred_check
      _
    $region10: #{basic_block.1} parent=5 // pred_check_branch
      %160 = sbr.rel (%p157) target = $region12
    $region11: #{basic_block.1} parent=5 // pred_region
      %s161 = ssub.s32 %s11, 1
      // Predicated region
      $region13: #{basic_block.1} parent=11 // pred_check
        %p162 = pneg %p58
      $region14: #{basic_block.1} parent=11 // pred_check_branch
        %164 = sbr.rel (%p162) target = $region16
      $region15: #{basic_block.1} parent=11 // pred_region
        _
      $region16: #{basic_block.1} parent=11 // pred_fallthru
        _
      // Predicated region
      $region17: #{basic_block.1} parent=11 // pred_check
        %p165 = pneg %p79
      $region18: #{basic_block.1} parent=11 // pred_check_branch
        %167 = sbr.rel (%p165) target = $region20
      $region19: #{basic_block.1} parent=11 // pred_region
        _
      $region20: #{basic_block.1} parent=11 // pred_fallthru
        _
      // Predicated region
      $region21: #{basic_block.1} parent=11 // pred_check
        %p168 = pneg %p100
      $region22: #{basic_block.1} parent=11 // pred_check_branch
        %170 = sbr.rel (%p168) target = $region24
      $region23: #{basic_block.1} parent=11 // pred_region
        _
      $region24: #{basic_block.1} parent=11 // pred_fallthru
        _
      // Predicated region
      $region25: #{basic_block.1} parent=11 // pred_check
        %p171 = pneg %p121
      $region26: #{basic_block.1} parent=11 // pred_check_branch
        %173 = sbr.rel (%p171) target = $region28
      $region27: #{basic_block.1} parent=11 // pred_region
        _
      $region28: #{basic_block.1} parent=11 // pred_fallthru
        _
    $region12: #{basic_block.1} parent=5 // pred_fallthru
      _
    %p174 = scmp.lt.s32.totalorder %s11, 2
    // Predicated region
    $region29: #{basic_block.1} parent=5 // pred_check
      %p175 = pneg %p174
    $region30: #{basic_block.1} parent=5 // pred_check_branch
      %177 = sbr.rel (%p175) target = $region32
    $region31: #{basic_block.1} parent=5 // pred_region
      // Predicated region
      $region33: #{basic_block.1} parent=31 // pred_check
        %p178 = pneg %p31
      $region34: #{basic_block.1} parent=31 // pred_check_branch
        %180 = sbr.rel (%p178) target = $region36
      $region35: #{basic_block.1} parent=31 // pred_region
        %p181 = scmp.lt.s32.totalorder %s11, 1
        %s182 = scalar_select %p181, %s11, 1
        %s183 = smul.addr %s182, 2
        %s184 = smul.addr %s183, 4
        %s185 = scalar_lea.vmem %s0, %s184
      $region36: #{basic_block.1} parent=31 // pred_fallthru
        _
    $region32: #{basic_block.1} parent=5 // pred_fallthru
      _
    %p186 = scmp.le.s32.totalorder 1, %s11
    %p187 = scmp.lt.s32.totalorder %s11, 3
    %p188 = pnand %p186, %p187
    %p189 = pneg %p188
    // Predicated region
    $region37: #{basic_block.1} parent=5 // pred_check
      _
    $region38: #{basic_block.1} parent=5 // pred_check_branch
      %191 = sbr.rel (%p188) target = $region40
    $region39: #{basic_block.1} parent=5 // pred_region
      %s192 = ssub.s32 %s11, 1
      %p193 = scmp.lt.s32.totalorder %s16, 1
      %s194 = scalar_select %p193, %s16, 1
      %s195 = smul.addr %s194, 2
      %s196 = smul.addr %s195, 4
      %s197 = scalar_lea.vmem %s0, %s196
      %p198 = pneg %p37
      %p199 = pneg %p34
      %p200 = pneg %p58
      %p201 = pneg %p55
      %p202 = pneg %p79
      %p203 = pneg %p76
      %p204 = pneg %p100
      %p205 = pneg %p97
      %p206 = pneg %p121
      %p207 = pneg %p118
      %p208 = pneg %p147
      %p209 = pneg %p144
      %p210 = scmp.lt.s32.totalorder %s16, 1
      %s211 = scalar_select %p210, %s16, 1
      %s212 = smul.addr %s211, 2
      %s213 = smul.addr %s212, 4
      %s214 = scalar_lea.vmem %s5, %s213
      %p215 = scmp.lt.s32.totalorder %s16, 1
      %s216 = scalar_select %p215, %s16, 1
      %s217 = smul.addr %s216, 2
      %s218 = smul.addr %s217, 4
      %s219 = scalar_lea.vmem %s0, %s218
      %p220 = scmp.lt.s32.totalorder %s16, 1
      %s221 = scalar_select %p220, %s16, 1
      %s222 = smul.addr %s221, 2
      %s223 = smul.addr %s222, 4
      %s224 = scalar_lea.vmem %s5, %s223
      %vm226 = vcmask 27648
      %227 = vst.msk [vmem:[#allocation2] sm:$0xf] %vm226, 0
      %228 = vst.msk [vmem:[#allocation2 + $0x4] sm:$0xf] %vm226, 0
      %vm229 = vcmask 24576
      %230 = vst.msk [vmem:[#allocation2 + $0x8] sm:$0x1] %vm229, 0
      %s231 = scalar_lea.vmem [#allocation2], 204
      %232 = vst.msk [vmem:[%s231] sm:$0xf] %vm226, 0
      %233 = vst.msk [vmem:[%s231 + $0x4] sm:$0xf] %vm226, 0
      %234 = vst.msk [vmem:[%s231 + $0x8] sm:$0x1] %vm229, 0
      %v235 = vld [vmem:[%s219] sm:$0xff]
      %v237 = vcombine.high %v235, %v235
      %239 = vxpose.xlu0.b32.start [1/16] %v235, 128
      %240 = vxpose.xlu0.b32.cont [2/16] 0.0, 128
      %241 = vxpose.xlu0.b32.cont [3/16] 0.0, 128
      %242 = vxpose.xlu0.b32.cont [4/16] 0.0, 128
      %243 = vxpose.xlu0.b32.cont [5/16] 0.0, 128
      %244 = vxpose.xlu0.b32.cont [6/16] 0.0, 128
      %245 = vxpose.xlu0.b32.cont [7/16] 0.0, 128
      %246 = vxpose.xlu0.b32.cont [8/16] 0.0, 128
      %247 = vxpose.xlu0.b32.cont [9/16] 0.0, 128
      %248 = vxpose.xlu0.b32.cont [10/16] 0.0, 128
      %249 = vxpose.xlu0.b32.cont [11/16] 0.0, 128
      %250 = vxpose.xlu0.b32.cont [12/16] 0.0, 128
      %251 = vxpose.xlu0.b32.cont [13/16] 0.0, 128
      %252 = vxpose.xlu0.b32.cont [14/16] 0.0, 128
      %253 = vxpose.xlu0.b32.cont [15/16] 0.0, 128
      %254 = vxpose.xlu0.b32.end [16/16] 0.0, 128
      %v255 = vpop.trf.xlu0
      %v256 = vpop.trf.xlu0
      %v257 = vpop.trf.xlu0
      %v258 = vpop.trf.xlu0
      %v259 = vpop.trf.xlu0
      %v260 = vpop.trf.xlu0
      %v261 = vpop.trf.xlu0
      %v262 = vpop.trf.xlu0
      %v263 = vpop.trf.xlu0
      %v264 = vpop.trf.xlu0
      %v265 = vpop.trf.xlu0
      %v266 = vpop.trf.xlu0
      %v267 = vpop.trf.xlu0
      %v268 = vpop.trf.xlu0
      %v269 = vpop.trf.xlu0
      %v270 = vpop.trf.xlu0
      %271 = vxpose.xlu0.b32.start [1/16] %v237, 128
      %272 = vxpose.xlu0.b32.cont [2/16] 0.0, 128
      %273 = vxpose.xlu0.b32.cont [3/16] 0.0, 128
      %274 = vxpose.xlu0.b32.cont [4/16] 0.0, 128
      %275 = vxpose.xlu0.b32.cont [5/16] 0.0, 128
      %276 = vxpose.xlu0.b32.cont [6/16] 0.0, 128
      %277 = vxpose.xlu0.b32.cont [7/16] 0.0, 128
      %278 = vxpose.xlu0.b32.cont [8/16] 0.0, 128
      %279 = vxpose.xlu0.b32.cont [9/16] 0.0, 128
      %280 = vxpose.xlu0.b32.cont [10/16] 0.0, 128
      %281 = vxpose.xlu0.b32.cont [11/16] 0.0, 128
      %282 = vxpose.xlu0.b32.cont [12/16] 0.0, 128
      %283 = vxpose.xlu0.b32.cont [13/16] 0.0, 128
      %284 = vxpose.xlu0.b32.cont [14/16] 0.0, 128
      %285 = vxpose.xlu0.b32.cont [15/16] 0.0, 128
      %286 = vxpose.xlu0.b32.end [16/16] 0.0, 128
      %v287 = vpop.trf.xlu0
      %v288 = vpop.trf.xlu0
      %v289 = vpop.trf.xlu0
      %v290 = vpop.trf.xlu0
      %v291 = vpop.trf.xlu0
      %v292 = vpop.trf.xlu0
      %v293 = vpop.trf.xlu0
      %v294 = vpop.trf.xlu0
      %v295 = vpop.trf.xlu0
      %v296 = vpop.trf.xlu0
      %v297 = vpop.trf.xlu0
      %v298 = vpop.trf.xlu0
      %v299 = vpop.trf.xlu0
      %v300 = vpop.trf.xlu0
      %v301 = vpop.trf.xlu0
      %v302 = vpop.trf.xlu0
      %vm335 = vcmask 1040384
      %v336 = vrot.slane %v255, 7
      %v337 = vrot.slane %v256, 7
      %v338 = vsel %vm335, %v336, %v337
      %v339 = vrot.slane %v257, 7
      %v340 = vrot.slane %v258, 7
      %v341 = vsel %vm335, %v339, %v340
      %v342 = vrot.slane %v259, 7
      %v343 = vrot.slane %v260, 7
      %v344 = vsel %vm335, %v342, %v343
      %v345 = vrot.slane %v261, 7
      %v346 = vrot.slane %v262, 7
      %v347 = vsel %vm335, %v345, %v346
      %v348 = vrot.slane %v263, 7
      %v349 = vrot.slane %v264, 7
      %v350 = vsel %vm335, %v348, %v349
      %v351 = vrot.slane %v265, 7
      %v352 = vrot.slane %v266, 7
      %v353 = vsel %vm335, %v351, %v352
      %v354 = vrot.slane %v267, 7
      %v355 = vrot.slane %v268, 7
      %v356 = vsel %vm335, %v354, %v355
      %v357 = vrot.slane %v269, 7
      %v358 = vrot.slane %v270, 7
      %v359 = vsel %vm335, %v357, %v358
      %v360 = vrot.slane %v287, 7
      %v361 = vrot.slane %v288, 7
      %v362 = vsel %vm335, %v360, %v361
      %v363 = vrot.slane %v289, 7
      %v364 = vrot.slane %v290, 7
      %v365 = vsel %vm335, %v363, %v364
      %v366 = vrot.slane %v291, 7
      %v367 = vrot.slane %v292, 7
      %v368 = vsel %vm335, %v366, %v367
      %v369 = vrot.slane %v293, 7
      %v370 = vrot.slane %v294, 7
      %v371 = vsel %vm335, %v369, %v370
      %v372 = vrot.slane %v295, 7
      %v373 = vrot.slane %v296, 7
      %v374 = vsel %vm335, %v372, %v373
      %v375 = vrot.slane %v297, 7
      %v376 = vrot.slane %v298, 7
      %v377 = vsel %vm335, %v375, %v376
      %v378 = vrot.slane %v299, 7
      %v379 = vrot.slane %v300, 7
      %v380 = vsel %vm335, %v378, %v379
      %v381 = vrot.slane %v301, 7
      %v382 = vrot.slane %v302, 7
      %v383 = vsel %vm335, %v381, %v382
      %v432 = vsel %vm335, 0.0, %v336
      %v433 = vsel %vm335, 0.0, %v339
      %v434 = vsel %vm335, 0.0, %v342
      %v435 = vsel %vm335, 0.0, %v345
      %v436 = vsel %vm335, 0.0, %v348
      %v437 = vsel %vm335, 0.0, %v351
      %v438 = vsel %vm335, 0.0, %v354
      %v439 = vsel %vm335, 0.0, %v357
      %v440 = vsel %vm335, 0.0, %v360
      %v441 = vsel %vm335, 0.0, %v363
      %v442 = vsel %vm335, 0.0, %v366
      %v443 = vsel %vm335, 0.0, %v369
      %v444 = vsel %vm335, 0.0, %v372
      %v445 = vsel %vm335, 0.0, %v375
      %v446 = vsel %vm335, 0.0, %v378
      %v447 = vsel %vm335, 0.0, %v381
      %v448 = vsel %vm335, %v337, 0.0
      %v449 = vsel %vm335, %v340, 0.0
      %v450 = vsel %vm335, %v343, 0.0
      %v451 = vsel %vm335, %v346, 0.0
      %v452 = vsel %vm335, %v349, 0.0
      %v453 = vsel %vm335, %v352, 0.0
      %v454 = vsel %vm335, %v355, 0.0
      %v455 = vsel %vm335, %v358, 0.0
      %v456 = vsel %vm335, %v361, 0.0
      %v457 = vsel %vm335, %v364, 0.0
      %v458 = vsel %vm335, %v367, 0.0
      %v459 = vsel %vm335, %v370, 0.0
      %v460 = vsel %vm335, %v373, 0.0
      %v461 = vsel %vm335, %v376, 0.0
      %v462 = vsel %vm335, %v379, 0.0
      %v463 = vsel %vm335, %v382, 0.0
      %v464 = vpack.c.bf16 %v338, %v432
      %v465 = vpack.c.bf16 %v448, %v448
      %v466 = vpack.c.bf16 %v341, %v433
      %v467 = vpack.c.bf16 %v449, %v449
      %v468 = vpack.c.bf16 %v344, %v434
      %v469 = vpack.c.bf16 %v450, %v450
      %v470 = vpack.c.bf16 %v347, %v435
      %v471 = vpack.c.bf16 %v451, %v451
      %v472 = vpack.c.bf16 %v350, %v436
      %v473 = vpack.c.bf16 %v452, %v452
      %v474 = vpack.c.bf16 %v353, %v437
      %v475 = vpack.c.bf16 %v453, %v453
      %v476 = vpack.c.bf16 %v356, %v438
      %v477 = vpack.c.bf16 %v454, %v454
      %v478 = vpack.c.bf16 %v359, %v439
      %v479 = vpack.c.bf16 %v455, %v455
      %v480 = vpack.c.bf16 %v362, %v440
      %v481 = vpack.c.bf16 %v456, %v456
      %v482 = vpack.c.bf16 %v365, %v441
      %v483 = vpack.c.bf16 %v457, %v457
      %v484 = vpack.c.bf16 %v368, %v442
      %v485 = vpack.c.bf16 %v458, %v458
      %v486 = vpack.c.bf16 %v371, %v443
      %v487 = vpack.c.bf16 %v459, %v459
      %v488 = vpack.c.bf16 %v374, %v444
      %v489 = vpack.c.bf16 %v460, %v460
      %v490 = vpack.c.bf16 %v377, %v445
      %v491 = vpack.c.bf16 %v461, %v461
      %v492 = vpack.c.bf16 %v380, %v446
      %v493 = vpack.c.bf16 %v462, %v462
      %v494 = vpack.c.bf16 %v383, %v447
      %v495 = vpack.c.bf16 %v463, %v463
      %v528 = vunpack.c.l.b16 %v464
      %v529 = vunpack.c.h.b16 %v464
      %v530 = vunpack.c.l.b16 %v465
      %v531 = vunpack.c.l.b16 %v466
      %v532 = vunpack.c.h.b16 %v466
      %v533 = vunpack.c.l.b16 %v467
      %v534 = vunpack.c.l.b16 %v468
      %v535 = vunpack.c.h.b16 %v468
      %v536 = vunpack.c.l.b16 %v469
      %v537 = vunpack.c.l.b16 %v470
      %v538 = vunpack.c.h.b16 %v470
      %v539 = vunpack.c.l.b16 %v471
      %v540 = vunpack.c.l.b16 %v472
      %v541 = vunpack.c.h.b16 %v472
      %v542 = vunpack.c.l.b16 %v473
      %v543 = vunpack.c.l.b16 %v474
      %v544 = vunpack.c.h.b16 %v474
      %v545 = vunpack.c.l.b16 %v475
      %v546 = vunpack.c.l.b16 %v476
      %v547 = vunpack.c.h.b16 %v476
      %v548 = vunpack.c.l.b16 %v477
      %v549 = vunpack.c.l.b16 %v478
      %v550 = vunpack.c.h.b16 %v478
      %v551 = vunpack.c.l.b16 %v479
      %v552 = vunpack.c.l.b16 %v480
      %v553 = vunpack.c.h.b16 %v480
      %v554 = vunpack.c.l.b16 %v481
      %v555 = vunpack.c.l.b16 %v482
      %v556 = vunpack.c.h.b16 %v482
      %v557 = vunpack.c.l.b16 %v483
      %v558 = vunpack.c.l.b16 %v484
      %v559 = vunpack.c.h.b16 %v484
      %v560 = vunpack.c.l.b16 %v485
      %v561 = vunpack.c.l.b16 %v486
      %v562 = vunpack.c.h.b16 %v486
      %v563 = vunpack.c.l.b16 %v487
      %v564 = vunpack.c.l.b16 %v488
      %v565 = vunpack.c.h.b16 %v488
      %v566 = vunpack.c.l.b16 %v489
      %v567 = vunpack.c.l.b16 %v490
      %v568 = vunpack.c.h.b16 %v490
      %v569 = vunpack.c.l.b16 %v491
      %v570 = vunpack.c.l.b16 %v492
      %v571 = vunpack.c.h.b16 %v492
      %v572 = vunpack.c.l.b16 %v493
      %v573 = vunpack.c.l.b16 %v494
      %v574 = vunpack.c.h.b16 %v494
      %v575 = vunpack.c.l.b16 %v495
      %v576 = vpack.c.b16 %v528, %v528
      %v577 = vpack.c.b16 %v529, %v529
      %v578 = vpack.c.b16 %v530, %v530
      %v579 = vpack.c.b16 %v531, %v531
      %v580 = vpack.c.b16 %v532, %v532
      %v581 = vpack.c.b16 %v533, %v533
      %v582 = vpack.c.b16 %v534, %v534
      %v583 = vpack.c.b16 %v535, %v535
      %v584 = vpack.c.b16 %v536, %v536
      %v585 = vpack.c.b16 %v537, %v537
      %v586 = vpack.c.b16 %v538, %v538
      %v587 = vpack.c.b16 %v539, %v539
      %v588 = vpack.c.b16 %v540, %v540
      %v589 = vpack.c.b16 %v541, %v541
      %v590 = vpack.c.b16 %v542, %v542
      %v591 = vpack.c.b16 %v543, %v543
      %v592 = vpack.c.b16 %v544, %v544
      %v593 = vpack.c.b16 %v545, %v545
      %v594 = vpack.c.b16 %v546, %v546
      %v595 = vpack.c.b16 %v547, %v547
      %v596 = vpack.c.b16 %v548, %v548
      %v597 = vpack.c.b16 %v549, %v549
      %v598 = vpack.c.b16 %v550, %v550
      %v599 = vpack.c.b16 %v551, %v551
      %v600 = vpack.c.b16 %v552, %v552
      %v601 = vpack.c.b16 %v553, %v553
      %v602 = vpack.c.b16 %v554, %v554
      %v603 = vpack.c.b16 %v555, %v555
      %v604 = vpack.c.b16 %v556, %v556
      %v605 = vpack.c.b16 %v557, %v557
      %v606 = vpack.c.b16 %v558, %v558
      %v607 = vpack.c.b16 %v559, %v559
      %v608 = vpack.c.b16 %v560, %v560
      %v609 = vpack.c.b16 %v561, %v561
      %v610 = vpack.c.b16 %v562, %v562
      %v611 = vpack.c.b16 %v563, %v563
      %v612 = vpack.c.b16 %v564, %v564
      %v613 = vpack.c.b16 %v565, %v565
      %v614 = vpack.c.b16 %v566, %v566
      %v615 = vpack.c.b16 %v567, %v567
      %v616 = vpack.c.b16 %v568, %v568
      %v617 = vpack.c.b16 %v569, %v569
      %v618 = vpack.c.b16 %v570, %v570
      %v619 = vpack.c.b16 %v571, %v571
      %v620 = vpack.c.b16 %v572, %v572
      %v621 = vpack.c.b16 %v573, %v573
      %v622 = vpack.c.b16 %v574, %v574
      %v623 = vpack.c.b16 %v575, %v575
      %s672 = scalar_lea.vmem [#allocation2], 12
      %673 = vst.msk [vmem:[%s672] sm:$0xf] %vm226, %v576
      %674 = vst.msk [vmem:[%s672 + $0x4] sm:$0xf] %vm226, %v577
      %675 = vst.msk [vmem:[%s672 + $0x8] sm:$0x1] %vm229, %v578
      %676 = vst.msk [vmem:[%s672 + $0xc] sm:$0xf] %vm226, %v579
      %677 = vst.msk [vmem:[%s672 + $0x10] sm:$0xf] %vm226, %v580
      %678 = vst.msk [vmem:[%s672 + $0x14] sm:$0x1] %vm229, %v581
      %679 = vst.msk [vmem:[%s672 + $0x18] sm:$0xf] %vm226, %v582
      %680 = vst.msk [vmem:[%s672 + $0x1c] sm:$0xf] %vm226, %v583
      %681 = vst.msk [vmem:[%s672 + $0x20] sm:$0x1] %vm229, %v584
      %682 = vst.msk [vmem:[%s672 + $0x24] sm:$0xf] %vm226, %v585
      %683 = vst.msk [vmem:[%s672 + $0x28] sm:$0xf] %vm226, %v586
      %684 = vst.msk [vmem:[%s672 + $0x2c] sm:$0x1] %vm229, %v587
      %685 = vst.msk [vmem:[%s672 + $0x30] sm:$0xf] %vm226, %v588
      %686 = vst.msk [vmem:[%s672 + $0x34] sm:$0xf] %vm226, %v589
      %687 = vst.msk [vmem:[%s672 + $0x38] sm:$0x1] %vm229, %v590
      %688 = vst.msk [vmem:[%s672 + $0x3c] sm:$0xf] %vm226, %v591
      %689 = vst.msk [vmem:[%s672 + $0x40] sm:$0xf] %vm226, %v592
      %690 = vst.msk [vmem:[%s672 + $0x44] sm:$0x1] %vm229, %v593
      %691 = vst.msk [vmem:[%s672 + $0x48] sm:$0xf] %vm226, %v594
      %692 = vst.msk [vmem:[%s672 + $0x4c] sm:$0xf] %vm226, %v595
      %693 = vst.msk [vmem:[%s672 + $0x50] sm:$0x1] %vm229, %v596
      %694 = vst.msk [vmem:[%s672 + $0x54] sm:$0xf] %vm226, %v597
      %695 = vst.msk [vmem:[%s672 + $0x58] sm:$0xf] %vm226, %v598
      %696 = vst.msk [vmem:[%s672 + $0x5c] sm:$0x1] %vm229, %v599
      %697 = vst.msk [vmem:[%s672 + $0x60] sm:$0xf] %vm226, %v600
      %698 = vst.msk [vmem:[%s672 + $0x64] sm:$0xf] %vm226, %v601
      %699 = vst.msk [vmem:[%s672 + $0x68] sm:$0x1] %vm229, %v602
      %700 = vst.msk [vmem:[%s672 + $0x6c] sm:$0xf] %vm226, %v603
      %701 = vst.msk [vmem:[%s672 + $0x70] sm:$0xf] %vm226, %v604
      %702 = vst.msk [vmem:[%s672 + $0x74] sm:$0x1] %vm229, %v605
      %703 = vst.msk [vmem:[%s672 + $0x78] sm:$0xf] %vm226, %v606
      %704 = vst.msk [vmem:[%s672 + $0x7c] sm:$0xf] %vm226, %v607
      %705 = vst.msk [vmem:[%s672 + $0x80] sm:$0x1] %vm229, %v608
      %706 = vst.msk [vmem:[%s672 + $0x84] sm:$0xf] %vm226, %v609
      %707 = vst.msk [vmem:[%s672 + $0x88] sm:$0xf] %vm226, %v610
      %708 = vst.msk [vmem:[%s672 + $0x8c] sm:$0x1] %vm229, %v611
      %709 = vst.msk [vmem:[%s672 + $0x90] sm:$0xf] %vm226, %v612
      %710 = vst.msk [vmem:[%s672 + $0x94] sm:$0xf] %vm226, %v613
      %711 = vst.msk [vmem:[%s672 + $0x98] sm:$0x1] %vm229, %v614
      %712 = vst.msk [vmem:[%s672 + $0x9c] sm:$0xf] %vm226, %v615
      %713 = vst.msk [vmem:[%s672 + $0xa0] sm:$0xf] %vm226, %v616
      %714 = vst.msk [vmem:[%s672 + $0xa4] sm:$0x1] %vm229, %v617
      %715 = vst.msk [vmem:[%s672 + $0xa8] sm:$0xf] %vm226, %v618
      %716 = vst.msk [vmem:[%s672 + $0xac] sm:$0xf] %vm226, %v619
      %717 = vst.msk [vmem:[%s672 + $0xb0] sm:$0x1] %vm229, %v620
      %718 = vst.msk [vmem:[%s672 + $0xb4] sm:$0xf] %vm226, %v621
      %719 = vst.msk [vmem:[%s672 + $0xb8] sm:$0xf] %vm226, %v622
      %720 = vst.msk [vmem:[%s672 + $0xbc] sm:$0x1] %vm229, %v623
      %v721 = vld [vmem:[#allocation2] sm:$0xf]
      %v722 = vld [vmem:[#allocation2 + $0x4] sm:$0xf]
      %v723 = vld [vmem:[#allocation2 + $0xc] sm:$0xf]
      %v724 = vld [vmem:[#allocation2 + $0x10] sm:$0xf]
      %v725 = vld [vmem:[#allocation2 + $0x18] sm:$0xf]
      %v726 = vld [vmem:[#allocation2 + $0x1c] sm:$0xf]
      %v727 = vld [vmem:[#allocation2 + $0x24] sm:$0xf]
      %v728 = vld [vmem:[#allocation2 + $0x28] sm:$0xf]
      %v729 = vld [vmem:[#allocation2 + $0x30] sm:$0xf]
      %v730 = vld [vmem:[#allocation2 + $0x34] sm:$0xf]
      %v731 = vld [vmem:[#allocation2 + $0x3c] sm:$0xf]
      %v732 = vld [vmem:[#allocation2 + $0x40] sm:$0xf]
      %v733 = vld [vmem:[#allocation2 + $0x48] sm:$0xf]
      %v734 = vld [vmem:[#allocation2 + $0x4c] sm:$0xf]
      %v735 = vld [vmem:[#allocation2 + $0x54] sm:$0xf]
      %v736 = vld [vmem:[#allocation2 + $0x58] sm:$0xf]
      %v737 = vld [vmem:[#allocation2 + $0x60] sm:$0xf]
      %v738 = vld [vmem:[#allocation2 + $0x64] sm:$0xf]
      %v739 = vld [vmem:[#allocation2 + $0x6c] sm:$0xf]
      %v740 = vld [vmem:[#allocation2 + $0x70] sm:$0xf]
      %v741 = vld [vmem:[#allocation2 + $0x78] sm:$0xf]
      %v742 = vld [vmem:[#allocation2 + $0x7c] sm:$0xf]
      %v743 = vld [vmem:[#allocation2 + $0x84] sm:$0xf]
      %v744 = vld [vmem:[#allocation2 + $0x88] sm:$0xf]
      %v745 = vld [vmem:[#allocation2 + $0x90] sm:$0xf]
      %v746 = vld [vmem:[#allocation2 + $0x94] sm:$0xf]
      %v747 = vld [vmem:[#allocation2 + $0x9c] sm:$0xf]
      %v748 = vld [vmem:[#allocation2 + $0xa0] sm:$0xf]
      %v749 = vld [vmem:[#allocation2 + $0xa8] sm:$0xf]
      %v750 = vld [vmem:[#allocation2 + $0xac] sm:$0xf]
      %v751 = vld [vmem:[#allocation2 + $0xb4] sm:$0xf]
      %v752 = vld [vmem:[#allocation2 + $0xb8] sm:$0xf]
      %v753 = vld [vmem:[#allocation2 + $0x8] sm:$0x1]
      %v754 = vld [vmem:[#allocation2 + $0x14] sm:$0x1]
      %v755 = vld [vmem:[#allocation2 + $0x20] sm:$0x1]
      %v756 = vld [vmem:[#allocation2 + $0x2c] sm:$0x1]
      %v757 = vld [vmem:[#allocation2 + $0x38] sm:$0x1]
      %v758 = vld [vmem:[#allocation2 + $0x44] sm:$0x1]
      %v759 = vld [vmem:[#allocation2 + $0x50] sm:$0x1]
      %v760 = vld [vmem:[#allocation2 + $0x5c] sm:$0x1]
      %v761 = vld [vmem:[#allocation2 + $0x68] sm:$0x1]
      %v762 = vld [vmem:[#allocation2 + $0x74] sm:$0x1]
      %v763 = vld [vmem:[#allocation2 + $0x80] sm:$0x1]
      %v764 = vld [vmem:[#allocation2 + $0x8c] sm:$0x1]
      %v765 = vld [vmem:[#allocation2 + $0x98] sm:$0x1]
      %v766 = vld [vmem:[#allocation2 + $0xa4] sm:$0x1]
      %v767 = vld [vmem:[#allocation2 + $0xb0] sm:$0x1]
      %v768 = vld [vmem:[#allocation2 + $0xbc] sm:$0x1]
      %vm769 = vsmask.f32 3328
      %vm770 = vsmask.f32 7440
      %vm771 = vmor %vm769, %vm770
      %v773 = vshrl.u32 %v721, 16
      %v775 = vrot.slane %v773, 4
      %v776 = vshll.u32 %v721, 16
      %v778 = vrot.slane %v776, 5
      %v779 = vor.u32 %v775, %v778
      %v780 = vrot.slane %v779, 4
      %v782 = vshll.u32 %v722, 16
      %v784 = vrot.slane %v782, 5
      %v785 = vsel %vm771, %v780, %v784
      %v786 = vshrl.u32 %v722, 16
      %v788 = vrot.slane %v786, 4
      %v789 = vor.u32 %v788, %v784
      %v790 = vrot.slane %v789, 4
      %v792 = vshll.u32 %v753, 16
      %v794 = vrot.slane %v792, 5
      %v795 = vsel %vm771, %v790, %v794
      %v797 = vshrl.u32 %v723, 16
      %v799 = vrot.slane %v797, 4
      %v800 = vshll.u32 %v723, 16
      %v802 = vrot.slane %v800, 5
      %v803 = vor.u32 %v799, %v802
      %v804 = vrot.slane %v803, 4
      %v806 = vshll.u32 %v724, 16
      %v808 = vrot.slane %v806, 5
      %v809 = vsel %vm771, %v804, %v808
      %v810 = vshrl.u32 %v724, 16
      %v812 = vrot.slane %v810, 4
      %v813 = vor.u32 %v812, %v808
      %v814 = vrot.slane %v813, 4
      %v816 = vshll.u32 %v754, 16
      %v818 = vrot.slane %v816, 5
      %v819 = vsel %vm771, %v814, %v818
      %v821 = vshrl.u32 %v725, 16
      %v823 = vrot.slane %v821, 4
      %v824 = vshll.u32 %v725, 16
      %v826 = vrot.slane %v824, 5
      %v827 = vor.u32 %v823, %v826
      %v828 = vrot.slane %v827, 4
      %v830 = vshll.u32 %v726, 16
      %v832 = vrot.slane %v830, 5
      %v833 = vsel %vm771, %v828, %v832
      %v834 = vshrl.u32 %v726, 16
      %v836 = vrot.slane %v834, 4
      %v837 = vor.u32 %v836, %v832
      %v838 = vrot.slane %v837, 4
      %v840 = vshll.u32 %v755, 16
      %v842 = vrot.slane %v840, 5
      %v843 = vsel %vm771, %v838, %v842
      %v845 = vshrl.u32 %v727, 16
      %v847 = vrot.slane %v845, 4
      %v848 = vshll.u32 %v727, 16
      %v850 = vrot.slane %v848, 5
      %v851 = vor.u32 %v847, %v850
      %v852 = vrot.slane %v851, 4
      %v854 = vshll.u32 %v728, 16
      %v856 = vrot.slane %v854, 5
      %v857 = vsel %vm771, %v852, %v856
      %v858 = vshrl.u32 %v728, 16
      %v860 = vrot.slane %v858, 4
      %v861 = vor.u32 %v860, %v856
      %v862 = vrot.slane %v861, 4
      %v864 = vshll.u32 %v756, 16
      %v866 = vrot.slane %v864, 5
      %v867 = vsel %vm771, %v862, %v866
      %v869 = vshrl.u32 %v729, 16
      %v871 = vrot.slane %v869, 4
      %v872 = vshll.u32 %v729, 16
      %v874 = vrot.slane %v872, 5
      %v875 = vor.u32 %v871, %v874
      %v876 = vrot.slane %v875, 4
      %v878 = vshll.u32 %v730, 16
      %v880 = vrot.slane %v878, 5
      %v881 = vsel %vm771, %v876, %v880
      %v882 = vshrl.u32 %v730, 16
      %v884 = vrot.slane %v882, 4
      %v885 = vor.u32 %v884, %v880
      %v886 = vrot.slane %v885, 4
      %v888 = vshll.u32 %v757, 16
      %v890 = vrot.slane %v888, 5
      %v891 = vsel %vm771, %v886, %v890
      %v893 = vshrl.u32 %v731, 16
      %v895 = vrot.slane %v893, 4
      %v896 = vshll.u32 %v731, 16
      %v898 = vrot.slane %v896, 5
      %v899 = vor.u32 %v895, %v898
      %v900 = vrot.slane %v899, 4
      %v902 = vshll.u32 %v732, 16
      %v904 = vrot.slane %v902, 5
      %v905 = vsel %vm771, %v900, %v904
      %v906 = vshrl.u32 %v732, 16
      %v908 = vrot.slane %v906, 4
      %v909 = vor.u32 %v908, %v904
      %v910 = vrot.slane %v909, 4
      %v912 = vshll.u32 %v758, 16
      %v914 = vrot.slane %v912, 5
      %v915 = vsel %vm771, %v910, %v914
      %v917 = vshrl.u32 %v733, 16
      %v919 = vrot.slane %v917, 4
      %v920 = vshll.u32 %v733, 16
      %v922 = vrot.slane %v920, 5
      %v923 = vor.u32 %v919, %v922
      %v924 = vrot.slane %v923, 4
      %v926 = vshll.u32 %v734, 16
      %v928 = vrot.slane %v926, 5
      %v929 = vsel %vm771, %v924, %v928
      %v930 = vshrl.u32 %v734, 16
      %v932 = vrot.slane %v930, 4
      %v933 = vor.u32 %v932, %v928
      %v934 = vrot.slane %v933, 4
      %v936 = vshll.u32 %v759, 16
      %v938 = vrot.slane %v936, 5
      %v939 = vsel %vm771, %v934, %v938
      %v941 = vshrl.u32 %v735, 16
      %v943 = vrot.slane %v941, 4
      %v944 = vshll.u32 %v735, 16
      %v946 = vrot.slane %v944, 5
      %v947 = vor.u32 %v943, %v946
      %v948 = vrot.slane %v947, 4
      %v950 = vshll.u32 %v736, 16
      %v952 = vrot.slane %v950, 5
      %v953 = vsel %vm771, %v948, %v952
      %v954 = vshrl.u32 %v736, 16
      %v956 = vrot.slane %v954, 4
      %v957 = vor.u32 %v956, %v952
      %v958 = vrot.slane %v957, 4
      %v960 = vshll.u32 %v760, 16
      %v962 = vrot.slane %v960, 5
      %v963 = vsel %vm771, %v958, %v962
      %v965 = vshrl.u32 %v737, 16
      %v967 = vrot.slane %v965, 4
      %v968 = vshll.u32 %v737, 16
      %v970 = vrot.slane %v968, 5
      %v971 = vor.u32 %v967, %v970
      %v972 = vrot.slane %v971, 4
      %v974 = vshll.u32 %v738, 16
      %v976 = vrot.slane %v974, 5
      %v977 = vsel %vm771, %v972, %v976
      %v978 = vshrl.u32 %v738, 16
      %v980 = vrot.slane %v978, 4
      %v981 = vor.u32 %v980, %v976
      %v982 = vrot.slane %v981, 4
      %v984 = vshll.u32 %v761, 16
      %v986 = vrot.slane %v984, 5
      %v987 = vsel %vm771, %v982, %v986
      %v989 = vshrl.u32 %v739, 16
      %v991 = vrot.slane %v989, 4
      %v992 = vshll.u32 %v739, 16
      %v994 = vrot.slane %v992, 5
      %v995 = vor.u32 %v991, %v994
      %v996 = vrot.slane %v995, 4
      %v998 = vshll.u32 %v740, 16
      %v1000 = vrot.slane %v998, 5
      %v1001 = vsel %vm771, %v996, %v1000
      %v1002 = vshrl.u32 %v740, 16
      %v1004 = vrot.slane %v1002, 4
      %v1005 = vor.u32 %v1004, %v1000
      %v1006 = vrot.slane %v1005, 4
      %v1008 = vshll.u32 %v762, 16
      %v1010 = vrot.slane %v1008, 5
      %v1011 = vsel %vm771, %v1006, %v1010
      %v1013 = vshrl.u32 %v741, 16
      %v1015 = vrot.slane %v1013, 4
      %v1016 = vshll.u32 %v741, 16
      %v1018 = vrot.slane %v1016, 5
      %v1019 = vor.u32 %v1015, %v1018
      %v1020 = vrot.slane %v1019, 4
      %v1022 = vshll.u32 %v742, 16
      %v1024 = vrot.slane %v1022, 5
      %v1025 = vsel %vm771, %v1020, %v1024
      %v1026 = vshrl.u32 %v742, 16
      %v1028 = vrot.slane %v1026, 4
      %v1029 = vor.u32 %v1028, %v1024
      %v1030 = vrot.slane %v1029, 4
      %v1032 = vshll.u32 %v763, 16
      %v1034 = vrot.slane %v1032, 5
      %v1035 = vsel %vm771, %v1030, %v1034
      %v1037 = vshrl.u32 %v743, 16
      %v1039 = vrot.slane %v1037, 4
      %v1040 = vshll.u32 %v743, 16
      %v1042 = vrot.slane %v1040, 5
      %v1043 = vor.u32 %v1039, %v1042
      %v1044 = vrot.slane %v1043, 4
      %v1046 = vshll.u32 %v744, 16
      %v1048 = vrot.slane %v1046, 5
      %v1049 = vsel %vm771, %v1044, %v1048
      %v1050 = vshrl.u32 %v744, 16
      %v1052 = vrot.slane %v1050, 4
      %v1053 = vor.u32 %v1052, %v1048
      %v1054 = vrot.slane %v1053, 4
      %v1056 = vshll.u32 %v764, 16
      %v1058 = vrot.slane %v1056, 5
      %v1059 = vsel %vm771, %v1054, %v1058
      %v1061 = vshrl.u32 %v745, 16
      %v1063 = vrot.slane %v1061, 4
      %v1064 = vshll.u32 %v745, 16
      %v1066 = vrot.slane %v1064, 5
      %v1067 = vor.u32 %v1063, %v1066
      %v1068 = vrot.slane %v1067, 4
      %v1070 = vshll.u32 %v746, 16
      %v1072 = vrot.slane %v1070, 5
      %v1073 = vsel %vm771, %v1068, %v1072
      %v1074 = vshrl.u32 %v746, 16
      %v1076 = vrot.slane %v1074, 4
      %v1077 = vor.u32 %v1076, %v1072
      %v1078 = vrot.slane %v1077, 4
      %v1080 = vshll.u32 %v765, 16
      %v1082 = vrot.slane %v1080, 5
      %v1083 = vsel %vm771, %v1078, %v1082
      %v1085 = vshrl.u32 %v747, 16
      %v1087 = vrot.slane %v1085, 4
      %v1088 = vshll.u32 %v747, 16
      %v1090 = vrot.slane %v1088, 5
      %v1091 = vor.u32 %v1087, %v1090
      %v1092 = vrot.slane %v1091, 4
      %v1094 = vshll.u32 %v748, 16
      %v1096 = vrot.slane %v1094, 5
      %v1097 = vsel %vm771, %v1092, %v1096
      %v1098 = vshrl.u32 %v748, 16
      %v1100 = vrot.slane %v1098, 4
      %v1101 = vor.u32 %v1100, %v1096
      %v1102 = vrot.slane %v1101, 4
      %v1104 = vshll.u32 %v766, 16
      %v1106 = vrot.slane %v1104, 5
      %v1107 = vsel %vm771, %v1102, %v1106
      %v1109 = vshrl.u32 %v749, 16
      %v1111 = vrot.slane %v1109, 4
      %v1112 = vshll.u32 %v749, 16
      %v1114 = vrot.slane %v1112, 5
      %v1115 = vor.u32 %v1111, %v1114
      %v1116 = vrot.slane %v1115, 4
      %v1118 = vshll.u32 %v750, 16
      %v1120 = vrot.slane %v1118, 5
      %v1121 = vsel %vm771, %v1116, %v1120
      %v1122 = vshrl.u32 %v750, 16
      %v1124 = vrot.slane %v1122, 4
      %v1125 = vor.u32 %v1124, %v1120
      %v1126 = vrot.slane %v1125, 4
      %v1128 = vshll.u32 %v767, 16
      %v1130 = vrot.slane %v1128, 5
      %v1131 = vsel %vm771, %v1126, %v1130
      %v1133 = vshrl.u32 %v751, 16
      %v1135 = vrot.slane %v1133, 4
      %v1136 = vshll.u32 %v751, 16
      %v1138 = vrot.slane %v1136, 5
      %v1139 = vor.u32 %v1135, %v1138
      %v1140 = vrot.slane %v1139, 4
      %v1142 = vshll.u32 %v752, 16
      %v1144 = vrot.slane %v1142, 5
      %v1145 = vsel %vm771, %v1140, %v1144
      %v1146 = vshrl.u32 %v752, 16
      %v1148 = vrot.slane %v1146, 4
      %v1149 = vor.u32 %v1148, %v1144
      %v1150 = vrot.slane %v1149, 4
      %v1152 = vshll.u32 %v768, 16
      %v1154 = vrot.slane %v1152, 5
      %v1155 = vsel %vm771, %v1150, %v1154
      %v1188 = vunpack.c.l.b16 %v721
      %v1189 = vunpack.c.l.b16 %v722
      %v1190 = vunpack.c.l.b16 %v723
      %v1191 = vunpack.c.l.b16 %v724
      %v1192 = vunpack.c.l.b16 %v725
      %v1193 = vunpack.c.l.b16 %v726
      %v1194 = vunpack.c.l.b16 %v727
      %v1195 = vunpack.c.l.b16 %v728
      %v1196 = vunpack.c.l.b16 %v729
      %v1197 = vunpack.c.l.b16 %v730
      %v1198 = vunpack.c.l.b16 %v731
      %v1199 = vunpack.c.l.b16 %v732
      %v1200 = vunpack.c.l.b16 %v733
      %v1201 = vunpack.c.l.b16 %v734
      %v1202 = vunpack.c.l.b16 %v735
      %v1203 = vunpack.c.l.b16 %v736
      %v1204 = vunpack.c.l.b16 %v737
      %v1205 = vunpack.c.l.b16 %v738
      %v1206 = vunpack.c.l.b16 %v739
      %v1207 = vunpack.c.l.b16 %v740
      %v1208 = vunpack.c.l.b16 %v741
      %v1209 = vunpack.c.l.b16 %v742
      %v1210 = vunpack.c.l.b16 %v743
      %v1211 = vunpack.c.l.b16 %v744
      %v1212 = vunpack.c.l.b16 %v745
      %v1213 = vunpack.c.l.b16 %v746
      %v1214 = vunpack.c.l.b16 %v747
      %v1215 = vunpack.c.l.b16 %v748
      %v1216 = vunpack.c.l.b16 %v749
      %v1217 = vunpack.c.l.b16 %v750
      %v1218 = vunpack.c.l.b16 %v751
      %v1219 = vunpack.c.l.b16 %v752
      %v1220 = vpack.c.b16 %v1189, %v1188
      %v1221 = vpack.c.b16 %v1191, %v1190
      %v1222 = vpack.c.b16 %v1193, %v1192
      %v1223 = vpack.c.b16 %v1195, %v1194
      %v1224 = vpack.c.b16 %v1197, %v1196
      %v1225 = vpack.c.b16 %v1199, %v1198
      %v1226 = vpack.c.b16 %v1201, %v1200
      %v1227 = vpack.c.b16 %v1203, %v1202
      %v1228 = vpack.c.b16 %v1205, %v1204
      %v1229 = vpack.c.b16 %v1207, %v1206
      %v1230 = vpack.c.b16 %v1209, %v1208
      %v1231 = vpack.c.b16 %v1211, %v1210
      %v1232 = vpack.c.b16 %v1213, %v1212
      %v1233 = vpack.c.b16 %v1215, %v1214
      %v1234 = vpack.c.b16 %v1217, %v1216
      %v1235 = vpack.c.b16 %v1219, %v1218
      %v1236 = vunpack.c.l.b16 %v785
      %v1237 = vunpack.c.l.b16 %v795
      %v1238 = vunpack.c.l.b16 %v809
      %v1239 = vunpack.c.l.b16 %v819
      %v1240 = vunpack.c.l.b16 %v833
      %v1241 = vunpack.c.l.b16 %v843
      %v1242 = vunpack.c.l.b16 %v857
      %v1243 = vunpack.c.l.b16 %v867
      %v1244 = vunpack.c.l.b16 %v881
      %v1245 = vunpack.c.l.b16 %v891
      %v1246 = vunpack.c.l.b16 %v905
      %v1247 = vunpack.c.l.b16 %v915
      %v1248 = vunpack.c.l.b16 %v929
      %v1249 = vunpack.c.l.b16 %v939
      %v1250 = vunpack.c.l.b16 %v953
      %v1251 = vunpack.c.l.b16 %v963
      %v1252 = vunpack.c.l.b16 %v977
      %v1253 = vunpack.c.l.b16 %v987
      %v1254 = vunpack.c.l.b16 %v1001
      %v1255 = vunpack.c.l.b16 %v1011
      %v1256 = vunpack.c.l.b16 %v1025
      %v1257 = vunpack.c.l.b16 %v1035
      %v1258 = vunpack.c.l.b16 %v1049
      %v1259 = vunpack.c.l.b16 %v1059
      %v1260 = vunpack.c.l.b16 %v1073
      %v1261 = vunpack.c.l.b16 %v1083
      %v1262 = vunpack.c.l.b16 %v1097
      %v1263 = vunpack.c.l.b16 %v1107
      %v1264 = vunpack.c.l.b16 %v1121
      %v1265 = vunpack.c.l.b16 %v1131
      %v1266 = vunpack.c.l.b16 %v1145
      %v1267 = vunpack.c.l.b16 %v1155
      %v1268 = vpack.c.b16 %v1237, %v1236
      %v1269 = vpack.c.b16 %v1239, %v1238
      %v1270 = vpack.c.b16 %v1241, %v1240
      %v1271 = vpack.c.b16 %v1243, %v1242
      %v1272 = vpack.c.b16 %v1245, %v1244
      %v1273 = vpack.c.b16 %v1247, %v1246
      %v1274 = vpack.c.b16 %v1249, %v1248
      %v1275 = vpack.c.b16 %v1251, %v1250
      %v1276 = vpack.c.b16 %v1253, %v1252
      %v1277 = vpack.c.b16 %v1255, %v1254
      %v1278 = vpack.c.b16 %v1257, %v1256
      %v1279 = vpack.c.b16 %v1259, %v1258
      %v1280 = vpack.c.b16 %v1261, %v1260
      %v1281 = vpack.c.b16 %v1263, %v1262
      %v1282 = vpack.c.b16 %v1265, %v1264
      %v1283 = vpack.c.b16 %v1267, %v1266
      %1284 = vrot.lane.b32.xlu0 %v1268, 4
      %v1285 = vpop.permute.xlu0 %1284
      %1286 = vrot.lane.b32.xlu0 %v1269, 4
      %v1287 = vpop.permute.xlu0 %1286
      %1288 = vrot.lane.b32.xlu0 %v1270, 4
      %v1289 = vpop.permute.xlu0 %1288
      %1290 = vrot.lane.b32.xlu0 %v1271, 4
      %v1291 = vpop.permute.xlu0 %1290
      %1292 = vrot.lane.b32.xlu0 %v1272, 4
      %v1293 = vpop.permute.xlu0 %1292
      %1294 = vrot.lane.b32.xlu0 %v1273, 4
      %v1295 = vpop.permute.xlu0 %1294
      %1296 = vrot.lane.b32.xlu0 %v1274, 4
      %v1297 = vpop.permute.xlu0 %1296
      %1298 = vrot.lane.b32.xlu0 %v1275, 4
      %v1299 = vpop.permute.xlu0 %1298
      %1300 = vrot.lane.b32.xlu0 %v1276, 4
      %v1301 = vpop.permute.xlu0 %1300
      %1302 = vrot.lane.b32.xlu0 %v1277, 4
      %v1303 = vpop.permute.xlu0 %1302
      %1304 = vrot.lane.b32.xlu0 %v1278, 4
      %v1305 = vpop.permute.xlu0 %1304
      %1306 = vrot.lane.b32.xlu0 %v1279, 4
      %v1307 = vpop.permute.xlu0 %1306
      %1308 = vrot.lane.b32.xlu0 %v1280, 4
      %v1309 = vpop.permute.xlu0 %1308
      %1310 = vrot.lane.b32.xlu0 %v1281, 4
      %v1311 = vpop.permute.xlu0 %1310
      %1312 = vrot.lane.b32.xlu0 %v1282, 4
      %v1313 = vpop.permute.xlu0 %1312
      %1314 = vrot.lane.b32.xlu0 %v1283, 4
      %v1315 = vpop.permute.xlu0 %1314
      %vm1316 = vcmask 31744
      %v1319 = vsel %vm1316, %v1220, %v1285
      %v1323 = vsel %vm1316, %v1221, %v1287
      %v1327 = vsel %vm1316, %v1222, %v1289
      %v1331 = vsel %vm1316, %v1223, %v1291
      %v1335 = vsel %vm1316, %v1224, %v1293
      %v1339 = vsel %vm1316, %v1225, %v1295
      %v1343 = vsel %vm1316, %v1226, %v1297
      %v1347 = vsel %vm1316, %v1227, %v1299
      %v1351 = vsel %vm1316, %v1228, %v1301
      %v1355 = vsel %vm1316, %v1229, %v1303
      %v1359 = vsel %vm1316, %v1230, %v1305
      %v1363 = vsel %vm1316, %v1231, %v1307
      %v1367 = vsel %vm1316, %v1232, %v1309
      %v1371 = vsel %vm1316, %v1233, %v1311
      %v1375 = vsel %vm1316, %v1234, %v1313
      %v1379 = vsel %vm1316, %v1235, %v1315
      %vm1381 = vcmask 64512
      %1382 = vst.msk [vmem:[#allocation3] sm:$0xff] %vm1381, %v1319
      %1383 = vst.msk [vmem:[#allocation3 + $0x8] sm:$0xff] %vm1381, %v1323
      %1384 = vst.msk [vmem:[#allocation3 + $0x10] sm:$0xff] %vm1381, %v1327
      %1385 = vst.msk [vmem:[#allocation3 + $0x18] sm:$0xff] %vm1381, %v1331
      %1386 = vst.msk [vmem:[#allocation3 + $0x20] sm:$0xff] %vm1381, %v1335
      %1387 = vst.msk [vmem:[#allocation3 + $0x28] sm:$0xff] %vm1381, %v1339
      %1388 = vst.msk [vmem:[#allocation3 + $0x30] sm:$0xff] %vm1381, %v1343
      %1389 = vst.msk [vmem:[#allocation3 + $0x38] sm:$0xff] %vm1381, %v1347
      %1390 = vst.msk [vmem:[#allocation3 + $0x40] sm:$0xff] %vm1381, %v1351
      %1391 = vst.msk [vmem:[#allocation3 + $0x48] sm:$0xff] %vm1381, %v1355
      %1392 = vst.msk [vmem:[#allocation3 + $0x50] sm:$0xff] %vm1381, %v1359
      %1393 = vst.msk [vmem:[#allocation3 + $0x58] sm:$0xff] %vm1381, %v1363
      %1394 = vst.msk [vmem:[#allocation3 + $0x60] sm:$0xff] %vm1381, %v1367
      %1395 = vst.msk [vmem:[#allocation3 + $0x68] sm:$0xff] %vm1381, %v1371
      %1396 = vst.msk [vmem:[#allocation3 + $0x70] sm:$0xff] %vm1381, %v1375
      %1397 = vst.msk [vmem:[#allocation3 + $0x78] sm:$0xff] %vm1381, %v1379
      %v1398 = vld [vmem:[#allocation2] sm:$0xe]
      %v1399 = vld [vmem:[#allocation2 + $0x4] sm:$0xf]
      %v1400 = vld [vmem:[#allocation2 + $0x8] sm:$0x1]
      %v1401 = vld [vmem:[#allocation2 + $0xc] sm:$0xe]
      %v1402 = vld [vmem:[#allocation2 + $0x10] sm:$0xf]
      %v1403 = vld [vmem:[#allocation2 + $0x14] sm:$0x1]
      %v1404 = vld [vmem:[#allocation2 + $0x18] sm:$0xe]
      %v1405 = vld [vmem:[#allocation2 + $0x1c] sm:$0xf]
      %v1406 = vld [vmem:[#allocation2 + $0x20] sm:$0x1]
      %v1407 = vld [vmem:[#allocation2 + $0x24] sm:$0xe]
      %v1408 = vld [vmem:[#allocation2 + $0x28] sm:$0xf]
      %v1409 = vld [vmem:[#allocation2 + $0x2c] sm:$0x1]
      %v1410 = vld [vmem:[#allocation2 + $0x30] sm:$0xe]
      %v1411 = vld [vmem:[#allocation2 + $0x34] sm:$0xf]
      %v1412 = vld [vmem:[#allocation2 + $0x38] sm:$0x1]
      %v1413 = vld [vmem:[#allocation2 + $0x3c] sm:$0xe]
      %v1414 = vld [vmem:[#allocation2 + $0x40] sm:$0xf]
      %v1415 = vld [vmem:[#allocation2 + $0x44] sm:$0x1]
      %v1416 = vld [vmem:[#allocation2 + $0x48] sm:$0xe]
      %v1417 = vld [vmem:[#allocation2 + $0x4c] sm:$0xf]
      %v1418 = vld [vmem:[#allocation2 + $0x50] sm:$0x1]
      %v1419 = vld [vmem:[#allocation2 + $0x54] sm:$0xe]
      %v1420 = vld [vmem:[#allocation2 + $0x58] sm:$0xf]
      %v1421 = vld [vmem:[#allocation2 + $0x5c] sm:$0x1]
      %v1422 = vld [vmem:[#allocation2 + $0x60] sm:$0xe]
      %v1423 = vld [vmem:[#allocation2 + $0x64] sm:$0xf]
      %v1424 = vld [vmem:[#allocation2 + $0x68] sm:$0x1]
      %v1425 = vld [vmem:[#allocation2 + $0x6c] sm:$0xe]
      %v1426 = vld [vmem:[#allocation2 + $0x70] sm:$0xf]
      %v1427 = vld [vmem:[#allocation2 + $0x74] sm:$0x1]
      %v1428 = vld [vmem:[#allocation2 + $0x78] sm:$0xe]
      %v1429 = vld [vmem:[#allocation2 + $0x7c] sm:$0xf]
      %v1430 = vld [vmem:[#allocation2 + $0x80] sm:$0x1]
      %v1431 = vld [vmem:[#allocation2 + $0x84] sm:$0xe]
      %v1432 = vld [vmem:[#allocation2 + $0x88] sm:$0xf]
      %v1433 = vld [vmem:[#allocation2 + $0x8c] sm:$0x1]
      %v1434 = vld [vmem:[#allocation2 + $0x90] sm:$0xe]
      %v1435 = vld [vmem:[#allocation2 + $0x94] sm:$0xf]
      %v1436 = vld [vmem:[#allocation2 + $0x98] sm:$0x1]
      %v1437 = vld [vmem:[#allocation2 + $0x9c] sm:$0xe]
      %v1438 = vld [vmem:[#allocation2 + $0xa0] sm:$0xf]
      %v1439 = vld [vmem:[#allocation2 + $0xa4] sm:$0x1]
      %v1440 = vld [vmem:[#allocation2 + $0xa8] sm:$0xe]
      %v1441 = vld [vmem:[#allocation2 + $0xac] sm:$0xf]
      %v1442 = vld [vmem:[#allocation2 + $0xb0] sm:$0x1]
      %v1443 = vld [vmem:[#allocation2 + $0xb4] sm:$0xe]
      %v1444 = vld [vmem:[#allocation2 + $0xb8] sm:$0xf]
      %v1445 = vld [vmem:[#allocation2 + $0xbc] sm:$0x1]
      %vm1494 = vcmask 1042432
      %vm1495 = vcmask 1046532
      %vm1496 = vmor %vm1494, %vm1495
      %v1497 = vrot.slane %v1398, 5
      %v1498 = vrot.slane %v1497, 4
      %v1499 = vrot.slane %v1399, 5
      %v1500 = vsel %vm1496, %v1498, %v1499
      %v1501 = vrot.slane %v1499, 4
      %v1502 = vrot.slane %v1400, 5
      %v1503 = vsel %vm1496, %v1501, %v1502
      %v1504 = vrot.slane %v1401, 5
      %v1505 = vrot.slane %v1504, 4
      %v1506 = vrot.slane %v1402, 5
      %v1507 = vsel %vm1496, %v1505, %v1506
      %v1508 = vrot.slane %v1506, 4
      %v1509 = vrot.slane %v1403, 5
      %v1510 = vsel %vm1496, %v1508, %v1509
      %v1511 = vrot.slane %v1404, 5
      %v1512 = vrot.slane %v1511, 4
      %v1513 = vrot.slane %v1405, 5
      %v1514 = vsel %vm1496, %v1512, %v1513
      %v1515 = vrot.slane %v1513, 4
      %v1516 = vrot.slane %v1406, 5
      %v1517 = vsel %vm1496, %v1515, %v1516
      %v1518 = vrot.slane %v1407, 5
      %v1519 = vrot.slane %v1518, 4
      %v1520 = vrot.slane %v1408, 5
      %v1521 = vsel %vm1496, %v1519, %v1520
      %v1522 = vrot.slane %v1520, 4
      %v1523 = vrot.slane %v1409, 5
      %v1524 = vsel %vm1496, %v1522, %v1523
      %v1525 = vrot.slane %v1410, 5
      %v1526 = vrot.slane %v1525, 4
      %v1527 = vrot.slane %v1411, 5
      %v1528 = vsel %vm1496, %v1526, %v1527
      %v1529 = vrot.slane %v1527, 4
      %v1530 = vrot.slane %v1412, 5
      %v1531 = vsel %vm1496, %v1529, %v1530
      %v1532 = vrot.slane %v1413, 5
      %v1533 = vrot.slane %v1532, 4
      %v1534 = vrot.slane %v1414, 5
      %v1535 = vsel %vm1496, %v1533, %v1534
      %v1536 = vrot.slane %v1534, 4
      %v1537 = vrot.slane %v1415, 5
      %v1538 = vsel %vm1496, %v1536, %v1537
      %v1539 = vrot.slane %v1416, 5
      %v1540 = vrot.slane %v1539, 4
      %v1541 = vrot.slane %v1417, 5
      %v1542 = vsel %vm1496, %v1540, %v1541
      %v1543 = vrot.slane %v1541, 4
      %v1544 = vrot.slane %v1418, 5
      %v1545 = vsel %vm1496, %v1543, %v1544
      %v1546 = vrot.slane %v1419, 5
      %v1547 = vrot.slane %v1546, 4
      %v1548 = vrot.slane %v1420, 5
      %v1549 = vsel %vm1496, %v1547, %v1548
      %v1550 = vrot.slane %v1548, 4
      %v1551 = vrot.slane %v1421, 5
      %v1552 = vsel %vm1496, %v1550, %v1551
      %v1553 = vrot.slane %v1422, 5
      %v1554 = vrot.slane %v1553, 4
      %v1555 = vrot.slane %v1423, 5
      %v1556 = vsel %vm1496, %v1554, %v1555
      %v1557 = vrot.slane %v1555, 4
      %v1558 = vrot.slane %v1424, 5
      %v1559 = vsel %vm1496, %v1557, %v1558
      %v1560 = vrot.slane %v1425, 5
      %v1561 = vrot.slane %v1560, 4
      %v1562 = vrot.slane %v1426, 5
      %v1563 = vsel %vm1496, %v1561, %v1562
      %v1564 = vrot.slane %v1562, 4
      %v1565 = vrot.slane %v1427, 5
      %v1566 = vsel %vm1496, %v1564, %v1565
      %v1567 = vrot.slane %v1428, 5
      %v1568 = vrot.slane %v1567, 4
      %v1569 = vrot.slane %v1429, 5
      %v1570 = vsel %vm1496, %v1568, %v1569
      %v1571 = vrot.slane %v1569, 4
      %v1572 = vrot.slane %v1430, 5
      %v1573 = vsel %vm1496, %v1571, %v1572
      %v1574 = vrot.slane %v1431, 5
      %v1575 = vrot.slane %v1574, 4
      %v1576 = vrot.slane %v1432, 5
      %v1577 = vsel %vm1496, %v1575, %v1576
      %v1578 = vrot.slane %v1576, 4
      %v1579 = vrot.slane %v1433, 5
      %v1580 = vsel %vm1496, %v1578, %v1579
      %v1581 = vrot.slane %v1434, 5
      %v1582 = vrot.slane %v1581, 4
      %v1583 = vrot.slane %v1435, 5
      %v1584 = vsel %vm1496, %v1582, %v1583
      %v1585 = vrot.slane %v1583, 4
      %v1586 = vrot.slane %v1436, 5
      %v1587 = vsel %vm1496, %v1585, %v1586
      %v1588 = vrot.slane %v1437, 5
      %v1589 = vrot.slane %v1588, 4
      %v1590 = vrot.slane %v1438, 5
      %v1591 = vsel %vm1496, %v1589, %v1590
      %v1592 = vrot.slane %v1590, 4
      %v1593 = vrot.slane %v1439, 5
      %v1594 = vsel %vm1496, %v1592, %v1593
      %v1595 = vrot.slane %v1440, 5
      %v1596 = vrot.slane %v1595, 4
      %v1597 = vrot.slane %v1441, 5
      %v1598 = vsel %vm1496, %v1596, %v1597
      %v1599 = vrot.slane %v1597, 4
      %v1600 = vrot.slane %v1442, 5
      %v1601 = vsel %vm1496, %v1599, %v1600
      %v1602 = vrot.slane %v1443, 5
      %v1603 = vrot.slane %v1602, 4
      %v1604 = vrot.slane %v1444, 5
      %v1605 = vsel %vm1496, %v1603, %v1604
      %v1606 = vrot.slane %v1604, 4
      %v1607 = vrot.slane %v1445, 5
      %v1608 = vsel %vm1496, %v1606, %v1607
      %v1609 = vld [vmem:[%s672] sm:$0xf]
      %v1610 = vld [vmem:[%s672 + $0x4] sm:$0xf]
      %v1611 = vld [vmem:[%s672 + $0xc] sm:$0xf]
      %v1612 = vld [vmem:[%s672 + $0x10] sm:$0xf]
      %v1613 = vld [vmem:[%s672 + $0x18] sm:$0xf]
      %v1614 = vld [vmem:[%s672 + $0x1c] sm:$0xf]
      %v1615 = vld [vmem:[%s672 + $0x24] sm:$0xf]
      %v1616 = vld [vmem:[%s672 + $0x28] sm:$0xf]
      %v1617 = vld [vmem:[%s672 + $0x30] sm:$0xf]
      %v1618 = vld [vmem:[%s672 + $0x34] sm:$0xf]
      %v1619 = vld [vmem:[%s672 + $0x3c] sm:$0xf]
      %v1620 = vld [vmem:[%s672 + $0x40] sm:$0xf]
      %v1621 = vld [vmem:[%s672 + $0x48] sm:$0xf]
      %v1622 = vld [vmem:[%s672 + $0x4c] sm:$0xf]
      %v1623 = vld [vmem:[%s672 + $0x54] sm:$0xf]
      %v1624 = vld [vmem:[%s672 + $0x58] sm:$0xf]
      %v1625 = vld [vmem:[%s672 + $0x60] sm:$0xf]
      %v1626 = vld [vmem:[%s672 + $0x64] sm:$0xf]
      %v1627 = vld [vmem:[%s672 + $0x6c] sm:$0xf]
      %v1628 = vld [vmem:[%s672 + $0x70] sm:$0xf]
      %v1629 = vld [vmem:[%s672 + $0x78] sm:$0xf]
      %v1630 = vld [vmem:[%s672 + $0x7c] sm:$0xf]
      %v1631 = vld [vmem:[%s672 + $0x84] sm:$0xf]
      %v1632 = vld [vmem:[%s672 + $0x88] sm:$0xf]
      %v1633 = vld [vmem:[%s672 + $0x90] sm:$0xf]
      %v1634 = vld [vmem:[%s672 + $0x94] sm:$0xf]
      %v1635 = vld [vmem:[%s672 + $0x9c] sm:$0xf]
      %v1636 = vld [vmem:[%s672 + $0xa0] sm:$0xf]
      %v1637 = vld [vmem:[%s672 + $0xa8] sm:$0xf]
      %v1638 = vld [vmem:[%s672 + $0xac] sm:$0xf]
      %v1639 = vld [vmem:[%s672 + $0xb4] sm:$0xf]
      %v1640 = vld [vmem:[%s672 + $0xb8] sm:$0xf]
      %v1641 = vunpack.c.l.b16 %v1500
      %v1642 = vunpack.c.l.b16 %v1503
      %v1643 = vunpack.c.l.b16 %v1507
      %v1644 = vunpack.c.l.b16 %v1510
      %v1645 = vunpack.c.l.b16 %v1514
      %v1646 = vunpack.c.l.b16 %v1517
      %v1647 = vunpack.c.l.b16 %v1521
      %v1648 = vunpack.c.l.b16 %v1524
      %v1649 = vunpack.c.l.b16 %v1528
      %v1650 = vunpack.c.l.b16 %v1531
      %v1651 = vunpack.c.l.b16 %v1535
      %v1652 = vunpack.c.l.b16 %v1538
      %v1653 = vunpack.c.l.b16 %v1542
      %v1654 = vunpack.c.l.b16 %v1545
      %v1655 = vunpack.c.l.b16 %v1549
      %v1656 = vunpack.c.l.b16 %v1552
      %v1657 = vunpack.c.l.b16 %v1556
      %v1658 = vunpack.c.l.b16 %v1559
      %v1659 = vunpack.c.l.b16 %v1563
      %v1660 = vunpack.c.l.b16 %v1566
      %v1661 = vunpack.c.l.b16 %v1570
      %v1662 = vunpack.c.l.b16 %v1573
      %v1663 = vunpack.c.l.b16 %v1577
      %v1664 = vunpack.c.l.b16 %v1580
      %v1665 = vunpack.c.l.b16 %v1584
      %v1666 = vunpack.c.l.b16 %v1587
      %v1667 = vunpack.c.l.b16 %v1591
      %v1668 = vunpack.c.l.b16 %v1594
      %v1669 = vunpack.c.l.b16 %v1598
      %v1670 = vunpack.c.l.b16 %v1601
      %v1671 = vunpack.c.l.b16 %v1605
      %v1672 = vunpack.c.l.b16 %v1608
      %v1673 = vpack.c.b16 %v1642, %v1641
      %v1674 = vpack.c.b16 %v1644, %v1643
      %v1675 = vpack.c.b16 %v1646, %v1645
      %v1676 = vpack.c.b16 %v1648, %v1647
      %v1677 = vpack.c.b16 %v1650, %v1649
      %v1678 = vpack.c.b16 %v1652, %v1651
      %v1679 = vpack.c.b16 %v1654, %v1653
      %v1680 = vpack.c.b16 %v1656, %v1655
      %v1681 = vpack.c.b16 %v1658, %v1657
      %v1682 = vpack.c.b16 %v1660, %v1659
      %v1683 = vpack.c.b16 %v1662, %v1661
      %v1684 = vpack.c.b16 %v1664, %v1663
      %v1685 = vpack.c.b16 %v1666, %v1665
      %v1686 = vpack.c.b16 %v1668, %v1667
      %v1687 = vpack.c.b16 %v1670, %v1669
      %v1688 = vpack.c.b16 %v1672, %v1671
      %v1721 = vunpack.c.l.b16 %v1609
      %v1722 = vunpack.c.l.b16 %v1610
      %v1723 = vunpack.c.l.b16 %v1611
      %v1724 = vunpack.c.l.b16 %v1612
      %v1725 = vunpack.c.l.b16 %v1613
      %v1726 = vunpack.c.l.b16 %v1614
      %v1727 = vunpack.c.l.b16 %v1615
      %v1728 = vunpack.c.l.b16 %v1616
      %v1729 = vunpack.c.l.b16 %v1617
      %v1730 = vunpack.c.l.b16 %v1618
      %v1731 = vunpack.c.l.b16 %v1619
      %v1732 = vunpack.c.l.b16 %v1620
      %v1733 = vunpack.c.l.b16 %v1621
      %v1734 = vunpack.c.l.b16 %v1622
      %v1735 = vunpack.c.l.b16 %v1623
      %v1736 = vunpack.c.l.b16 %v1624
      %v1737 = vunpack.c.l.b16 %v1625
      %v1738 = vunpack.c.l.b16 %v1626
      %v1739 = vunpack.c.l.b16 %v1627
      %v1740 = vunpack.c.l.b16 %v1628
      %v1741 = vunpack.c.l.b16 %v1629
      %v1742 = vunpack.c.l.b16 %v1630
      %v1743 = vunpack.c.l.b16 %v1631
      %v1744 = vunpack.c.l.b16 %v1632
      %v1745 = vunpack.c.l.b16 %v1633
      %v1746 = vunpack.c.l.b16 %v1634
      %v1747 = vunpack.c.l.b16 %v1635
      %v1748 = vunpack.c.l.b16 %v1636
      %v1749 = vunpack.c.l.b16 %v1637
      %v1750 = vunpack.c.l.b16 %v1638
      %v1751 = vunpack.c.l.b16 %v1639
      %v1752 = vunpack.c.l.b16 %v1640
      %v1753 = vpack.c.b16 %v1722, %v1721
      %v1754 = vpack.c.b16 %v1724, %v1723
      %v1755 = vpack.c.b16 %v1726, %v1725
      %v1756 = vpack.c.b16 %v1728, %v1727
      %v1757 = vpack.c.b16 %v1730, %v1729
      %v1758 = vpack.c.b16 %v1732, %v1731
      %v1759 = vpack.c.b16 %v1734, %v1733
      %v1760 = vpack.c.b16 %v1736, %v1735
      %v1761 = vpack.c.b16 %v1738, %v1737
      %v1762 = vpack.c.b16 %v1740, %v1739
      %v1763 = vpack.c.b16 %v1742, %v1741
      %v1764 = vpack.c.b16 %v1744, %v1743
      %v1765 = vpack.c.b16 %v1746, %v1745
      %v1766 = vpack.c.b16 %v1748, %v1747
      %v1767 = vpack.c.b16 %v1750, %v1749
      %v1768 = vpack.c.b16 %v1752, %v1751
      %1769 = vrot.lane.b32.xlu0 %v1753, 4
      %v1770 = vpop.permute.xlu0 %1769
      %1771 = vrot.lane.b32.xlu0 %v1754, 4
      %v1772 = vpop.permute.xlu0 %1771
      %1773 = vrot.lane.b32.xlu0 %v1755, 4
      %v1774 = vpop.permute.xlu0 %1773
      %1775 = vrot.lane.b32.xlu0 %v1756, 4
      %v1776 = vpop.permute.xlu0 %1775
      %1777 = vrot.lane.b32.xlu0 %v1757, 4
      %v1778 = vpop.permute.xlu0 %1777
      %1779 = vrot.lane.b32.xlu0 %v1758, 4
      %v1780 = vpop.permute.xlu0 %1779
      %1781 = vrot.lane.b32.xlu0 %v1759, 4
      %v1782 = vpop.permute.xlu0 %1781
      %1783 = vrot.lane.b32.xlu0 %v1760, 4
      %v1784 = vpop.permute.xlu0 %1783
      %1785 = vrot.lane.b32.xlu0 %v1761, 4
      %v1786 = vpop.permute.xlu0 %1785
      %1787 = vrot.lane.b32.xlu0 %v1762, 4
      %v1788 = vpop.permute.xlu0 %1787
      %1789 = vrot.lane.b32.xlu0 %v1763, 4
      %v1790 = vpop.permute.xlu0 %1789
      %1791 = vrot.lane.b32.xlu0 %v1764, 4
      %v1792 = vpop.permute.xlu0 %1791
      %1793 = vrot.lane.b32.xlu0 %v1765, 4
      %v1794 = vpop.permute.xlu0 %1793
      %1795 = vrot.lane.b32.xlu0 %v1766, 4
      %v1796 = vpop.permute.xlu0 %1795
      %1797 = vrot.lane.b32.xlu0 %v1767, 4
      %v1798 = vpop.permute.xlu0 %1797
      %1799 = vrot.lane.b32.xlu0 %v1768, 4
      %v1800 = vpop.permute.xlu0 %1799
      %v1803 = vsel %vm1316, %v1673, %v1770
      %v1806 = vsel %vm1316, %v1674, %v1772
      %v1809 = vsel %vm1316, %v1675, %v1774
      %v1812 = vsel %vm1316, %v1676, %v1776
      %v1815 = vsel %vm1316, %v1677, %v1778
      %v1818 = vsel %vm1316, %v1678, %v1780
      %v1821 = vsel %vm1316, %v1679, %v1782
      %v1824 = vsel %vm1316, %v1680, %v1784
      %v1827 = vsel %vm1316, %v1681, %v1786
      %v1830 = vsel %vm1316, %v1682, %v1788
      %v1833 = vsel %vm1316, %v1683, %v1790
      %v1836 = vsel %vm1316, %v1684, %v1792
      %v1839 = vsel %vm1316, %v1685, %v1794
      %v1842 = vsel %vm1316, %v1686, %v1796
      %v1845 = vsel %vm1316, %v1687, %v1798
      %v1848 = vsel %vm1316, %v1688, %v1800
      %1865 = vrot.lane.b32.xlu0 %v1803, 8
      %v1866 = vpop.permute.xlu0 %1865
      %1867 = vrot.lane.b32.xlu0 %v1806, 8
      %v1868 = vpop.permute.xlu0 %1867
      %1869 = vrot.lane.b32.xlu0 %v1809, 8
      %v1870 = vpop.permute.xlu0 %1869
      %1871 = vrot.lane.b32.xlu0 %v1812, 8
      %v1872 = vpop.permute.xlu0 %1871
      %1873 = vrot.lane.b32.xlu0 %v1815, 8
      %v1874 = vpop.permute.xlu0 %1873
      %1875 = vrot.lane.b32.xlu0 %v1818, 8
      %v1876 = vpop.permute.xlu0 %1875
      %1877 = vrot.lane.b32.xlu0 %v1821, 8
      %v1878 = vpop.permute.xlu0 %1877
      %1879 = vrot.lane.b32.xlu0 %v1824, 8
      %v1880 = vpop.permute.xlu0 %1879
      %1881 = vrot.lane.b32.xlu0 %v1827, 8
      %v1882 = vpop.permute.xlu0 %1881
      %1883 = vrot.lane.b32.xlu0 %v1830, 8
      %v1884 = vpop.permute.xlu0 %1883
      %1885 = vrot.lane.b32.xlu0 %v1833, 8
      %v1886 = vpop.permute.xlu0 %1885
      %1887 = vrot.lane.b32.xlu0 %v1836, 8
      %v1888 = vpop.permute.xlu0 %1887
      %1889 = vrot.lane.b32.xlu0 %v1839, 8
      %v1890 = vpop.permute.xlu0 %1889
      %1891 = vrot.lane.b32.xlu0 %v1842, 8
      %v1892 = vpop.permute.xlu0 %1891
      %1893 = vrot.lane.b32.xlu0 %v1845, 8
      %v1894 = vpop.permute.xlu0 %1893
      %1895 = vrot.lane.b32.xlu0 %v1848, 8
      %v1896 = vpop.permute.xlu0 %1895
      %vm1913 = vcmask 130112
      %1914 = vst.msk [vmem:[#allocation3] sm:$0xff] %vm1913, %v1866
      %1915 = vst.msk [vmem:[#allocation3 + $0x8] sm:$0xff] %vm1913, %v1868
      %1916 = vst.msk [vmem:[#allocation3 + $0x10] sm:$0xff] %vm1913, %v1870
      %1917 = vst.msk [vmem:[#allocation3 + $0x18] sm:$0xff] %vm1913, %v1872
      %1918 = vst.msk [vmem:[#allocation3 + $0x20] sm:$0xff] %vm1913, %v1874
      %1919 = vst.msk [vmem:[#allocation3 + $0x28] sm:$0xff] %vm1913, %v1876
      %1920 = vst.msk [vmem:[#allocation3 + $0x30] sm:$0xff] %vm1913, %v1878
      %1921 = vst.msk [vmem:[#allocation3 + $0x38] sm:$0xff] %vm1913, %v1880
      %1922 = vst.msk [vmem:[#allocation3 + $0x40] sm:$0xff] %vm1913, %v1882
      %1923 = vst.msk [vmem:[#allocation3 + $0x48] sm:$0xff] %vm1913, %v1884
      %1924 = vst.msk [vmem:[#allocation3 + $0x50] sm:$0xff] %vm1913, %v1886
      %1925 = vst.msk [vmem:[#allocation3 + $0x58] sm:$0xff] %vm1913, %v1888
      %1926 = vst.msk [vmem:[#allocation3 + $0x60] sm:$0xff] %vm1913, %v1890
      %1927 = vst.msk [vmem:[#allocation3 + $0x68] sm:$0xff] %vm1913, %v1892
      %1928 = vst.msk [vmem:[#allocation3 + $0x70] sm:$0xff] %vm1913, %v1894
      %1929 = vst.msk [vmem:[#allocation3 + $0x78] sm:$0xff] %vm1913, %v1896
      %v1930 = vld [vmem:[%s672] sm:$0xf]
      %v1931 = vld [vmem:[%s672 + $0x4] sm:$0xf]
      %v1932 = vld [vmem:[%s672 + $0x8] sm:$0x1]
      %v1933 = vld [vmem:[%s672 + $0xc] sm:$0xf]
      %v1934 = vld [vmem:[%s672 + $0x10] sm:$0xf]
      %v1935 = vld [vmem:[%s672 + $0x14] sm:$0x1]
      %v1936 = vld [vmem:[%s672 + $0x18] sm:$0xf]
      %v1937 = vld [vmem:[%s672 + $0x1c] sm:$0xf]
      %v1938 = vld [vmem:[%s672 + $0x20] sm:$0x1]
      %v1939 = vld [vmem:[%s672 + $0x24] sm:$0xf]
      %v1940 = vld [vmem:[%s672 + $0x28] sm:$0xf]
      %v1941 = vld [vmem:[%s672 + $0x2c] sm:$0x1]
      %v1942 = vld [vmem:[%s672 + $0x30] sm:$0xf]
      %v1943 = vld [vmem:[%s672 + $0x34] sm:$0xf]
      %v1944 = vld [vmem:[%s672 + $0x38] sm:$0x1]
      %v1945 = vld [vmem:[%s672 + $0x3c] sm:$0xf]
      %v1946 = vld [vmem:[%s672 + $0x40] sm:$0xf]
      %v1947 = vld [vmem:[%s672 + $0x44] sm:$0x1]
      %v1948 = vld [vmem:[%s672 + $0x48] sm:$0xf]
      %v1949 = vld [vmem:[%s672 + $0x4c] sm:$0xf]
      %v1950 = vld [vmem:[%s672 + $0x50] sm:$0x1]
      %v1951 = vld [vmem:[%s672 + $0x54] sm:$0xf]
      %v1952 = vld [vmem:[%s672 + $0x58] sm:$0xf]
      %v1953 = vld [vmem:[%s672 + $0x5c] sm:$0x1]
      %v1954 = vld [vmem:[%s672 + $0x60] sm:$0xf]
      %v1955 = vld [vmem:[%s672 + $0x64] sm:$0xf]
      %v1956 = vld [vmem:[%s672 + $0x68] sm:$0x1]
      %v1957 = vld [vmem:[%s672 + $0x6c] sm:$0xf]
      %v1958 = vld [vmem:[%s672 + $0x70] sm:$0xf]
      %v1959 = vld [vmem:[%s672 + $0x74] sm:$0x1]
      %v1960 = vld [vmem:[%s672 + $0x78] sm:$0xf]
      %v1961 = vld [vmem:[%s672 + $0x7c] sm:$0xf]
      %v1962 = vld [vmem:[%s672 + $0x80] sm:$0x1]
      %v1963 = vld [vmem:[%s672 + $0x84] sm:$0xf]
      %v1964 = vld [vmem:[%s672 + $0x88] sm:$0xf]
      %v1965 = vld [vmem:[%s672 + $0x8c] sm:$0x1]
      %v1966 = vld [vmem:[%s672 + $0x90] sm:$0xf]
      %v1967 = vld [vmem:[%s672 + $0x94] sm:$0xf]
      %v1968 = vld [vmem:[%s672 + $0x98] sm:$0x1]
      %v1969 = vld [vmem:[%s672 + $0x9c] sm:$0xf]
      %v1970 = vld [vmem:[%s672 + $0xa0] sm:$0xf]
      %v1971 = vld [vmem:[%s672 + $0xa4] sm:$0x1]
      %v1972 = vld [vmem:[%s672 + $0xa8] sm:$0xf]
      %v1973 = vld [vmem:[%s672 + $0xac] sm:$0xf]
      %v1974 = vld [vmem:[%s672 + $0xb0] sm:$0x1]
      %v1975 = vld [vmem:[%s672 + $0xb4] sm:$0xf]
      %v1976 = vld [vmem:[%s672 + $0xb8] sm:$0xf]
      %v1977 = vld [vmem:[%s672 + $0xbc] sm:$0x1]
      %v1979 = vshrl.u32 %v1930, 16
      %v1981 = vrot.slane %v1979, 4
      %v1982 = vshll.u32 %v1930, 16
      %v1984 = vrot.slane %v1982, 5
      %v1985 = vor.u32 %v1981, %v1984
      %v1986 = vrot.slane %v1985, 4
      %v1988 = vshll.u32 %v1931, 16
      %v1990 = vrot.slane %v1988, 5
      %v1991 = vsel %vm771, %v1986, %v1990
      %v1992 = vshrl.u32 %v1931, 16
      %v1994 = vrot.slane %v1992, 4
      %v1995 = vor.u32 %v1994, %v1990
      %v1996 = vrot.slane %v1995, 4
      %v1998 = vshll.u32 %v1932, 16
      %v2000 = vrot.slane %v1998, 5
      %v2001 = vsel %vm771, %v1996, %v2000
      %v2003 = vshrl.u32 %v1933, 16
      %v2005 = vrot.slane %v2003, 4
      %v2006 = vshll.u32 %v1933, 16
      %v2008 = vrot.slane %v2006, 5
      %v2009 = vor.u32 %v2005, %v2008
      %v2010 = vrot.slane %v2009, 4
      %v2012 = vshll.u32 %v1934, 16
      %v2014 = vrot.slane %v2012, 5
      %v2015 = vsel %vm771, %v2010, %v2014
      %v2016 = vshrl.u32 %v1934, 16
      %v2018 = vrot.slane %v2016, 4
      %v2019 = vor.u32 %v2018, %v2014
      %v2020 = vrot.slane %v2019, 4
      %v2022 = vshll.u32 %v1935, 16
      %v2024 = vrot.slane %v2022, 5
      %v2025 = vsel %vm771, %v2020, %v2024
      %v2027 = vshrl.u32 %v1936, 16
      %v2029 = vrot.slane %v2027, 4
      %v2030 = vshll.u32 %v1936, 16
      %v2032 = vrot.slane %v2030, 5
      %v2033 = vor.u32 %v2029, %v2032
      %v2034 = vrot.slane %v2033, 4
      %v2036 = vshll.u32 %v1937, 16
      %v2038 = vrot.slane %v2036, 5
      %v2039 = vsel %vm771, %v2034, %v2038
      %v2040 = vshrl.u32 %v1937, 16
      %v2042 = vrot.slane %v2040, 4
      %v2043 = vor.u32 %v2042, %v2038
      %v2044 = vrot.slane %v2043, 4
      %v2046 = vshll.u32 %v1938, 16
      %v2048 = vrot.slane %v2046, 5
      %v2049 = vsel %vm771, %v2044, %v2048
      %v2051 = vshrl.u32 %v1939, 16
      %v2053 = vrot.slane %v2051, 4
      %v2054 = vshll.u32 %v1939, 16
      %v2056 = vrot.slane %v2054, 5
      %v2057 = vor.u32 %v2053, %v2056
      %v2058 = vrot.slane %v2057, 4
      %v2060 = vshll.u32 %v1940, 16
      %v2062 = vrot.slane %v2060, 5
      %v2063 = vsel %vm771, %v2058, %v2062
      %v2064 = vshrl.u32 %v1940, 16
      %v2066 = vrot.slane %v2064, 4
      %v2067 = vor.u32 %v2066, %v2062
      %v2068 = vrot.slane %v2067, 4
      %v2070 = vshll.u32 %v1941, 16
      %v2072 = vrot.slane %v2070, 5
      %v2073 = vsel %vm771, %v2068, %v2072
      %v2075 = vshrl.u32 %v1942, 16
      %v2077 = vrot.slane %v2075, 4
      %v2078 = vshll.u32 %v1942, 16
      %v2080 = vrot.slane %v2078, 5
      %v2081 = vor.u32 %v2077, %v2080
      %v2082 = vrot.slane %v2081, 4
      %v2084 = vshll.u32 %v1943, 16
      %v2086 = vrot.slane %v2084, 5
      %v2087 = vsel %vm771, %v2082, %v2086
      %v2088 = vshrl.u32 %v1943, 16
      %v2090 = vrot.slane %v2088, 4
      %v2091 = vor.u32 %v2090, %v2086
      %v2092 = vrot.slane %v2091, 4
      %v2094 = vshll.u32 %v1944, 16
      %v2096 = vrot.slane %v2094, 5
      %v2097 = vsel %vm771, %v2092, %v2096
      %v2099 = vshrl.u32 %v1945, 16
      %v2101 = vrot.slane %v2099, 4
      %v2102 = vshll.u32 %v1945, 16
      %v2104 = vrot.slane %v2102, 5
      %v2105 = vor.u32 %v2101, %v2104
      %v2106 = vrot.slane %v2105, 4
      %v2108 = vshll.u32 %v1946, 16
      %v2110 = vrot.slane %v2108, 5
      %v2111 = vsel %vm771, %v2106, %v2110
      %v2112 = vshrl.u32 %v1946, 16
      %v2114 = vrot.slane %v2112, 4
      %v2115 = vor.u32 %v2114, %v2110
      %v2116 = vrot.slane %v2115, 4
      %v2118 = vshll.u32 %v1947, 16
      %v2120 = vrot.slane %v2118, 5
      %v2121 = vsel %vm771, %v2116, %v2120
      %v2123 = vshrl.u32 %v1948, 16
      %v2125 = vrot.slane %v2123, 4
      %v2126 = vshll.u32 %v1948, 16
      %v2128 = vrot.slane %v2126, 5
      %v2129 = vor.u32 %v2125, %v2128
      %v2130 = vrot.slane %v2129, 4
      %v2132 = vshll.u32 %v1949, 16
      %v2134 = vrot.slane %v2132, 5
      %v2135 = vsel %vm771, %v2130, %v2134
      %v2136 = vshrl.u32 %v1949, 16
      %v2138 = vrot.slane %v2136, 4
      %v2139 = vor.u32 %v2138, %v2134
      %v2140 = vrot.slane %v2139, 4
      %v2142 = vshll.u32 %v1950, 16
      %v2144 = vrot.slane %v2142, 5
      %v2145 = vsel %vm771, %v2140, %v2144
      %v2147 = vshrl.u32 %v1951, 16
      %v2149 = vrot.slane %v2147, 4
      %v2150 = vshll.u32 %v1951, 16
      %v2152 = vrot.slane %v2150, 5
      %v2153 = vor.u32 %v2149, %v2152
      %v2154 = vrot.slane %v2153, 4
      %v2156 = vshll.u32 %v1952, 16
      %v2158 = vrot.slane %v2156, 5
      %v2159 = vsel %vm771, %v2154, %v2158
      %v2160 = vshrl.u32 %v1952, 16
      %v2162 = vrot.slane %v2160, 4
      %v2163 = vor.u32 %v2162, %v2158
      %v2164 = vrot.slane %v2163, 4
      %v2166 = vshll.u32 %v1953, 16
      %v2168 = vrot.slane %v2166, 5
      %v2169 = vsel %vm771, %v2164, %v2168
      %v2171 = vshrl.u32 %v1954, 16
      %v2173 = vrot.slane %v2171, 4
      %v2174 = vshll.u32 %v1954, 16
      %v2176 = vrot.slane %v2174, 5
      %v2177 = vor.u32 %v2173, %v2176
      %v2178 = vrot.slane %v2177, 4
      %v2180 = vshll.u32 %v1955, 16
      %v2182 = vrot.slane %v2180, 5
      %v2183 = vsel %vm771, %v2178, %v2182
      %v2184 = vshrl.u32 %v1955, 16
      %v2186 = vrot.slane %v2184, 4
      %v2187 = vor.u32 %v2186, %v2182
      %v2188 = vrot.slane %v2187, 4
      %v2190 = vshll.u32 %v1956, 16
      %v2192 = vrot.slane %v2190, 5
      %v2193 = vsel %vm771, %v2188, %v2192
      %v2195 = vshrl.u32 %v1957, 16
      %v2197 = vrot.slane %v2195, 4
      %v2198 = vshll.u32 %v1957, 16
      %v2200 = vrot.slane %v2198, 5
      %v2201 = vor.u32 %v2197, %v2200
      %v2202 = vrot.slane %v2201, 4
      %v2204 = vshll.u32 %v1958, 16
      %v2206 = vrot.slane %v2204, 5
      %v2207 = vsel %vm771, %v2202, %v2206
      %v2208 = vshrl.u32 %v1958, 16
      %v2210 = vrot.slane %v2208, 4
      %v2211 = vor.u32 %v2210, %v2206
      %v2212 = vrot.slane %v2211, 4
      %v2214 = vshll.u32 %v1959, 16
      %v2216 = vrot.slane %v2214, 5
      %v2217 = vsel %vm771, %v2212, %v2216
      %v2219 = vshrl.u32 %v1960, 16
      %v2221 = vrot.slane %v2219, 4
      %v2222 = vshll.u32 %v1960, 16
      %v2224 = vrot.slane %v2222, 5
      %v2225 = vor.u32 %v2221, %v2224
      %v2226 = vrot.slane %v2225, 4
      %v2228 = vshll.u32 %v1961, 16
      %v2230 = vrot.slane %v2228, 5
      %v2231 = vsel %vm771, %v2226, %v2230
      %v2232 = vshrl.u32 %v1961, 16
      %v2234 = vrot.slane %v2232, 4
      %v2235 = vor.u32 %v2234, %v2230
      %v2236 = vrot.slane %v2235, 4
      %v2238 = vshll.u32 %v1962, 16
      %v2240 = vrot.slane %v2238, 5
      %v2241 = vsel %vm771, %v2236, %v2240
      %v2243 = vshrl.u32 %v1963, 16
      %v2245 = vrot.slane %v2243, 4
      %v2246 = vshll.u32 %v1963, 16
      %v2248 = vrot.slane %v2246, 5
      %v2249 = vor.u32 %v2245, %v2248
      %v2250 = vrot.slane %v2249, 4
      %v2252 = vshll.u32 %v1964, 16
      %v2254 = vrot.slane %v2252, 5
      %v2255 = vsel %vm771, %v2250, %v2254
      %v2256 = vshrl.u32 %v1964, 16
      %v2258 = vrot.slane %v2256, 4
      %v2259 = vor.u32 %v2258, %v2254
      %v2260 = vrot.slane %v2259, 4
      %v2262 = vshll.u32 %v1965, 16
      %v2264 = vrot.slane %v2262, 5
      %v2265 = vsel %vm771, %v2260, %v2264
      %v2267 = vshrl.u32 %v1966, 16
      %v2269 = vrot.slane %v2267, 4
      %v2270 = vshll.u32 %v1966, 16
      %v2272 = vrot.slane %v2270, 5
      %v2273 = vor.u32 %v2269, %v2272
      %v2274 = vrot.slane %v2273, 4
      %v2276 = vshll.u32 %v1967, 16
      %v2278 = vrot.slane %v2276, 5
      %v2279 = vsel %vm771, %v2274, %v2278
      %v2280 = vshrl.u32 %v1967, 16
      %v2282 = vrot.slane %v2280, 4
      %v2283 = vor.u32 %v2282, %v2278
      %v2284 = vrot.slane %v2283, 4
      %v2286 = vshll.u32 %v1968, 16
      %v2288 = vrot.slane %v2286, 5
      %v2289 = vsel %vm771, %v2284, %v2288
      %v2291 = vshrl.u32 %v1969, 16
      %v2293 = vrot.slane %v2291, 4
      %v2294 = vshll.u32 %v1969, 16
      %v2296 = vrot.slane %v2294, 5
      %v2297 = vor.u32 %v2293, %v2296
      %v2298 = vrot.slane %v2297, 4
      %v2300 = vshll.u32 %v1970, 16
      %v2302 = vrot.slane %v2300, 5
      %v2303 = vsel %vm771, %v2298, %v2302
      %v2304 = vshrl.u32 %v1970, 16
      %v2306 = vrot.slane %v2304, 4
      %v2307 = vor.u32 %v2306, %v2302
      %v2308 = vrot.slane %v2307, 4
      %v2310 = vshll.u32 %v1971, 16
      %v2312 = vrot.slane %v2310, 5
      %v2313 = vsel %vm771, %v2308, %v2312
      %v2315 = vshrl.u32 %v1972, 16
      %v2317 = vrot.slane %v2315, 4
      %v2318 = vshll.u32 %v1972, 16
      %v2320 = vrot.slane %v2318, 5
      %v2321 = vor.u32 %v2317, %v2320
      %v2322 = vrot.slane %v2321, 4
      %v2324 = vshll.u32 %v1973, 16
      %v2326 = vrot.slane %v2324, 5
      %v2327 = vsel %vm771, %v2322, %v2326
      %v2328 = vshrl.u32 %v1973, 16
      %v2330 = vrot.slane %v2328, 4
      %v2331 = vor.u32 %v2330, %v2326
      %v2332 = vrot.slane %v2331, 4
      %v2334 = vshll.u32 %v1974, 16
      %v2336 = vrot.slane %v2334, 5
      %v2337 = vsel %vm771, %v2332, %v2336
      %v2339 = vshrl.u32 %v1975, 16
      %v2341 = vrot.slane %v2339, 4
      %v2342 = vshll.u32 %v1975, 16
      %v2344 = vrot.slane %v2342, 5
      %v2345 = vor.u32 %v2341, %v2344
      %v2346 = vrot.slane %v2345, 4
      %v2348 = vshll.u32 %v1976, 16
      %v2350 = vrot.slane %v2348, 5
      %v2351 = vsel %vm771, %v2346, %v2350
      %v2352 = vshrl.u32 %v1976, 16
      %v2354 = vrot.slane %v2352, 4
      %v2355 = vor.u32 %v2354, %v2350
      %v2356 = vrot.slane %v2355, 4
      %v2358 = vshll.u32 %v1977, 16
      %v2360 = vrot.slane %v2358, 5
      %v2361 = vsel %vm771, %v2356, %v2360
      %v2362 = vld [vmem:[%s672] sm:$0xe]
      %v2363 = vld [vmem:[%s672 + $0xc] sm:$0xe]
      %v2364 = vld [vmem:[%s672 + $0x18] sm:$0xe]
      %v2365 = vld [vmem:[%s672 + $0x24] sm:$0xe]
      %v2366 = vld [vmem:[%s672 + $0x30] sm:$0xe]
      %v2367 = vld [vmem:[%s672 + $0x3c] sm:$0xe]
      %v2368 = vld [vmem:[%s672 + $0x48] sm:$0xe]
      %v2369 = vld [vmem:[%s672 + $0x54] sm:$0xe]
      %v2370 = vld [vmem:[%s672 + $0x60] sm:$0xe]
      %v2371 = vld [vmem:[%s672 + $0x6c] sm:$0xe]
      %v2372 = vld [vmem:[%s672 + $0x78] sm:$0xe]
      %v2373 = vld [vmem:[%s672 + $0x84] sm:$0xe]
      %v2374 = vld [vmem:[%s672 + $0x90] sm:$0xe]
      %v2375 = vld [vmem:[%s672 + $0x9c] sm:$0xe]
      %v2376 = vld [vmem:[%s672 + $0xa8] sm:$0xe]
      %v2377 = vld [vmem:[%s672 + $0xb4] sm:$0xe]
      %v2426 = vrot.slane %v2362, 5
      %v2427 = vrot.slane %v2426, 4
      %v2428 = vrot.slane %v1931, 5
      %v2429 = vsel %vm1496, %v2427, %v2428
      %v2430 = vrot.slane %v2428, 4
      %v2431 = vrot.slane %v1932, 5
      %v2432 = vsel %vm1496, %v2430, %v2431
      %v2433 = vrot.slane %v2363, 5
      %v2434 = vrot.slane %v2433, 4
      %v2435 = vrot.slane %v1934, 5
      %v2436 = vsel %vm1496, %v2434, %v2435
      %v2437 = vrot.slane %v2435, 4
      %v2438 = vrot.slane %v1935, 5
      %v2439 = vsel %vm1496, %v2437, %v2438
      %v2440 = vrot.slane %v2364, 5
      %v2441 = vrot.slane %v2440, 4
      %v2442 = vrot.slane %v1937, 5
      %v2443 = vsel %vm1496, %v2441, %v2442
      %v2444 = vrot.slane %v2442, 4
      %v2445 = vrot.slane %v1938, 5
      %v2446 = vsel %vm1496, %v2444, %v2445
      %v2447 = vrot.slane %v2365, 5
      %v2448 = vrot.slane %v2447, 4
      %v2449 = vrot.slane %v1940, 5
      %v2450 = vsel %vm1496, %v2448, %v2449
      %v2451 = vrot.slane %v2449, 4
      %v2452 = vrot.slane %v1941, 5
      %v2453 = vsel %vm1496, %v2451, %v2452
      %v2454 = vrot.slane %v2366, 5
      %v2455 = vrot.slane %v2454, 4
      %v2456 = vrot.slane %v1943, 5
      %v2457 = vsel %vm1496, %v2455, %v2456
      %v2458 = vrot.slane %v2456, 4
      %v2459 = vrot.slane %v1944, 5
      %v2460 = vsel %vm1496, %v2458, %v2459
      %v2461 = vrot.slane %v2367, 5
      %v2462 = vrot.slane %v2461, 4
      %v2463 = vrot.slane %v1946, 5
      %v2464 = vsel %vm1496, %v2462, %v2463
      %v2465 = vrot.slane %v2463, 4
      %v2466 = vrot.slane %v1947, 5
      %v2467 = vsel %vm1496, %v2465, %v2466
      %v2468 = vrot.slane %v2368, 5
      %v2469 = vrot.slane %v2468, 4
      %v2470 = vrot.slane %v1949, 5
      %v2471 = vsel %vm1496, %v2469, %v2470
      %v2472 = vrot.slane %v2470, 4
      %v2473 = vrot.slane %v1950, 5
      %v2474 = vsel %vm1496, %v2472, %v2473
      %v2475 = vrot.slane %v2369, 5
      %v2476 = vrot.slane %v2475, 4
      %v2477 = vrot.slane %v1952, 5
      %v2478 = vsel %vm1496, %v2476, %v2477
      %v2479 = vrot.slane %v2477, 4
      %v2480 = vrot.slane %v1953, 5
      %v2481 = vsel %vm1496, %v2479, %v2480
      %v2482 = vrot.slane %v2370, 5
      %v2483 = vrot.slane %v2482, 4
      %v2484 = vrot.slane %v1955, 5
      %v2485 = vsel %vm1496, %v2483, %v2484
      %v2486 = vrot.slane %v2484, 4
      %v2487 = vrot.slane %v1956, 5
      %v2488 = vsel %vm1496, %v2486, %v2487
      %v2489 = vrot.slane %v2371, 5
      %v2490 = vrot.slane %v2489, 4
      %v2491 = vrot.slane %v1958, 5
      %v2492 = vsel %vm1496, %v2490, %v2491
      %v2493 = vrot.slane %v2491, 4
      %v2494 = vrot.slane %v1959, 5
      %v2495 = vsel %vm1496, %v2493, %v2494
      %v2496 = vrot.slane %v2372, 5
      %v2497 = vrot.slane %v2496, 4
      %v2498 = vrot.slane %v1961, 5
      %v2499 = vsel %vm1496, %v2497, %v2498
      %v2500 = vrot.slane %v2498, 4
      %v2501 = vrot.slane %v1962, 5
      %v2502 = vsel %vm1496, %v2500, %v2501
      %v2503 = vrot.slane %v2373, 5
      %v2504 = vrot.slane %v2503, 4
      %v2505 = vrot.slane %v1964, 5
      %v2506 = vsel %vm1496, %v2504, %v2505
      %v2507 = vrot.slane %v2505, 4
      %v2508 = vrot.slane %v1965, 5
      %v2509 = vsel %vm1496, %v2507, %v2508
      %v2510 = vrot.slane %v2374, 5
      %v2511 = vrot.slane %v2510, 4
      %v2512 = vrot.slane %v1967, 5
      %v2513 = vsel %vm1496, %v2511, %v2512
      %v2514 = vrot.slane %v2512, 4
      %v2515 = vrot.slane %v1968, 5
      %v2516 = vsel %vm1496, %v2514, %v2515
      %v2517 = vrot.slane %v2375, 5
      %v2518 = vrot.slane %v2517, 4
      %v2519 = vrot.slane %v1970, 5
      %v2520 = vsel %vm1496, %v2518, %v2519
      %v2521 = vrot.slane %v2519, 4
      %v2522 = vrot.slane %v1971, 5
      %v2523 = vsel %vm1496, %v2521, %v2522
      %v2524 = vrot.slane %v2376, 5
      %v2525 = vrot.slane %v2524, 4
      %v2526 = vrot.slane %v1973, 5
      %v2527 = vsel %vm1496, %v2525, %v2526
      %v2528 = vrot.slane %v2526, 4
      %v2529 = vrot.slane %v1974, 5
      %v2530 = vsel %vm1496, %v2528, %v2529
      %v2531 = vrot.slane %v2377, 5
      %v2532 = vrot.slane %v2531, 4
      %v2533 = vrot.slane %v1976, 5
      %v2534 = vsel %vm1496, %v2532, %v2533
      %v2535 = vrot.slane %v2533, 4
      %v2536 = vrot.slane %v1977, 5
      %v2537 = vsel %vm1496, %v2535, %v2536
      %v2538 = vunpack.c.l.b16 %v1991
      %v2539 = vunpack.c.l.b16 %v2001
      %v2540 = vunpack.c.l.b16 %v2015
      %v2541 = vunpack.c.l.b16 %v2025
      %v2542 = vunpack.c.l.b16 %v2039
      %v2543 = vunpack.c.l.b16 %v2049
      %v2544 = vunpack.c.l.b16 %v2063
      %v2545 = vunpack.c.l.b16 %v2073
      %v2546 = vunpack.c.l.b16 %v2087
      %v2547 = vunpack.c.l.b16 %v2097
      %v2548 = vunpack.c.l.b16 %v2111
      %v2549 = vunpack.c.l.b16 %v2121
      %v2550 = vunpack.c.l.b16 %v2135
      %v2551 = vunpack.c.l.b16 %v2145
      %v2552 = vunpack.c.l.b16 %v2159
      %v2553 = vunpack.c.l.b16 %v2169
      %v2554 = vunpack.c.l.b16 %v2183
      %v2555 = vunpack.c.l.b16 %v2193
      %v2556 = vunpack.c.l.b16 %v2207
      %v2557 = vunpack.c.l.b16 %v2217
      %v2558 = vunpack.c.l.b16 %v2231
      %v2559 = vunpack.c.l.b16 %v2241
      %v2560 = vunpack.c.l.b16 %v2255
      %v2561 = vunpack.c.l.b16 %v2265
      %v2562 = vunpack.c.l.b16 %v2279
      %v2563 = vunpack.c.l.b16 %v2289
      %v2564 = vunpack.c.l.b16 %v2303
      %v2565 = vunpack.c.l.b16 %v2313
      %v2566 = vunpack.c.l.b16 %v2327
      %v2567 = vunpack.c.l.b16 %v2337
      %v2568 = vunpack.c.l.b16 %v2351
      %v2569 = vunpack.c.l.b16 %v2361
      %v2570 = vpack.c.b16 %v2539, %v2538
      %v2571 = vpack.c.b16 %v2541, %v2540
      %v2572 = vpack.c.b16 %v2543, %v2542
      %v2573 = vpack.c.b16 %v2545, %v2544
      %v2574 = vpack.c.b16 %v2547, %v2546
      %v2575 = vpack.c.b16 %v2549, %v2548
      %v2576 = vpack.c.b16 %v2551, %v2550
      %v2577 = vpack.c.b16 %v2553, %v2552
      %v2578 = vpack.c.b16 %v2555, %v2554
      %v2579 = vpack.c.b16 %v2557, %v2556
      %v2580 = vpack.c.b16 %v2559, %v2558
      %v2581 = vpack.c.b16 %v2561, %v2560
      %v2582 = vpack.c.b16 %v2563, %v2562
      %v2583 = vpack.c.b16 %v2565, %v2564
      %v2584 = vpack.c.b16 %v2567, %v2566
      %v2585 = vpack.c.b16 %v2569, %v2568
      %v2586 = vunpack.c.l.b16 %v2429
      %v2587 = vunpack.c.l.b16 %v2432
      %v2588 = vunpack.c.l.b16 %v2436
      %v2589 = vunpack.c.l.b16 %v2439
      %v2590 = vunpack.c.l.b16 %v2443
      %v2591 = vunpack.c.l.b16 %v2446
      %v2592 = vunpack.c.l.b16 %v2450
      %v2593 = vunpack.c.l.b16 %v2453
      %v2594 = vunpack.c.l.b16 %v2457
      %v2595 = vunpack.c.l.b16 %v2460
      %v2596 = vunpack.c.l.b16 %v2464
      %v2597 = vunpack.c.l.b16 %v2467
      %v2598 = vunpack.c.l.b16 %v2471
      %v2599 = vunpack.c.l.b16 %v2474
      %v2600 = vunpack.c.l.b16 %v2478
      %v2601 = vunpack.c.l.b16 %v2481
      %v2602 = vunpack.c.l.b16 %v2485
      %v2603 = vunpack.c.l.b16 %v2488
      %v2604 = vunpack.c.l.b16 %v2492
      %v2605 = vunpack.c.l.b16 %v2495
      %v2606 = vunpack.c.l.b16 %v2499
      %v2607 = vunpack.c.l.b16 %v2502
      %v2608 = vunpack.c.l.b16 %v2506
      %v2609 = vunpack.c.l.b16 %v2509
      %v2610 = vunpack.c.l.b16 %v2513
      %v2611 = vunpack.c.l.b16 %v2516
      %v2612 = vunpack.c.l.b16 %v2520
      %v2613 = vunpack.c.l.b16 %v2523
      %v2614 = vunpack.c.l.b16 %v2527
      %v2615 = vunpack.c.l.b16 %v2530
      %v2616 = vunpack.c.l.b16 %v2534
      %v2617 = vunpack.c.l.b16 %v2537
      %v2618 = vpack.c.b16 %v2587, %v2586
      %v2619 = vpack.c.b16 %v2589, %v2588
      %v2620 = vpack.c.b16 %v2591, %v2590
      %v2621 = vpack.c.b16 %v2593, %v2592
      %v2622 = vpack.c.b16 %v2595, %v2594
      %v2623 = vpack.c.b16 %v2597, %v2596
      %v2624 = vpack.c.b16 %v2599, %v2598
      %v2625 = vpack.c.b16 %v2601, %v2600
      %v2626 = vpack.c.b16 %v2603, %v2602
      %v2627 = vpack.c.b16 %v2605, %v2604
      %v2628 = vpack.c.b16 %v2607, %v2606
      %v2629 = vpack.c.b16 %v2609, %v2608
      %v2630 = vpack.c.b16 %v2611, %v2610
      %v2631 = vpack.c.b16 %v2613, %v2612
      %v2632 = vpack.c.b16 %v2615, %v2614
      %v2633 = vpack.c.b16 %v2617, %v2616
      %2634 = vrot.lane.b32.xlu0 %v2618, 4
      %v2635 = vpop.permute.xlu0 %2634
      %2636 = vrot.lane.b32.xlu0 %v2619, 4
      %v2637 = vpop.permute.xlu0 %2636
      %2638 = vrot.lane.b32.xlu0 %v2620, 4
      %v2639 = vpop.permute.xlu0 %2638
      %2640 = vrot.lane.b32.xlu0 %v2621, 4
      %v2641 = vpop.permute.xlu0 %2640
      %2642 = vrot.lane.b32.xlu0 %v2622, 4
      %v2643 = vpop.permute.xlu0 %2642
      %2644 = vrot.lane.b32.xlu0 %v2623, 4
      %v2645 = vpop.permute.xlu0 %2644
      %2646 = vrot.lane.b32.xlu0 %v2624, 4
      %v2647 = vpop.permute.xlu0 %2646
      %2648 = vrot.lane.b32.xlu0 %v2625, 4
      %v2649 = vpop.permute.xlu0 %2648
      %2650 = vrot.lane.b32.xlu0 %v2626, 4
      %v2651 = vpop.permute.xlu0 %2650
      %2652 = vrot.lane.b32.xlu0 %v2627, 4
      %v2653 = vpop.permute.xlu0 %2652
      %2654 = vrot.lane.b32.xlu0 %v2628, 4
      %v2655 = vpop.permute.xlu0 %2654
      %2656 = vrot.lane.b32.xlu0 %v2629, 4
      %v2657 = vpop.permute.xlu0 %2656
      %2658 = vrot.lane.b32.xlu0 %v2630, 4
      %v2659 = vpop.permute.xlu0 %2658
      %2660 = vrot.lane.b32.xlu0 %v2631, 4
      %v2661 = vpop.permute.xlu0 %2660
      %2662 = vrot.lane.b32.xlu0 %v2632, 4
      %v2663 = vpop.permute.xlu0 %2662
      %2664 = vrot.lane.b32.xlu0 %v2633, 4
      %v2665 = vpop.permute.xlu0 %2664
      %v2668 = vsel %vm1316, %v2570, %v2635
      %v2671 = vsel %vm1316, %v2571, %v2637
      %v2674 = vsel %vm1316, %v2572, %v2639
      %v2677 = vsel %vm1316, %v2573, %v2641
      %v2680 = vsel %vm1316, %v2574, %v2643
      %v2683 = vsel %vm1316, %v2575, %v2645
      %v2686 = vsel %vm1316, %v2576, %v2647
      %v2689 = vsel %vm1316, %v2577, %v2649
      %v2692 = vsel %vm1316, %v2578, %v2651
      %v2695 = vsel %vm1316, %v2579, %v2653
      %v2698 = vsel %vm1316, %v2580, %v2655
      %v2701 = vsel %vm1316, %v2581, %v2657
      %v2704 = vsel %vm1316, %v2582, %v2659
      %v2707 = vsel %vm1316, %v2583, %v2661
      %v2710 = vsel %vm1316, %v2584, %v2663
      %v2713 = vsel %vm1316, %v2585, %v2665
      %2730 = vrot.lane.b32.xlu0 %v2668, 16
      %v2731 = vpop.permute.xlu0 %2730
      %2732 = vrot.lane.b32.xlu0 %v2671, 16
      %v2733 = vpop.permute.xlu0 %2732
      %2734 = vrot.lane.b32.xlu0 %v2674, 16
      %v2735 = vpop.permute.xlu0 %2734
      %2736 = vrot.lane.b32.xlu0 %v2677, 16
      %v2737 = vpop.permute.xlu0 %2736
      %2738 = vrot.lane.b32.xlu0 %v2680, 16
      %v2739 = vpop.permute.xlu0 %2738
      %2740 = vrot.lane.b32.xlu0 %v2683, 16
      %v2741 = vpop.permute.xlu0 %2740
      %2742 = vrot.lane.b32.xlu0 %v2686, 16
      %v2743 = vpop.permute.xlu0 %2742
      %2744 = vrot.lane.b32.xlu0 %v2689, 16
      %v2745 = vpop.permute.xlu0 %2744
      %2746 = vrot.lane.b32.xlu0 %v2692, 16
      %v2747 = vpop.permute.xlu0 %2746
      %2748 = vrot.lane.b32.xlu0 %v2695, 16
      %v2749 = vpop.permute.xlu0 %2748
      %2750 = vrot.lane.b32.xlu0 %v2698, 16
      %v2751 = vpop.permute.xlu0 %2750
      %2752 = vrot.lane.b32.xlu0 %v2701, 16
      %v2753 = vpop.permute.xlu0 %2752
      %2754 = vrot.lane.b32.xlu0 %v2704, 16
      %v2755 = vpop.permute.xlu0 %2754
      %2756 = vrot.lane.b32.xlu0 %v2707, 16
      %v2757 = vpop.permute.xlu0 %2756
      %2758 = vrot.lane.b32.xlu0 %v2710, 16
      %v2759 = vpop.permute.xlu0 %2758
      %2760 = vrot.lane.b32.xlu0 %v2713, 16
      %v2761 = vpop.permute.xlu0 %2760
      %vm2778 = vcmask 195712
      %2779 = vst.msk [vmem:[#allocation3] sm:$0xff] %vm2778, %v2731
      %2780 = vst.msk [vmem:[#allocation3 + $0x8] sm:$0xff] %vm2778, %v2733
      %2781 = vst.msk [vmem:[#allocation3 + $0x10] sm:$0xff] %vm2778, %v2735
      %2782 = vst.msk [vmem:[#allocation3 + $0x18] sm:$0xff] %vm2778, %v2737
      %2783 = vst.msk [vmem:[#allocation3 + $0x20] sm:$0xff] %vm2778, %v2739
      %2784 = vst.msk [vmem:[#allocation3 + $0x28] sm:$0xff] %vm2778, %v2741
      %2785 = vst.msk [vmem:[#allocation3 + $0x30] sm:$0xff] %vm2778, %v2743
      %2786 = vst.msk [vmem:[#allocation3 + $0x38] sm:$0xff] %vm2778, %v2745
      %2787 = vst.msk [vmem:[#allocation3 + $0x40] sm:$0xff] %vm2778, %v2747
      %2788 = vst.msk [vmem:[#allocation3 + $0x48] sm:$0xff] %vm2778, %v2749
      %2789 = vst.msk [vmem:[#allocation3 + $0x50] sm:$0xff] %vm2778, %v2751
      %2790 = vst.msk [vmem:[#allocation3 + $0x58] sm:$0xff] %vm2778, %v2753
      %2791 = vst.msk [vmem:[#allocation3 + $0x60] sm:$0xff] %vm2778, %v2755
      %2792 = vst.msk [vmem:[#allocation3 + $0x68] sm:$0xff] %vm2778, %v2757
      %2793 = vst.msk [vmem:[#allocation3 + $0x70] sm:$0xff] %vm2778, %v2759
      %2794 = vst.msk [vmem:[#allocation3 + $0x78] sm:$0xff] %vm2778, %v2761
      %s2795 = scalar_lea.vmem [#allocation2], 24
      %v2796 = vld [vmem:[%s2795] sm:$0xf]
      %v2797 = vld [vmem:[%s2795 + $0x4] sm:$0xf]
      %v2798 = vld [vmem:[%s2795 + $0xc] sm:$0xf]
      %v2799 = vld [vmem:[%s2795 + $0x10] sm:$0xf]
      %v2800 = vld [vmem:[%s2795 + $0x18] sm:$0xf]
      %v2801 = vld [vmem:[%s2795 + $0x1c] sm:$0xf]
      %v2802 = vld [vmem:[%s2795 + $0x24] sm:$0xf]
      %v2803 = vld [vmem:[%s2795 + $0x28] sm:$0xf]
      %v2804 = vld [vmem:[%s2795 + $0x30] sm:$0xf]
      %v2805 = vld [vmem:[%s2795 + $0x34] sm:$0xf]
      %v2806 = vld [vmem:[%s2795 + $0x3c] sm:$0xf]
      %v2807 = vld [vmem:[%s2795 + $0x40] sm:$0xf]
      %v2808 = vld [vmem:[%s2795 + $0x48] sm:$0xf]
      %v2809 = vld [vmem:[%s2795 + $0x4c] sm:$0xf]
      %v2810 = vld [vmem:[%s2795 + $0x54] sm:$0xf]
      %v2811 = vld [vmem:[%s2795 + $0x58] sm:$0xf]
      %v2812 = vld [vmem:[%s2795 + $0x60] sm:$0xf]
      %v2813 = vld [vmem:[%s2795 + $0x64] sm:$0xf]
      %v2814 = vld [vmem:[%s2795 + $0x6c] sm:$0xf]
      %v2815 = vld [vmem:[%s2795 + $0x70] sm:$0xf]
      %v2816 = vld [vmem:[%s2795 + $0x78] sm:$0xf]
      %v2817 = vld [vmem:[%s2795 + $0x7c] sm:$0xf]
      %v2818 = vld [vmem:[%s2795 + $0x84] sm:$0xf]
      %v2819 = vld [vmem:[%s2795 + $0x88] sm:$0xf]
      %v2820 = vld [vmem:[%s2795 + $0x90] sm:$0xf]
      %v2821 = vld [vmem:[%s2795 + $0x94] sm:$0xf]
      %v2822 = vld [vmem:[%s2795 + $0x9c] sm:$0xf]
      %v2823 = vld [vmem:[%s2795 + $0xa0] sm:$0xf]
      %v2824 = vld [vmem:[%s2795 + $0xa8] sm:$0xf]
      %v2825 = vld [vmem:[%s2795 + $0xac] sm:$0xf]
      %v2826 = vld [vmem:[%s2795 + $0xb4] sm:$0xf]
      %v2827 = vld [vmem:[%s2795 + $0xb8] sm:$0xf]
      %v2828 = vld [vmem:[%s2795 + $0x8] sm:$0x1]
      %v2829 = vld [vmem:[%s2795 + $0x14] sm:$0x1]
      %v2830 = vld [vmem:[%s2795 + $0x20] sm:$0x1]
      %v2831 = vld [vmem:[%s2795 + $0x2c] sm:$0x1]
      %v2832 = vld [vmem:[%s2795 + $0x38] sm:$0x1]
      %v2833 = vld [vmem:[%s2795 + $0x44] sm:$0x1]
      %v2834 = vld [vmem:[%s2795 + $0x50] sm:$0x1]
      %v2835 = vld [vmem:[%s2795 + $0x5c] sm:$0x1]
      %v2836 = vld [vmem:[%s2795 + $0x68] sm:$0x1]
      %v2837 = vld [vmem:[%s2795 + $0x74] sm:$0x1]
      %v2838 = vld [vmem:[%s2795 + $0x80] sm:$0x1]
      %v2839 = vld [vmem:[%s2795 + $0x8c] sm:$0x1]
      %v2840 = vld [vmem:[%s2795 + $0x98] sm:$0x1]
      %v2841 = vld [vmem:[%s2795 + $0xa4] sm:$0x1]
      %v2842 = vld [vmem:[%s2795 + $0xb0] sm:$0x1]
      %v2843 = vld [vmem:[%s2795 + $0xbc] sm:$0x1]
      %v2845 = vshrl.u32 %v2796, 16
      %v2847 = vrot.slane %v2845, 4
      %v2848 = vshll.u32 %v2796, 16
      %v2850 = vrot.slane %v2848, 5
      %v2851 = vor.u32 %v2847, %v2850
      %v2852 = vrot.slane %v2851, 4
      %v2854 = vshll.u32 %v2797, 16
      %v2856 = vrot.slane %v2854, 5
      %v2857 = vsel %vm771, %v2852, %v2856
      %v2858 = vshrl.u32 %v2797, 16
      %v2860 = vrot.slane %v2858, 4
      %v2861 = vor.u32 %v2860, %v2856
      %v2862 = vrot.slane %v2861, 4
      %v2864 = vshll.u32 %v2828, 16
      %v2866 = vrot.slane %v2864, 5
      %v2867 = vsel %vm771, %v2862, %v2866
      %v2869 = vshrl.u32 %v2798, 16
      %v2871 = vrot.slane %v2869, 4
      %v2872 = vshll.u32 %v2798, 16
      %v2874 = vrot.slane %v2872, 5
      %v2875 = vor.u32 %v2871, %v2874
      %v2876 = vrot.slane %v2875, 4
      %v2878 = vshll.u32 %v2799, 16
      %v2880 = vrot.slane %v2878, 5
      %v2881 = vsel %vm771, %v2876, %v2880
      %v2882 = vshrl.u32 %v2799, 16
      %v2884 = vrot.slane %v2882, 4
      %v2885 = vor.u32 %v2884, %v2880
      %v2886 = vrot.slane %v2885, 4
      %v2888 = vshll.u32 %v2829, 16
      %v2890 = vrot.slane %v2888, 5
      %v2891 = vsel %vm771, %v2886, %v2890
      %v2893 = vshrl.u32 %v2800, 16
      %v2895 = vrot.slane %v2893, 4
      %v2896 = vshll.u32 %v2800, 16
      %v2898 = vrot.slane %v2896, 5
      %v2899 = vor.u32 %v2895, %v2898
      %v2900 = vrot.slane %v2899, 4
      %v2902 = vshll.u32 %v2801, 16
      %v2904 = vrot.slane %v2902, 5
      %v2905 = vsel %vm771, %v2900, %v2904
      %v2906 = vshrl.u32 %v2801, 16
      %v2908 = vrot.slane %v2906, 4
      %v2909 = vor.u32 %v2908, %v2904
      %v2910 = vrot.slane %v2909, 4
      %v2912 = vshll.u32 %v2830, 16
      %v2914 = vrot.slane %v2912, 5
      %v2915 = vsel %vm771, %v2910, %v2914
      %v2917 = vshrl.u32 %v2802, 16
      %v2919 = vrot.slane %v2917, 4
      %v2920 = vshll.u32 %v2802, 16
      %v2922 = vrot.slane %v2920, 5
      %v2923 = vor.u32 %v2919, %v2922
      %v2924 = vrot.slane %v2923, 4
      %v2926 = vshll.u32 %v2803, 16
      %v2928 = vrot.slane %v2926, 5
      %v2929 = vsel %vm771, %v2924, %v2928
      %v2930 = vshrl.u32 %v2803, 16
      %v2932 = vrot.slane %v2930, 4
      %v2933 = vor.u32 %v2932, %v2928
      %v2934 = vrot.slane %v2933, 4
      %v2936 = vshll.u32 %v2831, 16
      %v2938 = vrot.slane %v2936, 5
      %v2939 = vsel %vm771, %v2934, %v2938
      %v2941 = vshrl.u32 %v2804, 16
      %v2943 = vrot.slane %v2941, 4
      %v2944 = vshll.u32 %v2804, 16
      %v2946 = vrot.slane %v2944, 5
      %v2947 = vor.u32 %v2943, %v2946
      %v2948 = vrot.slane %v2947, 4
      %v2950 = vshll.u32 %v2805, 16
      %v2952 = vrot.slane %v2950, 5
      %v2953 = vsel %vm771, %v2948, %v2952
      %v2954 = vshrl.u32 %v2805, 16
      %v2956 = vrot.slane %v2954, 4
      %v2957 = vor.u32 %v2956, %v2952
      %v2958 = vrot.slane %v2957, 4
      %v2960 = vshll.u32 %v2832, 16
      %v2962 = vrot.slane %v2960, 5
      %v2963 = vsel %vm771, %v2958, %v2962
      %v2965 = vshrl.u32 %v2806, 16
      %v2967 = vrot.slane %v2965, 4
      %v2968 = vshll.u32 %v2806, 16
      %v2970 = vrot.slane %v2968, 5
      %v2971 = vor.u32 %v2967, %v2970
      %v2972 = vrot.slane %v2971, 4
      %v2974 = vshll.u32 %v2807, 16
      %v2976 = vrot.slane %v2974, 5
      %v2977 = vsel %vm771, %v2972, %v2976
      %v2978 = vshrl.u32 %v2807, 16
      %v2980 = vrot.slane %v2978, 4
      %v2981 = vor.u32 %v2980, %v2976
      %v2982 = vrot.slane %v2981, 4
      %v2984 = vshll.u32 %v2833, 16
      %v2986 = vrot.slane %v2984, 5
      %v2987 = vsel %vm771, %v2982, %v2986
      %v2989 = vshrl.u32 %v2808, 16
      %v2991 = vrot.slane %v2989, 4
      %v2992 = vshll.u32 %v2808, 16
      %v2994 = vrot.slane %v2992, 5
      %v2995 = vor.u32 %v2991, %v2994
      %v2996 = vrot.slane %v2995, 4
      %v2998 = vshll.u32 %v2809, 16
      %v3000 = vrot.slane %v2998, 5
      %v3001 = vsel %vm771, %v2996, %v3000
      %v3002 = vshrl.u32 %v2809, 16
      %v3004 = vrot.slane %v3002, 4
      %v3005 = vor.u32 %v3004, %v3000
      %v3006 = vrot.slane %v3005, 4
      %v3008 = vshll.u32 %v2834, 16
      %v3010 = vrot.slane %v3008, 5
      %v3011 = vsel %vm771, %v3006, %v3010
      %v3013 = vshrl.u32 %v2810, 16
      %v3015 = vrot.slane %v3013, 4
      %v3016 = vshll.u32 %v2810, 16
      %v3018 = vrot.slane %v3016, 5
      %v3019 = vor.u32 %v3015, %v3018
      %v3020 = vrot.slane %v3019, 4
      %v3022 = vshll.u32 %v2811, 16
      %v3024 = vrot.slane %v3022, 5
      %v3025 = vsel %vm771, %v3020, %v3024
      %v3026 = vshrl.u32 %v2811, 16
      %v3028 = vrot.slane %v3026, 4
      %v3029 = vor.u32 %v3028, %v3024
      %v3030 = vrot.slane %v3029, 4
      %v3032 = vshll.u32 %v2835, 16
      %v3034 = vrot.slane %v3032, 5
      %v3035 = vsel %vm771, %v3030, %v3034
      %v3037 = vshrl.u32 %v2812, 16
      %v3039 = vrot.slane %v3037, 4
      %v3040 = vshll.u32 %v2812, 16
      %v3042 = vrot.slane %v3040, 5
      %v3043 = vor.u32 %v3039, %v3042
      %v3044 = vrot.slane %v3043, 4
      %v3046 = vshll.u32 %v2813, 16
      %v3048 = vrot.slane %v3046, 5
      %v3049 = vsel %vm771, %v3044, %v3048
      %v3050 = vshrl.u32 %v2813, 16
      %v3052 = vrot.slane %v3050, 4
      %v3053 = vor.u32 %v3052, %v3048
      %v3054 = vrot.slane %v3053, 4
      %v3056 = vshll.u32 %v2836, 16
      %v3058 = vrot.slane %v3056, 5
      %v3059 = vsel %vm771, %v3054, %v3058
      %v3061 = vshrl.u32 %v2814, 16
      %v3063 = vrot.slane %v3061, 4
      %v3064 = vshll.u32 %v2814, 16
      %v3066 = vrot.slane %v3064, 5
      %v3067 = vor.u32 %v3063, %v3066
      %v3068 = vrot.slane %v3067, 4
      %v3070 = vshll.u32 %v2815, 16
      %v3072 = vrot.slane %v3070, 5
      %v3073 = vsel %vm771, %v3068, %v3072
      %v3074 = vshrl.u32 %v2815, 16
      %v3076 = vrot.slane %v3074, 4
      %v3077 = vor.u32 %v3076, %v3072
      %v3078 = vrot.slane %v3077, 4
      %v3080 = vshll.u32 %v2837, 16
      %v3082 = vrot.slane %v3080, 5
      %v3083 = vsel %vm771, %v3078, %v3082
      %v3085 = vshrl.u32 %v2816, 16
      %v3087 = vrot.slane %v3085, 4
      %v3088 = vshll.u32 %v2816, 16
      %v3090 = vrot.slane %v3088, 5
      %v3091 = vor.u32 %v3087, %v3090
      %v3092 = vrot.slane %v3091, 4
      %v3094 = vshll.u32 %v2817, 16
      %v3096 = vrot.slane %v3094, 5
      %v3097 = vsel %vm771, %v3092, %v3096
      %v3098 = vshrl.u32 %v2817, 16
      %v3100 = vrot.slane %v3098, 4
      %v3101 = vor.u32 %v3100, %v3096
      %v3102 = vrot.slane %v3101, 4
      %v3104 = vshll.u32 %v2838, 16
      %v3106 = vrot.slane %v3104, 5
      %v3107 = vsel %vm771, %v3102, %v3106
      %v3109 = vshrl.u32 %v2818, 16
      %v3111 = vrot.slane %v3109, 4
      %v3112 = vshll.u32 %v2818, 16
      %v3114 = vrot.slane %v3112, 5
      %v3115 = vor.u32 %v3111, %v3114
      %v3116 = vrot.slane %v3115, 4
      %v3118 = vshll.u32 %v2819, 16
      %v3120 = vrot.slane %v3118, 5
      %v3121 = vsel %vm771, %v3116, %v3120
      %v3122 = vshrl.u32 %v2819, 16
      %v3124 = vrot.slane %v3122, 4
      %v3125 = vor.u32 %v3124, %v3120
      %v3126 = vrot.slane %v3125, 4
      %v3128 = vshll.u32 %v2839, 16
      %v3130 = vrot.slane %v3128, 5
      %v3131 = vsel %vm771, %v3126, %v3130
      %v3133 = vshrl.u32 %v2820, 16
      %v3135 = vrot.slane %v3133, 4
      %v3136 = vshll.u32 %v2820, 16
      %v3138 = vrot.slane %v3136, 5
      %v3139 = vor.u32 %v3135, %v3138
      %v3140 = vrot.slane %v3139, 4
      %v3142 = vshll.u32 %v2821, 16
      %v3144 = vrot.slane %v3142, 5
      %v3145 = vsel %vm771, %v3140, %v3144
      %v3146 = vshrl.u32 %v2821, 16
      %v3148 = vrot.slane %v3146, 4
      %v3149 = vor.u32 %v3148, %v3144
      %v3150 = vrot.slane %v3149, 4
      %v3152 = vshll.u32 %v2840, 16
      %v3154 = vrot.slane %v3152, 5
      %v3155 = vsel %vm771, %v3150, %v3154
      %v3157 = vshrl.u32 %v2822, 16
      %v3159 = vrot.slane %v3157, 4
      %v3160 = vshll.u32 %v2822, 16
      %v3162 = vrot.slane %v3160, 5
      %v3163 = vor.u32 %v3159, %v3162
      %v3164 = vrot.slane %v3163, 4
      %v3166 = vshll.u32 %v2823, 16
      %v3168 = vrot.slane %v3166, 5
      %v3169 = vsel %vm771, %v3164, %v3168
      %v3170 = vshrl.u32 %v2823, 16
      %v3172 = vrot.slane %v3170, 4
      %v3173 = vor.u32 %v3172, %v3168
      %v3174 = vrot.slane %v3173, 4
      %v3176 = vshll.u32 %v2841, 16
      %v3178 = vrot.slane %v3176, 5
      %v3179 = vsel %vm771, %v3174, %v3178
      %v3181 = vshrl.u32 %v2824, 16
      %v3183 = vrot.slane %v3181, 4
      %v3184 = vshll.u32 %v2824, 16
      %v3186 = vrot.slane %v3184, 5
      %v3187 = vor.u32 %v3183, %v3186
      %v3188 = vrot.slane %v3187, 4
      %v3190 = vshll.u32 %v2825, 16
      %v3192 = vrot.slane %v3190, 5
      %v3193 = vsel %vm771, %v3188, %v3192
      %v3194 = vshrl.u32 %v2825, 16
      %v3196 = vrot.slane %v3194, 4
      %v3197 = vor.u32 %v3196, %v3192
      %v3198 = vrot.slane %v3197, 4
      %v3200 = vshll.u32 %v2842, 16
      %v3202 = vrot.slane %v3200, 5
      %v3203 = vsel %vm771, %v3198, %v3202
      %v3205 = vshrl.u32 %v2826, 16
      %v3207 = vrot.slane %v3205, 4
      %v3208 = vshll.u32 %v2826, 16
      %v3210 = vrot.slane %v3208, 5
      %v3211 = vor.u32 %v3207, %v3210
      %v3212 = vrot.slane %v3211, 4
      %v3214 = vshll.u32 %v2827, 16
      %v3216 = vrot.slane %v3214, 5
      %v3217 = vsel %vm771, %v3212, %v3216
      %v3218 = vshrl.u32 %v2827, 16
      %v3220 = vrot.slane %v3218, 4
      %v3221 = vor.u32 %v3220, %v3216
      %v3222 = vrot.slane %v3221, 4
      %v3224 = vshll.u32 %v2843, 16
      %v3226 = vrot.slane %v3224, 5
      %v3227 = vsel %vm771, %v3222, %v3226
      %v3260 = vunpack.c.l.b16 %v2796
      %v3261 = vunpack.c.l.b16 %v2797
      %v3262 = vunpack.c.l.b16 %v2798
      %v3263 = vunpack.c.l.b16 %v2799
      %v3264 = vunpack.c.l.b16 %v2800
      %v3265 = vunpack.c.l.b16 %v2801
      %v3266 = vunpack.c.l.b16 %v2802
      %v3267 = vunpack.c.l.b16 %v2803
      %v3268 = vunpack.c.l.b16 %v2804
      %v3269 = vunpack.c.l.b16 %v2805
      %v3270 = vunpack.c.l.b16 %v2806
      %v3271 = vunpack.c.l.b16 %v2807
      %v3272 = vunpack.c.l.b16 %v2808
      %v3273 = vunpack.c.l.b16 %v2809
      %v3274 = vunpack.c.l.b16 %v2810
      %v3275 = vunpack.c.l.b16 %v2811
      %v3276 = vunpack.c.l.b16 %v2812
      %v3277 = vunpack.c.l.b16 %v2813
      %v3278 = vunpack.c.l.b16 %v2814
      %v3279 = vunpack.c.l.b16 %v2815
      %v3280 = vunpack.c.l.b16 %v2816
      %v3281 = vunpack.c.l.b16 %v2817
      %v3282 = vunpack.c.l.b16 %v2818
      %v3283 = vunpack.c.l.b16 %v2819
      %v3284 = vunpack.c.l.b16 %v2820
      %v3285 = vunpack.c.l.b16 %v2821
      %v3286 = vunpack.c.l.b16 %v2822
      %v3287 = vunpack.c.l.b16 %v2823
      %v3288 = vunpack.c.l.b16 %v2824
      %v3289 = vunpack.c.l.b16 %v2825
      %v3290 = vunpack.c.l.b16 %v2826
      %v3291 = vunpack.c.l.b16 %v2827
      %v3292 = vpack.c.b16 %v3261, %v3260
      %v3293 = vpack.c.b16 %v3263, %v3262
      %v3294 = vpack.c.b16 %v3265, %v3264
      %v3295 = vpack.c.b16 %v3267, %v3266
      %v3296 = vpack.c.b16 %v3269, %v3268
      %v3297 = vpack.c.b16 %v3271, %v3270
      %v3298 = vpack.c.b16 %v3273, %v3272
      %v3299 = vpack.c.b16 %v3275, %v3274
      %v3300 = vpack.c.b16 %v3277, %v3276
      %v3301 = vpack.c.b16 %v3279, %v3278
      %v3302 = vpack.c.b16 %v3281, %v3280
      %v3303 = vpack.c.b16 %v3283, %v3282
      %v3304 = vpack.c.b16 %v3285, %v3284
      %v3305 = vpack.c.b16 %v3287, %v3286
      %v3306 = vpack.c.b16 %v3289, %v3288
      %v3307 = vpack.c.b16 %v3291, %v3290
      %v3308 = vunpack.c.l.b16 %v2857
      %v3309 = vunpack.c.l.b16 %v2867
      %v3310 = vunpack.c.l.b16 %v2881
      %v3311 = vunpack.c.l.b16 %v2891
      %v3312 = vunpack.c.l.b16 %v2905
      %v3313 = vunpack.c.l.b16 %v2915
      %v3314 = vunpack.c.l.b16 %v2929
      %v3315 = vunpack.c.l.b16 %v2939
      %v3316 = vunpack.c.l.b16 %v2953
      %v3317 = vunpack.c.l.b16 %v2963
      %v3318 = vunpack.c.l.b16 %v2977
      %v3319 = vunpack.c.l.b16 %v2987
      %v3320 = vunpack.c.l.b16 %v3001
      %v3321 = vunpack.c.l.b16 %v3011
      %v3322 = vunpack.c.l.b16 %v3025
      %v3323 = vunpack.c.l.b16 %v3035
      %v3324 = vunpack.c.l.b16 %v3049
      %v3325 = vunpack.c.l.b16 %v3059
      %v3326 = vunpack.c.l.b16 %v3073
      %v3327 = vunpack.c.l.b16 %v3083
      %v3328 = vunpack.c.l.b16 %v3097
      %v3329 = vunpack.c.l.b16 %v3107
      %v3330 = vunpack.c.l.b16 %v3121
      %v3331 = vunpack.c.l.b16 %v3131
      %v3332 = vunpack.c.l.b16 %v3145
      %v3333 = vunpack.c.l.b16 %v3155
      %v3334 = vunpack.c.l.b16 %v3169
      %v3335 = vunpack.c.l.b16 %v3179
      %v3336 = vunpack.c.l.b16 %v3193
      %v3337 = vunpack.c.l.b16 %v3203
      %v3338 = vunpack.c.l.b16 %v3217
      %v3339 = vunpack.c.l.b16 %v3227
      %v3340 = vpack.c.b16 %v3309, %v3308
      %v3341 = vpack.c.b16 %v3311, %v3310
      %v3342 = vpack.c.b16 %v3313, %v3312
      %v3343 = vpack.c.b16 %v3315, %v3314
      %v3344 = vpack.c.b16 %v3317, %v3316
      %v3345 = vpack.c.b16 %v3319, %v3318
      %v3346 = vpack.c.b16 %v3321, %v3320
      %v3347 = vpack.c.b16 %v3323, %v3322
      %v3348 = vpack.c.b16 %v3325, %v3324
      %v3349 = vpack.c.b16 %v3327, %v3326
      %v3350 = vpack.c.b16 %v3329, %v3328
      %v3351 = vpack.c.b16 %v3331, %v3330
      %v3352 = vpack.c.b16 %v3333, %v3332
      %v3353 = vpack.c.b16 %v3335, %v3334
      %v3354 = vpack.c.b16 %v3337, %v3336
      %v3355 = vpack.c.b16 %v3339, %v3338
      %3356 = vrot.lane.b32.xlu0 %v3340, 4
      %v3357 = vpop.permute.xlu0 %3356
      %3358 = vrot.lane.b32.xlu0 %v3341, 4
      %v3359 = vpop.permute.xlu0 %3358
      %3360 = vrot.lane.b32.xlu0 %v3342, 4
      %v3361 = vpop.permute.xlu0 %3360
      %3362 = vrot.lane.b32.xlu0 %v3343, 4
      %v3363 = vpop.permute.xlu0 %3362
      %3364 = vrot.lane.b32.xlu0 %v3344, 4
      %v3365 = vpop.permute.xlu0 %3364
      %3366 = vrot.lane.b32.xlu0 %v3345, 4
      %v3367 = vpop.permute.xlu0 %3366
      %3368 = vrot.lane.b32.xlu0 %v3346, 4
      %v3369 = vpop.permute.xlu0 %3368
      %3370 = vrot.lane.b32.xlu0 %v3347, 4
      %v3371 = vpop.permute.xlu0 %3370
      %3372 = vrot.lane.b32.xlu0 %v3348, 4
      %v3373 = vpop.permute.xlu0 %3372
      %3374 = vrot.lane.b32.xlu0 %v3349, 4
      %v3375 = vpop.permute.xlu0 %3374
      %3376 = vrot.lane.b32.xlu0 %v3350, 4
      %v3377 = vpop.permute.xlu0 %3376
      %3378 = vrot.lane.b32.xlu0 %v3351, 4
      %v3379 = vpop.permute.xlu0 %3378
      %3380 = vrot.lane.b32.xlu0 %v3352, 4
      %v3381 = vpop.permute.xlu0 %3380
      %3382 = vrot.lane.b32.xlu0 %v3353, 4
      %v3383 = vpop.permute.xlu0 %3382
      %3384 = vrot.lane.b32.xlu0 %v3354, 4
      %v3385 = vpop.permute.xlu0 %3384
      %3386 = vrot.lane.b32.xlu0 %v3355, 4
      %v3387 = vpop.permute.xlu0 %3386
      %v3390 = vsel %vm1316, %v3292, %v3357
      %v3393 = vsel %vm1316, %v3293, %v3359
      %v3396 = vsel %vm1316, %v3294, %v3361
      %v3399 = vsel %vm1316, %v3295, %v3363
      %v3402 = vsel %vm1316, %v3296, %v3365
      %v3405 = vsel %vm1316, %v3297, %v3367
      %v3408 = vsel %vm1316, %v3298, %v3369
      %v3411 = vsel %vm1316, %v3299, %v3371
      %v3414 = vsel %vm1316, %v3300, %v3373
      %v3417 = vsel %vm1316, %v3301, %v3375
      %v3420 = vsel %vm1316, %v3302, %v3377
      %v3423 = vsel %vm1316, %v3303, %v3379
      %v3426 = vsel %vm1316, %v3304, %v3381
      %v3429 = vsel %vm1316, %v3305, %v3383
      %v3432 = vsel %vm1316, %v3306, %v3385
      %v3435 = vsel %vm1316, %v3307, %v3387
      %3452 = vrot.lane.b32.xlu0 %v3390, 24
      %v3453 = vpop.permute.xlu0 %3452
      %3454 = vrot.lane.b32.xlu0 %v3393, 24
      %v3455 = vpop.permute.xlu0 %3454
      %3456 = vrot.lane.b32.xlu0 %v3396, 24
      %v3457 = vpop.permute.xlu0 %3456
      %3458 = vrot.lane.b32.xlu0 %v3399, 24
      %v3459 = vpop.permute.xlu0 %3458
      %3460 = vrot.lane.b32.xlu0 %v3402, 24
      %v3461 = vpop.permute.xlu0 %3460
      %3462 = vrot.lane.b32.xlu0 %v3405, 24
      %v3463 = vpop.permute.xlu0 %3462
      %3464 = vrot.lane.b32.xlu0 %v3408, 24
      %v3465 = vpop.permute.xlu0 %3464
      %3466 = vrot.lane.b32.xlu0 %v3411, 24
      %v3467 = vpop.permute.xlu0 %3466
      %3468 = vrot.lane.b32.xlu0 %v3414, 24
      %v3469 = vpop.permute.xlu0 %3468
      %3470 = vrot.lane.b32.xlu0 %v3417, 24
      %v3471 = vpop.permute.xlu0 %3470
      %3472 = vrot.lane.b32.xlu0 %v3420, 24
      %v3473 = vpop.permute.xlu0 %3472
      %3474 = vrot.lane.b32.xlu0 %v3423, 24
      %v3475 = vpop.permute.xlu0 %3474
      %3476 = vrot.lane.b32.xlu0 %v3426, 24
      %v3477 = vpop.permute.xlu0 %3476
      %3478 = vrot.lane.b32.xlu0 %v3429, 24
      %v3479 = vpop.permute.xlu0 %3478
      %3480 = vrot.lane.b32.xlu0 %v3432, 24
      %v3481 = vpop.permute.xlu0 %3480
      %3482 = vrot.lane.b32.xlu0 %v3435, 24
      %v3483 = vpop.permute.xlu0 %3482
      %vm3500 = vcmask 261312
      %3501 = vst.msk [vmem:[#allocation3] sm:$0xff] %vm3500, %v3453
      %3502 = vst.msk [vmem:[#allocation3 + $0x8] sm:$0xff] %vm3500, %v3455
      %3503 = vst.msk [vmem:[#allocation3 + $0x10] sm:$0xff] %vm3500, %v3457
      %3504 = vst.msk [vmem:[#allocation3 + $0x18] sm:$0xff] %vm3500, %v3459
      %3505 = vst.msk [vmem:[#allocation3 + $0x20] sm:$0xff] %vm3500, %v3461
      %3506 = vst.msk [vmem:[#allocation3 + $0x28] sm:$0xff] %vm3500, %v3463
      %3507 = vst.msk [vmem:[#allocation3 + $0x30] sm:$0xff] %vm3500, %v3465
      %3508 = vst.msk [vmem:[#allocation3 + $0x38] sm:$0xff] %vm3500, %v3467
      %3509 = vst.msk [vmem:[#allocation3 + $0x40] sm:$0xff] %vm3500, %v3469
      %3510 = vst.msk [vmem:[#allocation3 + $0x48] sm:$0xff] %vm3500, %v3471
      %3511 = vst.msk [vmem:[#allocation3 + $0x50] sm:$0xff] %vm3500, %v3473
      %3512 = vst.msk [vmem:[#allocation3 + $0x58] sm:$0xff] %vm3500, %v3475
      %3513 = vst.msk [vmem:[#allocation3 + $0x60] sm:$0xff] %vm3500, %v3477
      %3514 = vst.msk [vmem:[#allocation3 + $0x68] sm:$0xff] %vm3500, %v3479
      %3515 = vst.msk [vmem:[#allocation3 + $0x70] sm:$0xff] %vm3500, %v3481
      %3516 = vst.msk [vmem:[#allocation3 + $0x78] sm:$0xff] %vm3500, %v3483
      %v3517 = vld [vmem:[%s2795] sm:$0xe]
      %v3518 = vld [vmem:[%s2795 + $0x4] sm:$0xf]
      %v3519 = vld [vmem:[%s2795 + $0x8] sm:$0x1]
      %v3520 = vld [vmem:[%s2795 + $0xc] sm:$0xe]
      %v3521 = vld [vmem:[%s2795 + $0x10] sm:$0xf]
      %v3522 = vld [vmem:[%s2795 + $0x14] sm:$0x1]
      %v3523 = vld [vmem:[%s2795 + $0x18] sm:$0xe]
      %v3524 = vld [vmem:[%s2795 + $0x1c] sm:$0xf]
      %v3525 = vld [vmem:[%s2795 + $0x20] sm:$0x1]
      %v3526 = vld [vmem:[%s2795 + $0x24] sm:$0xe]
      %v3527 = vld [vmem:[%s2795 + $0x28] sm:$0xf]
      %v3528 = vld [vmem:[%s2795 + $0x2c] sm:$0x1]
      %v3529 = vld [vmem:[%s2795 + $0x30] sm:$0xe]
      %v3530 = vld [vmem:[%s2795 + $0x34] sm:$0xf]
      %v3531 = vld [vmem:[%s2795 + $0x38] sm:$0x1]
      %v3532 = vld [vmem:[%s2795 + $0x3c] sm:$0xe]
      %v3533 = vld [vmem:[%s2795 + $0x40] sm:$0xf]
      %v3534 = vld [vmem:[%s2795 + $0x44] sm:$0x1]
      %v3535 = vld [vmem:[%s2795 + $0x48] sm:$0xe]
      %v3536 = vld [vmem:[%s2795 + $0x4c] sm:$0xf]
      %v3537 = vld [vmem:[%s2795 + $0x50] sm:$0x1]
      %v3538 = vld [vmem:[%s2795 + $0x54] sm:$0xe]
      %v3539 = vld [vmem:[%s2795 + $0x58] sm:$0xf]
      %v3540 = vld [vmem:[%s2795 + $0x5c] sm:$0x1]
      %v3541 = vld [vmem:[%s2795 + $0x60] sm:$0xe]
      %v3542 = vld [vmem:[%s2795 + $0x64] sm:$0xf]
      %v3543 = vld [vmem:[%s2795 + $0x68] sm:$0x1]
      %v3544 = vld [vmem:[%s2795 + $0x6c] sm:$0xe]
      %v3545 = vld [vmem:[%s2795 + $0x70] sm:$0xf]
      %v3546 = vld [vmem:[%s2795 + $0x74] sm:$0x1]
      %v3547 = vld [vmem:[%s2795 + $0x78] sm:$0xe]
      %v3548 = vld [vmem:[%s2795 + $0x7c] sm:$0xf]
      %v3549 = vld [vmem:[%s2795 + $0x80] sm:$0x1]
      %v3550 = vld [vmem:[%s2795 + $0x84] sm:$0xe]
      %v3551 = vld [vmem:[%s2795 + $0x88] sm:$0xf]
      %v3552 = vld [vmem:[%s2795 + $0x8c] sm:$0x1]
      %v3553 = vld [vmem:[%s2795 + $0x90] sm:$0xe]
      %v3554 = vld [vmem:[%s2795 + $0x94] sm:$0xf]
      %v3555 = vld [vmem:[%s2795 + $0x98] sm:$0x1]
      %v3556 = vld [vmem:[%s2795 + $0x9c] sm:$0xe]
      %v3557 = vld [vmem:[%s2795 + $0xa0] sm:$0xf]
      %v3558 = vld [vmem:[%s2795 + $0xa4] sm:$0x1]
      %v3559 = vld [vmem:[%s2795 + $0xa8] sm:$0xe]
      %v3560 = vld [vmem:[%s2795 + $0xac] sm:$0xf]
      %v3561 = vld [vmem:[%s2795 + $0xb0] sm:$0x1]
      %v3562 = vld [vmem:[%s2795 + $0xb4] sm:$0xe]
      %v3563 = vld [vmem:[%s2795 + $0xb8] sm:$0xf]
      %v3564 = vld [vmem:[%s2795 + $0xbc] sm:$0x1]
      %v3613 = vrot.slane %v3517, 5
      %v3614 = vrot.slane %v3613, 4
      %v3615 = vrot.slane %v3518, 5
      %v3616 = vsel %vm1496, %v3614, %v3615
      %v3617 = vrot.slane %v3615, 4
      %v3618 = vrot.slane %v3519, 5
      %v3619 = vsel %vm1496, %v3617, %v3618
      %v3620 = vrot.slane %v3520, 5
      %v3621 = vrot.slane %v3620, 4
      %v3622 = vrot.slane %v3521, 5
      %v3623 = vsel %vm1496, %v3621, %v3622
      %v3624 = vrot.slane %v3622, 4
      %v3625 = vrot.slane %v3522, 5
      %v3626 = vsel %vm1496, %v3624, %v3625
      %v3627 = vrot.slane %v3523, 5
      %v3628 = vrot.slane %v3627, 4
      %v3629 = vrot.slane %v3524, 5
      %v3630 = vsel %vm1496, %v3628, %v3629
      %v3631 = vrot.slane %v3629, 4
      %v3632 = vrot.slane %v3525, 5
      %v3633 = vsel %vm1496, %v3631, %v3632
      %v3634 = vrot.slane %v3526, 5
      %v3635 = vrot.slane %v3634, 4
      %v3636 = vrot.slane %v3527, 5
      %v3637 = vsel %vm1496, %v3635, %v3636
      %v3638 = vrot.slane %v3636, 4
      %v3639 = vrot.slane %v3528, 5
      %v3640 = vsel %vm1496, %v3638, %v3639
      %v3641 = vrot.slane %v3529, 5
      %v3642 = vrot.slane %v3641, 4
      %v3643 = vrot.slane %v3530, 5
      %v3644 = vsel %vm1496, %v3642, %v3643
      %v3645 = vrot.slane %v3643, 4
      %v3646 = vrot.slane %v3531, 5
      %v3647 = vsel %vm1496, %v3645, %v3646
      %v3648 = vrot.slane %v3532, 5
      %v3649 = vrot.slane %v3648, 4
      %v3650 = vrot.slane %v3533, 5
      %v3651 = vsel %vm1496, %v3649, %v3650
      %v3652 = vrot.slane %v3650, 4
      %v3653 = vrot.slane %v3534, 5
      %v3654 = vsel %vm1496, %v3652, %v3653
      %v3655 = vrot.slane %v3535, 5
      %v3656 = vrot.slane %v3655, 4
      %v3657 = vrot.slane %v3536, 5
      %v3658 = vsel %vm1496, %v3656, %v3657
      %v3659 = vrot.slane %v3657, 4
      %v3660 = vrot.slane %v3537, 5
      %v3661 = vsel %vm1496, %v3659, %v3660
      %v3662 = vrot.slane %v3538, 5
      %v3663 = vrot.slane %v3662, 4
      %v3664 = vrot.slane %v3539, 5
      %v3665 = vsel %vm1496, %v3663, %v3664
      %v3666 = vrot.slane %v3664, 4
      %v3667 = vrot.slane %v3540, 5
      %v3668 = vsel %vm1496, %v3666, %v3667
      %v3669 = vrot.slane %v3541, 5
      %v3670 = vrot.slane %v3669, 4
      %v3671 = vrot.slane %v3542, 5
      %v3672 = vsel %vm1496, %v3670, %v3671
      %v3673 = vrot.slane %v3671, 4
      %v3674 = vrot.slane %v3543, 5
      %v3675 = vsel %vm1496, %v3673, %v3674
      %v3676 = vrot.slane %v3544, 5
      %v3677 = vrot.slane %v3676, 4
      %v3678 = vrot.slane %v3545, 5
      %v3679 = vsel %vm1496, %v3677, %v3678
      %v3680 = vrot.slane %v3678, 4
      %v3681 = vrot.slane %v3546, 5
      %v3682 = vsel %vm1496, %v3680, %v3681
      %v3683 = vrot.slane %v3547, 5
      %v3684 = vrot.slane %v3683, 4
      %v3685 = vrot.slane %v3548, 5
      %v3686 = vsel %vm1496, %v3684, %v3685
      %v3687 = vrot.slane %v3685, 4
      %v3688 = vrot.slane %v3549, 5
      %v3689 = vsel %vm1496, %v3687, %v3688
      %v3690 = vrot.slane %v3550, 5
      %v3691 = vrot.slane %v3690, 4
      %v3692 = vrot.slane %v3551, 5
      %v3693 = vsel %vm1496, %v3691, %v3692
      %v3694 = vrot.slane %v3692, 4
      %v3695 = vrot.slane %v3552, 5
      %v3696 = vsel %vm1496, %v3694, %v3695
      %v3697 = vrot.slane %v3553, 5
      %v3698 = vrot.slane %v3697, 4
      %v3699 = vrot.slane %v3554, 5
      %v3700 = vsel %vm1496, %v3698, %v3699
      %v3701 = vrot.slane %v3699, 4
      %v3702 = vrot.slane %v3555, 5
      %v3703 = vsel %vm1496, %v3701, %v3702
      %v3704 = vrot.slane %v3556, 5
      %v3705 = vrot.slane %v3704, 4
      %v3706 = vrot.slane %v3557, 5
      %v3707 = vsel %vm1496, %v3705, %v3706
      %v3708 = vrot.slane %v3706, 4
      %v3709 = vrot.slane %v3558, 5
      %v3710 = vsel %vm1496, %v3708, %v3709
      %v3711 = vrot.slane %v3559, 5
      %v3712 = vrot.slane %v3711, 4
      %v3713 = vrot.slane %v3560, 5
      %v3714 = vsel %vm1496, %v3712, %v3713
      %v3715 = vrot.slane %v3713, 4
      %v3716 = vrot.slane %v3561, 5
      %v3717 = vsel %vm1496, %v3715, %v3716
      %v3718 = vrot.slane %v3562, 5
      %v3719 = vrot.slane %v3718, 4
      %v3720 = vrot.slane %v3563, 5
      %v3721 = vsel %vm1496, %v3719, %v3720
      %v3722 = vrot.slane %v3720, 4
      %v3723 = vrot.slane %v3564, 5
      %v3724 = vsel %vm1496, %v3722, %v3723
      %v3725 = vunpack.c.l.b16 %v3616
      %v3726 = vunpack.c.l.b16 %v3619
      %v3727 = vunpack.c.l.b16 %v3623
      %v3728 = vunpack.c.l.b16 %v3626
      %v3729 = vunpack.c.l.b16 %v3630
      %v3730 = vunpack.c.l.b16 %v3633
      %v3731 = vunpack.c.l.b16 %v3637
      %v3732 = vunpack.c.l.b16 %v3640
      %v3733 = vunpack.c.l.b16 %v3644
      %v3734 = vunpack.c.l.b16 %v3647
      %v3735 = vunpack.c.l.b16 %v3651
      %v3736 = vunpack.c.l.b16 %v3654
      %v3737 = vunpack.c.l.b16 %v3658
      %v3738 = vunpack.c.l.b16 %v3661
      %v3739 = vunpack.c.l.b16 %v3665
      %v3740 = vunpack.c.l.b16 %v3668
      %v3741 = vunpack.c.l.b16 %v3672
      %v3742 = vunpack.c.l.b16 %v3675
      %v3743 = vunpack.c.l.b16 %v3679
      %v3744 = vunpack.c.l.b16 %v3682
      %v3745 = vunpack.c.l.b16 %v3686
      %v3746 = vunpack.c.l.b16 %v3689
      %v3747 = vunpack.c.l.b16 %v3693
      %v3748 = vunpack.c.l.b16 %v3696
      %v3749 = vunpack.c.l.b16 %v3700
      %v3750 = vunpack.c.l.b16 %v3703
      %v3751 = vunpack.c.l.b16 %v3707
      %v3752 = vunpack.c.l.b16 %v3710
      %v3753 = vunpack.c.l.b16 %v3714
      %v3754 = vunpack.c.l.b16 %v3717
      %v3755 = vunpack.c.l.b16 %v3721
      %v3756 = vunpack.c.l.b16 %v3724
      %v3757 = vpack.c.b16 %v3726, %v3725
      %v3758 = vpack.c.b16 %v3728, %v3727
      %v3759 = vpack.c.b16 %v3730, %v3729
      %v3760 = vpack.c.b16 %v3732, %v3731
      %v3761 = vpack.c.b16 %v3734, %v3733
      %v3762 = vpack.c.b16 %v3736, %v3735
      %v3763 = vpack.c.b16 %v3738, %v3737
      %v3764 = vpack.c.b16 %v3740, %v3739
      %v3765 = vpack.c.b16 %v3742, %v3741
      %v3766 = vpack.c.b16 %v3744, %v3743
      %v3767 = vpack.c.b16 %v3746, %v3745
      %v3768 = vpack.c.b16 %v3748, %v3747
      %v3769 = vpack.c.b16 %v3750, %v3749
      %v3770 = vpack.c.b16 %v3752, %v3751
      %v3771 = vpack.c.b16 %v3754, %v3753
      %v3772 = vpack.c.b16 %v3756, %v3755
      %3773 = vrot.lane.b32.xlu0 %v3757, 32
      %v3774 = vpop.permute.xlu0 %3773
      %3775 = vrot.lane.b32.xlu0 %v3758, 32
      %v3776 = vpop.permute.xlu0 %3775
      %3777 = vrot.lane.b32.xlu0 %v3759, 32
      %v3778 = vpop.permute.xlu0 %3777
      %3779 = vrot.lane.b32.xlu0 %v3760, 32
      %v3780 = vpop.permute.xlu0 %3779
      %3781 = vrot.lane.b32.xlu0 %v3761, 32
      %v3782 = vpop.permute.xlu0 %3781
      %3783 = vrot.lane.b32.xlu0 %v3762, 32
      %v3784 = vpop.permute.xlu0 %3783
      %3785 = vrot.lane.b32.xlu0 %v3763, 32
      %v3786 = vpop.permute.xlu0 %3785
      %3787 = vrot.lane.b32.xlu0 %v3764, 32
      %v3788 = vpop.permute.xlu0 %3787
      %3789 = vrot.lane.b32.xlu0 %v3765, 32
      %v3790 = vpop.permute.xlu0 %3789
      %3791 = vrot.lane.b32.xlu0 %v3766, 32
      %v3792 = vpop.permute.xlu0 %3791
      %3793 = vrot.lane.b32.xlu0 %v3767, 32
      %v3794 = vpop.permute.xlu0 %3793
      %3795 = vrot.lane.b32.xlu0 %v3768, 32
      %v3796 = vpop.permute.xlu0 %3795
      %3797 = vrot.lane.b32.xlu0 %v3769, 32
      %v3798 = vpop.permute.xlu0 %3797
      %3799 = vrot.lane.b32.xlu0 %v3770, 32
      %v3800 = vpop.permute.xlu0 %3799
      %3801 = vrot.lane.b32.xlu0 %v3771, 32
      %v3802 = vpop.permute.xlu0 %3801
      %3803 = vrot.lane.b32.xlu0 %v3772, 32
      %v3804 = vpop.permute.xlu0 %3803
      %vm3821 = vcmask 294144
      %3822 = vst.msk [vmem:[#allocation3] sm:$0xff] %vm3821, %v3774
      %3823 = vst.msk [vmem:[#allocation3 + $0x8] sm:$0xff] %vm3821, %v3776
      %3824 = vst.msk [vmem:[#allocation3 + $0x10] sm:$0xff] %vm3821, %v3778
      %3825 = vst.msk [vmem:[#allocation3 + $0x18] sm:$0xff] %vm3821, %v3780
      %3826 = vst.msk [vmem:[#allocation3 + $0x20] sm:$0xff] %vm3821, %v3782
      %3827 = vst.msk [vmem:[#allocation3 + $0x28] sm:$0xff] %vm3821, %v3784
      %3828 = vst.msk [vmem:[#allocation3 + $0x30] sm:$0xff] %vm3821, %v3786
      %3829 = vst.msk [vmem:[#allocation3 + $0x38] sm:$0xff] %vm3821, %v3788
      %3830 = vst.msk [vmem:[#allocation3 + $0x40] sm:$0xff] %vm3821, %v3790
      %3831 = vst.msk [vmem:[#allocation3 + $0x48] sm:$0xff] %vm3821, %v3792
      %3832 = vst.msk [vmem:[#allocation3 + $0x50] sm:$0xff] %vm3821, %v3794
      %3833 = vst.msk [vmem:[#allocation3 + $0x58] sm:$0xff] %vm3821, %v3796
      %3834 = vst.msk [vmem:[#allocation3 + $0x60] sm:$0xff] %vm3821, %v3798
      %3835 = vst.msk [vmem:[#allocation3 + $0x68] sm:$0xff] %vm3821, %v3800
      %3836 = vst.msk [vmem:[#allocation3 + $0x70] sm:$0xff] %vm3821, %v3802
      %3837 = vst.msk [vmem:[#allocation3 + $0x78] sm:$0xff] %vm3821, %v3804
      %v3838 = vld [vmem:[#allocation3] sm:$0xff]
      %v3839 = vld [vmem:[#allocation3 + $0x8] sm:$0xff]
      %v3840 = vld [vmem:[#allocation3 + $0x10] sm:$0xff]
      %v3841 = vld [vmem:[#allocation3 + $0x18] sm:$0xff]
      %v3842 = vld [vmem:[#allocation3 + $0x20] sm:$0xff]
      %v3843 = vld [vmem:[#allocation3 + $0x28] sm:$0xff]
      %v3844 = vld [vmem:[#allocation3 + $0x30] sm:$0xff]
      %v3845 = vld [vmem:[#allocation3 + $0x38] sm:$0xff]
      %v3846 = vld [vmem:[#allocation3 + $0x40] sm:$0xff]
      %v3847 = vld [vmem:[#allocation3 + $0x48] sm:$0xff]
      %v3848 = vld [vmem:[#allocation3 + $0x50] sm:$0xff]
      %v3849 = vld [vmem:[#allocation3 + $0x58] sm:$0xff]
      %v3850 = vld [vmem:[#allocation3 + $0x60] sm:$0xff]
      %v3851 = vld [vmem:[#allocation3 + $0x68] sm:$0xff]
      %v3852 = vld [vmem:[#allocation3 + $0x70] sm:$0xff]
      %v3853 = vld [vmem:[#allocation3 + $0x78] sm:$0xff]
      %v3854 = vld [vmem:[%s1] sm:$0xf]
      %v3855 = vld [vmem:[%s1 + $0x4] sm:$0xf]
      %v3856 = vld [vmem:[%s1 + $0x8] sm:$0xf]
      %v3857 = vld [vmem:[%s1 + $0xc] sm:$0xf]
      %v3858 = vld [vmem:[%s1 + $0x10] sm:$0x3]
      %v3859 = vld [vmem:[%s3] sm:$0x1]
      %v3861 = vlaneseq
      %v3862 = vshrl.u32 %v3861, 7
      %v3863 = vsub.s32 0, %v3862
      %v3864 = vrot.slane %v3859, %v3863
      %v3871 = vunpack.c.l.b16 %v3854
      %v3872 = vunpack.c.l.b16 %v3855
      %v3873 = vunpack.c.l.b16 %v3856
      %v3874 = vunpack.c.l.b16 %v3857
      %v3875 = vunpack.c.l.b16 %v3858
      %v3876 = vpack.c.b16 %v3872, %v3871
      %v3877 = vpack.c.b16 %v3874, %v3873
      %v3878 = vpack.c.b16 %v3875, %v3875
      %vm3881 = vcmask 293888
      %v3883 = vsel %vm3881, %v3838, 0
      %v3886 = vsel %vm3881, %v3839, 0
      %v3889 = vsel %vm3881, %v3840, 0
      %v3892 = vsel %vm3881, %v3841, 0
      %v3895 = vsel %vm3881, %v3842, 0
      %v3898 = vsel %vm3881, %v3843, 0
      %v3901 = vsel %vm3881, %v3844, 0
      %v3904 = vsel %vm3881, %v3845, 0
      %v3907 = vsel %vm3881, %v3846, 0
      %v3910 = vsel %vm3881, %v3847, 0
      %v3913 = vsel %vm3881, %v3848, 0
      %v3916 = vsel %vm3881, %v3849, 0
      %v3919 = vsel %vm3881, %v3850, 0
      %v3922 = vsel %vm3881, %v3851, 0
      %v3925 = vsel %vm3881, %v3852, 0
      %v3928 = vsel %vm3881, %v3853, 0
      %vm3930 = vcmask 1041408
      %v3932 = vsel %vm3930, %v3878, 0
      %3934 = vmatprep.subr.bf16.mxu0 0
      %3935 = vmatpush1.bf16.msra.mxu0 %v3876
      %3936 = vmatprep.subr.bf16.mxu0 0
      %3937 = vmatpush1.bf16.msra.mxu0 %v3877
      %3938 = vmatprep.subr.bf16.mxu0 0
      %3939 = vmatpush1.bf16.msra.mxu0 %v3932
      %3940 = vmatprep.subr.bf16.mxu0 0
      %3941 = vmatpush1.bf16.msra.mxu0 0
      %3942 = vmatprep.subr.bf16.mxu0 0
      %3943 = vmatpush1.bf16.msra.mxu0 0
      %3944 = vmatprep.subr.bf16.mxu0 0
      %3945 = vmatpush1.bf16.msra.mxu0 0
      %3946 = vmatprep.subr.bf16.mxu0 0
      %3947 = vmatpush1.bf16.msra.mxu0 0
      %3948 = vmatprep.subr.bf16.mxu0 0
      %3949 = vmatpush1.bf16.msra.mxu0 0
      %3950 = vmatprep.subr.bf16.mxu0 0
      %3951 = vmatpush1.bf16.msra.mxu0 0
      %3952 = vmatprep.subr.bf16.mxu0 0
      %3953 = vmatpush1.bf16.msra.mxu0 0
      %3954 = vmatprep.subr.bf16.mxu0 0
      %3955 = vmatpush1.bf16.msra.mxu0 0
      %3956 = vmatprep.subr.bf16.mxu0 0
      %3957 = vmatpush1.bf16.msra.mxu0 0
      %3958 = vmatprep.subr.bf16.mxu0 0
      %3959 = vmatpush1.bf16.msra.mxu0 0
      %3960 = vmatprep.subr.bf16.mxu0 0
      %3961 = vmatpush1.bf16.msra.mxu0 0
      %3962 = vmatprep.subr.bf16.mxu0 0
      %3963 = vmatpush1.bf16.msra.mxu0 0
      %3964 = vmatprep.subr.bf16.mxu0 0
      %3965 = vmatpush1.bf16.msra.mxu0 0
      %3966 = vmatprep.mubr.bf16.mxu0 0
      %3967 = vmatmul.mubr.bf16.gmra.mrb[0].mxu0 %v3883
      %v3968 = vpop.f32.mrb[0].mxu0
      %v3969 = vadd.f32 %v3864, %v3968
      %v3970 = vpop.f32.mrb[0].mxu0
      %v3971 = vpop.f32.mrb[0].mxu0
      %v3972 = vadd.f32 %v3864, %v3971
      %v3973 = vpop.f32.mrb[0].mxu0
      %3974 = vmatprep.mubr.bf16.mxu0 0
      %3975 = vmatmul.mubr.bf16.gmra.mrb[0].mxu0 %v3886
      %v3976 = vpop.f32.mrb[0].mxu0
      %v3977 = vadd.f32 %v3864, %v3976
      %v3978 = vpop.f32.mrb[0].mxu0
      %v3979 = vpop.f32.mrb[0].mxu0
      %v3980 = vadd.f32 %v3864, %v3979
      %v3981 = vpop.f32.mrb[0].mxu0
      %3982 = vmatprep.mubr.bf16.mxu0 0
      %3983 = vmatmul.mubr.bf16.gmra.mrb[0].mxu0 %v3889
      %v3984 = vpop.f32.mrb[0].mxu0
      %v3985 = vadd.f32 %v3864, %v3984
      %v3986 = vpop.f32.mrb[0].mxu0
      %v3987 = vpop.f32.mrb[0].mxu0
      %v3988 = vadd.f32 %v3864, %v3987
      %v3989 = vpop.f32.mrb[0].mxu0
      %3990 = vmatprep.mubr.bf16.mxu0 0
      %3991 = vmatmul.mubr.bf16.gmra.mrb[0].mxu0 %v3892
      %v3992 = vpop.f32.mrb[0].mxu0
      %v3993 = vadd.f32 %v3864, %v3992
      %v3994 = vpop.f32.mrb[0].mxu0
      %v3995 = vpop.f32.mrb[0].mxu0
      %v3996 = vadd.f32 %v3864, %v3995
      %v3997 = vpop.f32.mrb[0].mxu0
      %3998 = vmatprep.mubr.bf16.mxu0 0
      %3999 = vmatmul.mubr.bf16.gmra.mrb[0].mxu0 %v3895
      %v4000 = vpop.f32.mrb[0].mxu0
      %v4001 = vadd.f32 %v3864, %v4000
      %v4002 = vpop.f32.mrb[0].mxu0
      %v4003 = vpop.f32.mrb[0].mxu0
      %v4004 = vadd.f32 %v3864, %v4003
      %v4005 = vpop.f32.mrb[0].mxu0
      %4006 = vmatprep.mubr.bf16.mxu0 0
      %4007 = vmatmul.mubr.bf16.gmra.mrb[0].mxu0 %v3898
      %v4008 = vpop.f32.mrb[0].mxu0
      %v4009 = vadd.f32 %v3864, %v4008
      %v4010 = vpop.f32.mrb[0].mxu0
      %v4011 = vpop.f32.mrb[0].mxu0
      %v4012 = vadd.f32 %v3864, %v4011
      %v4013 = vpop.f32.mrb[0].mxu0
      %4014 = vmatprep.mubr.bf16.mxu0 0
      %4015 = vmatmul.mubr.bf16.gmra.mrb[0].mxu0 %v3901
      %v4016 = vpop.f32.mrb[0].mxu0
      %v4017 = vadd.f32 %v3864, %v4016
      %v4018 = vpop.f32.mrb[0].mxu0
      %v4019 = vpop.f32.mrb[0].mxu0
      %v4020 = vadd.f32 %v3864, %v4019
      %v4021 = vpop.f32.mrb[0].mxu0
      %4022 = vmatprep.mubr.bf16.mxu0 0
      %4023 = vmatmul.mubr.bf16.gmra.mrb[0].mxu0 %v3904
      %v4024 = vpop.f32.mrb[0].mxu0
      %v4025 = vadd.f32 %v3864, %v4024
      %v4026 = vpop.f32.mrb[0].mxu0
      %v4027 = vpop.f32.mrb[0].mxu0
      %v4028 = vadd.f32 %v3864, %v4027
      %v4029 = vpop.f32.mrb[0].mxu0
      %4030 = vmatprep.mubr.bf16.mxu0 0
      %4031 = vmatmul.mubr.bf16.gmra.mrb[0].mxu0 %v3907
      %v4032 = vpop.f32.mrb[0].mxu0
      %v4033 = vadd.f32 %v3864, %v4032
      %v4034 = vpop.f32.mrb[0].mxu0
      %v4035 = vpop.f32.mrb[0].mxu0
      %v4036 = vadd.f32 %v3864, %v4035
      %v4037 = vpop.f32.mrb[0].mxu0
      %4038 = vmatprep.mubr.bf16.mxu0 0
      %4039 = vmatmul.mubr.bf16.gmra.mrb[0].mxu0 %v3910
      %v4040 = vpop.f32.mrb[0].mxu0
      %v4041 = vadd.f32 %v3864, %v4040
      %v4042 = vpop.f32.mrb[0].mxu0
      %v4043 = vpop.f32.mrb[0].mxu0
      %v4044 = vadd.f32 %v3864, %v4043
      %v4045 = vpop.f32.mrb[0].mxu0
      %4046 = vmatprep.mubr.bf16.mxu0 0
      %4047 = vmatmul.mubr.bf16.gmra.mrb[0].mxu0 %v3913
      %v4048 = vpop.f32.mrb[0].mxu0
      %v4049 = vadd.f32 %v3864, %v4048
      %v4050 = vpop.f32.mrb[0].mxu0
      %v4051 = vpop.f32.mrb[0].mxu0
      %v4052 = vadd.f32 %v3864, %v4051
      %v4053 = vpop.f32.mrb[0].mxu0
      %4054 = vmatprep.mubr.bf16.mxu0 0
      %4055 = vmatmul.mubr.bf16.gmra.mrb[0].mxu0 %v3916
      %v4056 = vpop.f32.mrb[0].mxu0
      %v4057 = vadd.f32 %v3864, %v4056
      %v4058 = vpop.f32.mrb[0].mxu0
      %v4059 = vpop.f32.mrb[0].mxu0
      %v4060 = vadd.f32 %v3864, %v4059
      %v4061 = vpop.f32.mrb[0].mxu0
      %4062 = vmatprep.mubr.bf16.mxu0 0
      %4063 = vmatmul.mubr.bf16.gmra.mrb[0].mxu0 %v3919
      %v4064 = vpop.f32.mrb[0].mxu0
      %v4065 = vadd.f32 %v3864, %v4064
      %v4066 = vpop.f32.mrb[0].mxu0
      %v4067 = vpop.f32.mrb[0].mxu0
      %v4068 = vadd.f32 %v3864, %v4067
      %v4069 = vpop.f32.mrb[0].mxu0
      %4070 = vmatprep.mubr.bf16.mxu0 0
      %4071 = vmatmul.mubr.bf16.gmra.mrb[0].mxu0 %v3922
      %v4072 = vpop.f32.mrb[0].mxu0
      %v4073 = vadd.f32 %v3864, %v4072
      %v4074 = vpop.f32.mrb[0].mxu0
      %v4075 = vpop.f32.mrb[0].mxu0
      %v4076 = vadd.f32 %v3864, %v4075
      %v4077 = vpop.f32.mrb[0].mxu0
      %4078 = vmatprep.mubr.bf16.mxu0 0
      %4079 = vmatmul.mubr.bf16.gmra.mrb[0].mxu0 %v3925
      %v4080 = vpop.f32.mrb[0].mxu0
      %v4081 = vadd.f32 %v3864, %v4080
      %v4082 = vpop.f32.mrb[0].mxu0
      %v4083 = vpop.f32.mrb[0].mxu0
      %v4084 = vadd.f32 %v3864, %v4083
      %v4085 = vpop.f32.mrb[0].mxu0
      %4086 = vmatprep.mubr.bf16.mxu0 0
      %4087 = vmatmul.mubr.bf16.gmra.mrb[0].mxu0 %v3928
      %v4088 = vpop.f32.mrb[0].mxu0
      %v4089 = vadd.f32 %v3864, %v4088
      %v4090 = vpop.f32.mrb[0].mxu0
      %v4091 = vpop.f32.mrb[0].mxu0
      %v4092 = vadd.f32 %v3864, %v4091
      %v4093 = vpop.f32.mrb[0].mxu0
      %4094 = vdwg.mxu0
      %v4095 = vmax.f32 %v3969, 0.0
      %v4096 = vmax.f32 %v3972, 0.0
      %v4097 = vmax.f32 %v3977, 0.0
      %v4098 = vmax.f32 %v3980, 0.0
      %v4099 = vmax.f32 %v3985, 0.0
      %v4100 = vmax.f32 %v3988, 0.0
      %v4101 = vmax.f32 %v3993, 0.0
      %v4102 = vmax.f32 %v3996, 0.0
      %v4103 = vmax.f32 %v4001, 0.0
      %v4104 = vmax.f32 %v4004, 0.0
      %v4105 = vmax.f32 %v4009, 0.0
      %v4106 = vmax.f32 %v4012, 0.0
      %v4107 = vmax.f32 %v4017, 0.0
      %v4108 = vmax.f32 %v4020, 0.0
      %v4109 = vmax.f32 %v4025, 0.0
      %v4110 = vmax.f32 %v4028, 0.0
      %v4111 = vmax.f32 %v4033, 0.0
      %v4112 = vmax.f32 %v4036, 0.0
      %v4113 = vmax.f32 %v4041, 0.0
      %v4114 = vmax.f32 %v4044, 0.0
      %v4115 = vmax.f32 %v4049, 0.0
      %v4116 = vmax.f32 %v4052, 0.0
      %v4117 = vmax.f32 %v4057, 0.0
      %v4118 = vmax.f32 %v4060, 0.0
      %v4119 = vmax.f32 %v4065, 0.0
      %v4120 = vmax.f32 %v4068, 0.0
      %v4121 = vmax.f32 %v4073, 0.0
      %v4122 = vmax.f32 %v4076, 0.0
      %v4123 = vmax.f32 %v4081, 0.0
      %v4124 = vmax.f32 %v4084, 0.0
      %v4125 = vmax.f32 %v4089, 0.0
      %v4126 = vmax.f32 %v4092, 0.0
      %v4159 = vrot.slane %v4095, 7
      %v4160 = vrot.slane %v4096, 7
      %v4161 = vsel %vm335, %v4159, %v4160
      %v4162 = vrot.slane %v4097, 7
      %v4163 = vrot.slane %v4098, 7
      %v4164 = vsel %vm335, %v4162, %v4163
      %v4165 = vrot.slane %v4099, 7
      %v4166 = vrot.slane %v4100, 7
      %v4167 = vsel %vm335, %v4165, %v4166
      %v4168 = vrot.slane %v4101, 7
      %v4169 = vrot.slane %v4102, 7
      %v4170 = vsel %vm335, %v4168, %v4169
      %v4171 = vrot.slane %v4103, 7
      %v4172 = vrot.slane %v4104, 7
      %v4173 = vsel %vm335, %v4171, %v4172
      %v4174 = vrot.slane %v4105, 7
      %v4175 = vrot.slane %v4106, 7
      %v4176 = vsel %vm335, %v4174, %v4175
      %v4177 = vrot.slane %v4107, 7
      %v4178 = vrot.slane %v4108, 7
      %v4179 = vsel %vm335, %v4177, %v4178
      %v4180 = vrot.slane %v4109, 7
      %v4181 = vrot.slane %v4110, 7
      %v4182 = vsel %vm335, %v4180, %v4181
      %v4183 = vrot.slane %v4111, 7
      %v4184 = vrot.slane %v4112, 7
      %v4185 = vsel %vm335, %v4183, %v4184
      %v4186 = vrot.slane %v4113, 7
      %v4187 = vrot.slane %v4114, 7
      %v4188 = vsel %vm335, %v4186, %v4187
      %v4189 = vrot.slane %v4115, 7
      %v4190 = vrot.slane %v4116, 7
      %v4191 = vsel %vm335, %v4189, %v4190
      %v4192 = vrot.slane %v4117, 7
      %v4193 = vrot.slane %v4118, 7
      %v4194 = vsel %vm335, %v4192, %v4193
      %v4195 = vrot.slane %v4119, 7
      %v4196 = vrot.slane %v4120, 7
      %v4197 = vsel %vm335, %v4195, %v4196
      %v4198 = vrot.slane %v4121, 7
      %v4199 = vrot.slane %v4122, 7
      %v4200 = vsel %vm335, %v4198, %v4199
      %v4201 = vrot.slane %v4123, 7
      %v4202 = vrot.slane %v4124, 7
      %v4203 = vsel %vm335, %v4201, %v4202
      %v4204 = vrot.slane %v4125, 7
      %v4205 = vrot.slane %v4126, 7
      %v4206 = vsel %vm335, %v4204, %v4205
      %v4255 = vsel %vm335, 0.0, %v4159
      %v4256 = vsel %vm335, 0.0, %v4162
      %v4257 = vsel %vm335, 0.0, %v4165
      %v4258 = vsel %vm335, 0.0, %v4168
      %v4259 = vsel %vm335, 0.0, %v4171
      %v4260 = vsel %vm335, 0.0, %v4174
      %v4261 = vsel %vm335, 0.0, %v4177
      %v4262 = vsel %vm335, 0.0, %v4180
      %v4263 = vsel %vm335, 0.0, %v4183
      %v4264 = vsel %vm335, 0.0, %v4186
      %v4265 = vsel %vm335, 0.0, %v4189
      %v4266 = vsel %vm335, 0.0, %v4192
      %v4267 = vsel %vm335, 0.0, %v4195
      %v4268 = vsel %vm335, 0.0, %v4198
      %v4269 = vsel %vm335, 0.0, %v4201
      %v4270 = vsel %vm335, 0.0, %v4204
      %v4271 = vsel %vm335, %v4160, 0.0
      %v4272 = vsel %vm335, %v4163, 0.0
      %v4273 = vsel %vm335, %v4166, 0.0
      %v4274 = vsel %vm335, %v4169, 0.0
      %v4275 = vsel %vm335, %v4172, 0.0
      %v4276 = vsel %vm335, %v4175, 0.0
      %v4277 = vsel %vm335, %v4178, 0.0
      %v4278 = vsel %vm335, %v4181, 0.0
      %v4279 = vsel %vm335, %v4184, 0.0
      %v4280 = vsel %vm335, %v4187, 0.0
      %v4281 = vsel %vm335, %v4190, 0.0
      %v4282 = vsel %vm335, %v4193, 0.0
      %v4283 = vsel %vm335, %v4196, 0.0
      %v4284 = vsel %vm335, %v4199, 0.0
      %v4285 = vsel %vm335, %v4202, 0.0
      %v4286 = vsel %vm335, %v4205, 0.0
      %v4287 = vpack.c.bf16 %v4161, %v4255
      %v4288 = vpack.c.bf16 %v4271, %v4271
      %v4289 = vpack.c.bf16 %v4164, %v4256
      %v4290 = vpack.c.bf16 %v4272, %v4272
      %v4291 = vpack.c.bf16 %v4167, %v4257
      %v4292 = vpack.c.bf16 %v4273, %v4273
      %v4293 = vpack.c.bf16 %v4170, %v4258
      %v4294 = vpack.c.bf16 %v4274, %v4274
      %v4295 = vpack.c.bf16 %v4173, %v4259
      %v4296 = vpack.c.bf16 %v4275, %v4275
      %v4297 = vpack.c.bf16 %v4176, %v4260
      %v4298 = vpack.c.bf16 %v4276, %v4276
      %v4299 = vpack.c.bf16 %v4179, %v4261
      %v4300 = vpack.c.bf16 %v4277, %v4277
      %v4301 = vpack.c.bf16 %v4182, %v4262
      %v4302 = vpack.c.bf16 %v4278, %v4278
      %v4303 = vpack.c.bf16 %v4185, %v4263
      %v4304 = vpack.c.bf16 %v4279, %v4279
      %v4305 = vpack.c.bf16 %v4188, %v4264
      %v4306 = vpack.c.bf16 %v4280, %v4280
      %v4307 = vpack.c.bf16 %v4191, %v4265
      %v4308 = vpack.c.bf16 %v4281, %v4281
      %v4309 = vpack.c.bf16 %v4194, %v4266
      %v4310 = vpack.c.bf16 %v4282, %v4282
      %v4311 = vpack.c.bf16 %v4197, %v4267
      %v4312 = vpack.c.bf16 %v4283, %v4283
      %v4313 = vpack.c.bf16 %v4200, %v4268
      %v4314 = vpack.c.bf16 %v4284, %v4284
      %v4315 = vpack.c.bf16 %v4203, %v4269
      %v4316 = vpack.c.bf16 %v4285, %v4285
      %v4317 = vpack.c.bf16 %v4206, %v4270
      %v4318 = vpack.c.bf16 %v4286, %v4286
      %v4351 = vunpack.c.l.b16 %v4287
      %v4352 = vunpack.c.h.b16 %v4287
      %v4353 = vunpack.c.l.b16 %v4288
      %v4354 = vunpack.c.l.b16 %v4289
      %v4355 = vunpack.c.h.b16 %v4289
      %v4356 = vunpack.c.l.b16 %v4290
      %v4357 = vunpack.c.l.b16 %v4291
      %v4358 = vunpack.c.h.b16 %v4291
      %v4359 = vunpack.c.l.b16 %v4292
      %v4360 = vunpack.c.l.b16 %v4293
      %v4361 = vunpack.c.h.b16 %v4293
      %v4362 = vunpack.c.l.b16 %v4294
      %v4363 = vunpack.c.l.b16 %v4295
      %v4364 = vunpack.c.h.b16 %v4295
      %v4365 = vunpack.c.l.b16 %v4296
      %v4366 = vunpack.c.l.b16 %v4297
      %v4367 = vunpack.c.h.b16 %v4297
      %v4368 = vunpack.c.l.b16 %v4298
      %v4369 = vunpack.c.l.b16 %v4299
      %v4370 = vunpack.c.h.b16 %v4299
      %v4371 = vunpack.c.l.b16 %v4300
      %v4372 = vunpack.c.l.b16 %v4301
      %v4373 = vunpack.c.h.b16 %v4301
      %v4374 = vunpack.c.l.b16 %v4302
      %v4375 = vunpack.c.l.b16 %v4303
      %v4376 = vunpack.c.h.b16 %v4303
      %v4377 = vunpack.c.l.b16 %v4304
      %v4378 = vunpack.c.l.b16 %v4305
      %v4379 = vunpack.c.h.b16 %v4305
      %v4380 = vunpack.c.l.b16 %v4306
      %v4381 = vunpack.c.l.b16 %v4307
      %v4382 = vunpack.c.h.b16 %v4307
      %v4383 = vunpack.c.l.b16 %v4308
      %v4384 = vunpack.c.l.b16 %v4309
      %v4385 = vunpack.c.h.b16 %v4309
      %v4386 = vunpack.c.l.b16 %v4310
      %v4387 = vunpack.c.l.b16 %v4311
      %v4388 = vunpack.c.h.b16 %v4311
      %v4389 = vunpack.c.l.b16 %v4312
      %v4390 = vunpack.c.l.b16 %v4313
      %v4391 = vunpack.c.h.b16 %v4313
      %v4392 = vunpack.c.l.b16 %v4314
      %v4393 = vunpack.c.l.b16 %v4315
      %v4394 = vunpack.c.h.b16 %v4315
      %v4395 = vunpack.c.l.b16 %v4316
      %v4396 = vunpack.c.l.b16 %v4317
      %v4397 = vunpack.c.h.b16 %v4317
      %v4398 = vunpack.c.l.b16 %v4318
      %v4399 = vpack.c.b16 %v4351, %v4351
      %v4400 = vpack.c.b16 %v4352, %v4352
      %v4401 = vpack.c.b16 %v4353, %v4353
      %v4402 = vpack.c.b16 %v4354, %v4354
      %v4403 = vpack.c.b16 %v4355, %v4355
      %v4404 = vpack.c.b16 %v4356, %v4356
      %v4405 = vpack.c.b16 %v4357, %v4357
      %v4406 = vpack.c.b16 %v4358, %v4358
      %v4407 = vpack.c.b16 %v4359, %v4359
      %v4408 = vpack.c.b16 %v4360, %v4360
      %v4409 = vpack.c.b16 %v4361, %v4361
      %v4410 = vpack.c.b16 %v4362, %v4362
      %v4411 = vpack.c.b16 %v4363, %v4363
      %v4412 = vpack.c.b16 %v4364, %v4364
      %v4413 = vpack.c.b16 %v4365, %v4365
      %v4414 = vpack.c.b16 %v4366, %v4366
      %v4415 = vpack.c.b16 %v4367, %v4367
      %v4416 = vpack.c.b16 %v4368, %v4368
      %v4417 = vpack.c.b16 %v4369, %v4369
      %v4418 = vpack.c.b16 %v4370, %v4370
      %v4419 = vpack.c.b16 %v4371, %v4371
      %v4420 = vpack.c.b16 %v4372, %v4372
      %v4421 = vpack.c.b16 %v4373, %v4373
      %v4422 = vpack.c.b16 %v4374, %v4374
      %v4423 = vpack.c.b16 %v4375, %v4375
      %v4424 = vpack.c.b16 %v4376, %v4376
      %v4425 = vpack.c.b16 %v4377, %v4377
      %v4426 = vpack.c.b16 %v4378, %v4378
      %v4427 = vpack.c.b16 %v4379, %v4379
      %v4428 = vpack.c.b16 %v4380, %v4380
      %v4429 = vpack.c.b16 %v4381, %v4381
      %v4430 = vpack.c.b16 %v4382, %v4382
      %v4431 = vpack.c.b16 %v4383, %v4383
      %v4432 = vpack.c.b16 %v4384, %v4384
      %v4433 = vpack.c.b16 %v4385, %v4385
      %v4434 = vpack.c.b16 %v4386, %v4386
      %v4435 = vpack.c.b16 %v4387, %v4387
      %v4436 = vpack.c.b16 %v4388, %v4388
      %v4437 = vpack.c.b16 %v4389, %v4389
      %v4438 = vpack.c.b16 %v4390, %v4390
      %v4439 = vpack.c.b16 %v4391, %v4391
      %v4440 = vpack.c.b16 %v4392, %v4392
      %v4441 = vpack.c.b16 %v4393, %v4393
      %v4442 = vpack.c.b16 %v4394, %v4394
      %v4443 = vpack.c.b16 %v4395, %v4395
      %v4444 = vpack.c.b16 %v4396, %v4396
      %v4445 = vpack.c.b16 %v4397, %v4397
      %v4446 = vpack.c.b16 %v4398, %v4398
      %4495 = vst.msk [vmem:[%s672] sm:$0xf] %vm226, %v4399
      %4496 = vst.msk [vmem:[%s672 + $0x4] sm:$0xf] %vm226, %v4400
      %4497 = vst.msk [vmem:[%s672 + $0x8] sm:$0x1] %vm229, %v4401
      %4498 = vst.msk [vmem:[%s672 + $0xc] sm:$0xf] %vm226, %v4402
      %4499 = vst.msk [vmem:[%s672 + $0x10] sm:$0xf] %vm226, %v4403
      %4500 = vst.msk [vmem:[%s672 + $0x14] sm:$0x1] %vm229, %v4404
      %4501 = vst.msk [vmem:[%s672 + $0x18] sm:$0xf] %vm226, %v4405
      %4502 = vst.msk [vmem:[%s672 + $0x1c] sm:$0xf] %vm226, %v4406
      %4503 = vst.msk [vmem:[%s672 + $0x20] sm:$0x1] %vm229, %v4407
      %4504 = vst.msk [vmem:[%s672 + $0x24] sm:$0xf] %vm226, %v4408
      %4505 = vst.msk [vmem:[%s672 + $0x28] sm:$0xf] %vm226, %v4409
      %4506 = vst.msk [vmem:[%s672 + $0x2c] sm:$0x1] %vm229, %v4410
      %4507 = vst.msk [vmem:[%s672 + $0x30] sm:$0xf] %vm226, %v4411
      %4508 = vst.msk [vmem:[%s672 + $0x34] sm:$0xf] %vm226, %v4412
      %4509 = vst.msk [vmem:[%s672 + $0x38] sm:$0x1] %vm229, %v4413
      %4510 = vst.msk [vmem:[%s672 + $0x3c] sm:$0xf] %vm226, %v4414
      %4511 = vst.msk [vmem:[%s672 + $0x40] sm:$0xf] %vm226, %v4415
      %4512 = vst.msk [vmem:[%s672 + $0x44] sm:$0x1] %vm229, %v4416
      %4513 = vst.msk [vmem:[%s672 + $0x48] sm:$0xf] %vm226, %v4417
      %4514 = vst.msk [vmem:[%s672 + $0x4c] sm:$0xf] %vm226, %v4418
      %4515 = vst.msk [vmem:[%s672 + $0x50] sm:$0x1] %vm229, %v4419
      %4516 = vst.msk [vmem:[%s672 + $0x54] sm:$0xf] %vm226, %v4420
      %4517 = vst.msk [vmem:[%s672 + $0x58] sm:$0xf] %vm226, %v4421
      %4518 = vst.msk [vmem:[%s672 + $0x5c] sm:$0x1] %vm229, %v4422
      %4519 = vst.msk [vmem:[%s672 + $0x60] sm:$0xf] %vm226, %v4423
      %4520 = vst.msk [vmem:[%s672 + $0x64] sm:$0xf] %vm226, %v4424
      %4521 = vst.msk [vmem:[%s672 + $0x68] sm:$0x1] %vm229, %v4425
      %4522 = vst.msk [vmem:[%s672 + $0x6c] sm:$0xf] %vm226, %v4426
      %4523 = vst.msk [vmem:[%s672 + $0x70] sm:$0xf] %vm226, %v4427
      %4524 = vst.msk [vmem:[%s672 + $0x74] sm:$0x1] %vm229, %v4428
      %4525 = vst.msk [vmem:[%s672 + $0x78] sm:$0xf] %vm226, %v4429
      %4526 = vst.msk [vmem:[%s672 + $0x7c] sm:$0xf] %vm226, %v4430
      %4527 = vst.msk [vmem:[%s672 + $0x80] sm:$0x1] %vm229, %v4431
      %4528 = vst.msk [vmem:[%s672 + $0x84] sm:$0xf] %vm226, %v4432
      %4529 = vst.msk [vmem:[%s672 + $0x88] sm:$0xf] %vm226, %v4433
      %4530 = vst.msk [vmem:[%s672 + $0x8c] sm:$0x1] %vm229, %v4434
      %4531 = vst.msk [vmem:[%s672 + $0x90] sm:$0xf] %vm226, %v4435
      %4532 = vst.msk [vmem:[%s672 + $0x94] sm:$0xf] %vm226, %v4436
      %4533 = vst.msk [vmem:[%s672 + $0x98] sm:$0x1] %vm229, %v4437
      %4534 = vst.msk [vmem:[%s672 + $0x9c] sm:$0xf] %vm226, %v4438
      %4535 = vst.msk [vmem:[%s672 + $0xa0] sm:$0xf] %vm226, %v4439
      %4536 = vst.msk [vmem:[%s672 + $0xa4] sm:$0x1] %vm229, %v4440
      %4537 = vst.msk [vmem:[%s672 + $0xa8] sm:$0xf] %vm226, %v4441
      %4538 = vst.msk [vmem:[%s672 + $0xac] sm:$0xf] %vm226, %v4442
      %4539 = vst.msk [vmem:[%s672 + $0xb0] sm:$0x1] %vm229, %v4443
      %4540 = vst.msk [vmem:[%s672 + $0xb4] sm:$0xf] %vm226, %v4444
      %4541 = vst.msk [vmem:[%s672 + $0xb8] sm:$0xf] %vm226, %v4445
      %4542 = vst.msk [vmem:[%s672 + $0xbc] sm:$0x1] %vm229, %v4446
      %v4543 = vld [vmem:[#allocation2] sm:$0xf]
      %v4544 = vld [vmem:[#allocation2 + $0x4] sm:$0xf]
      %v4545 = vld [vmem:[#allocation2 + $0xc] sm:$0xf]
      %v4546 = vld [vmem:[#allocation2 + $0x10] sm:$0xf]
      %v4547 = vld [vmem:[#allocation2 + $0x18] sm:$0xf]
      %v4548 = vld [vmem:[#allocation2 + $0x1c] sm:$0xf]
      %v4549 = vld [vmem:[#allocation2 + $0x24] sm:$0xf]
      %v4550 = vld [vmem:[#allocation2 + $0x28] sm:$0xf]
      %v4551 = vld [vmem:[#allocation2 + $0x30] sm:$0xf]
      %v4552 = vld [vmem:[#allocation2 + $0x34] sm:$0xf]
      %v4553 = vld [vmem:[#allocation2 + $0x3c] sm:$0xf]
      %v4554 = vld [vmem:[#allocation2 + $0x40] sm:$0xf]
      %v4555 = vld [vmem:[#allocation2 + $0x48] sm:$0xf]
      %v4556 = vld [vmem:[#allocation2 + $0x4c] sm:$0xf]
      %v4557 = vld [vmem:[#allocation2 + $0x54] sm:$0xf]
      %v4558 = vld [vmem:[#allocation2 + $0x58] sm:$0xf]
      %v4559 = vld [vmem:[#allocation2 + $0x60] sm:$0xf]
      %v4560 = vld [vmem:[#allocation2 + $0x64] sm:$0xf]
      %v4561 = vld [vmem:[#allocation2 + $0x6c] sm:$0xf]
      %v4562 = vld [vmem:[#allocation2 + $0x70] sm:$0xf]
      %v4563 = vld [vmem:[#allocation2 + $0x78] sm:$0xf]
      %v4564 = vld [vmem:[#allocation2 + $0x7c] sm:$0xf]
      %v4565 = vld [vmem:[#allocation2 + $0x84] sm:$0xf]
      %v4566 = vld [vmem:[#allocation2 + $0x88] sm:$0xf]
      %v4567 = vld [vmem:[#allocation2 + $0x90] sm:$0xf]
      %v4568 = vld [vmem:[#allocation2 + $0x94] sm:$0xf]
      %v4569 = vld [vmem:[#allocation2 + $0x9c] sm:$0xf]
      %v4570 = vld [vmem:[#allocation2 + $0xa0] sm:$0xf]
      %v4571 = vld [vmem:[#allocation2 + $0xa8] sm:$0xf]
      %v4572 = vld [vmem:[#allocation2 + $0xac] sm:$0xf]
      %v4573 = vld [vmem:[#allocation2 + $0xb4] sm:$0xf]
      %v4574 = vld [vmem:[#allocation2 + $0xb8] sm:$0xf]
      %v4575 = vld [vmem:[#allocation2 + $0x8] sm:$0x1]
      %v4576 = vld [vmem:[#allocation2 + $0x14] sm:$0x1]
      %v4577 = vld [vmem:[#allocation2 + $0x20] sm:$0x1]
      %v4578 = vld [vmem:[#allocation2 + $0x2c] sm:$0x1]
      %v4579 = vld [vmem:[#allocation2 + $0x38] sm:$0x1]
      %v4580 = vld [vmem:[#allocation2 + $0x44] sm:$0x1]
      %v4581 = vld [vmem:[#allocation2 + $0x50] sm:$0x1]
      %v4582 = vld [vmem:[#allocation2 + $0x5c] sm:$0x1]
      %v4583 = vld [vmem:[#allocation2 + $0x68] sm:$0x1]
      %v4584 = vld [vmem:[#allocation2 + $0x74] sm:$0x1]
      %v4585 = vld [vmem:[#allocation2 + $0x80] sm:$0x1]
      %v4586 = vld [vmem:[#allocation2 + $0x8c] sm:$0x1]
      %v4587 = vld [vmem:[#allocation2 + $0x98] sm:$0x1]
      %v4588 = vld [vmem:[#allocation2 + $0xa4] sm:$0x1]
      %v4589 = vld [vmem:[#allocation2 + $0xb0] sm:$0x1]
      %v4590 = vld [vmem:[#allocation2 + $0xbc] sm:$0x1]
      %v4592 = vshrl.u32 %v4543, 16
      %v4594 = vrot.slane %v4592, 4
      %v4595 = vshll.u32 %v4543, 16
      %v4597 = vrot.slane %v4595, 5
      %v4598 = vor.u32 %v4594, %v4597
      %v4599 = vrot.slane %v4598, 4
      %v4601 = vshll.u32 %v4544, 16
      %v4603 = vrot.slane %v4601, 5
      %v4604 = vsel %vm771, %v4599, %v4603
      %v4605 = vshrl.u32 %v4544, 16
      %v4607 = vrot.slane %v4605, 4
      %v4608 = vor.u32 %v4607, %v4603
      %v4609 = vrot.slane %v4608, 4
      %v4611 = vshll.u32 %v4575, 16
      %v4613 = vrot.slane %v4611, 5
      %v4614 = vsel %vm771, %v4609, %v4613
      %v4616 = vshrl.u32 %v4545, 16
      %v4618 = vrot.slane %v4616, 4
      %v4619 = vshll.u32 %v4545, 16
      %v4621 = vrot.slane %v4619, 5
      %v4622 = vor.u32 %v4618, %v4621
      %v4623 = vrot.slane %v4622, 4
      %v4625 = vshll.u32 %v4546, 16
      %v4627 = vrot.slane %v4625, 5
      %v4628 = vsel %vm771, %v4623, %v4627
      %v4629 = vshrl.u32 %v4546, 16
      %v4631 = vrot.slane %v4629, 4
      %v4632 = vor.u32 %v4631, %v4627
      %v4633 = vrot.slane %v4632, 4
      %v4635 = vshll.u32 %v4576, 16
      %v4637 = vrot.slane %v4635, 5
      %v4638 = vsel %vm771, %v4633, %v4637
      %v4640 = vshrl.u32 %v4547, 16
      %v4642 = vrot.slane %v4640, 4
      %v4643 = vshll.u32 %v4547, 16
      %v4645 = vrot.slane %v4643, 5
      %v4646 = vor.u32 %v4642, %v4645
      %v4647 = vrot.slane %v4646, 4
      %v4649 = vshll.u32 %v4548, 16
      %v4651 = vrot.slane %v4649, 5
      %v4652 = vsel %vm771, %v4647, %v4651
      %v4653 = vshrl.u32 %v4548, 16
      %v4655 = vrot.slane %v4653, 4
      %v4656 = vor.u32 %v4655, %v4651
      %v4657 = vrot.slane %v4656, 4
      %v4659 = vshll.u32 %v4577, 16
      %v4661 = vrot.slane %v4659, 5
      %v4662 = vsel %vm771, %v4657, %v4661
      %v4664 = vshrl.u32 %v4549, 16
      %v4666 = vrot.slane %v4664, 4
      %v4667 = vshll.u32 %v4549, 16
      %v4669 = vrot.slane %v4667, 5
      %v4670 = vor.u32 %v4666, %v4669
      %v4671 = vrot.slane %v4670, 4
      %v4673 = vshll.u32 %v4550, 16
      %v4675 = vrot.slane %v4673, 5
      %v4676 = vsel %vm771, %v4671, %v4675
      %v4677 = vshrl.u32 %v4550, 16
      %v4679 = vrot.slane %v4677, 4
      %v4680 = vor.u32 %v4679, %v4675
      %v4681 = vrot.slane %v4680, 4
      %v4683 = vshll.u32 %v4578, 16
      %v4685 = vrot.slane %v4683, 5
      %v4686 = vsel %vm771, %v4681, %v4685
      %v4688 = vshrl.u32 %v4551, 16
      %v4690 = vrot.slane %v4688, 4
      %v4691 = vshll.u32 %v4551, 16
      %v4693 = vrot.slane %v4691, 5
      %v4694 = vor.u32 %v4690, %v4693
      %v4695 = vrot.slane %v4694, 4
      %v4697 = vshll.u32 %v4552, 16
      %v4699 = vrot.slane %v4697, 5
      %v4700 = vsel %vm771, %v4695, %v4699
      %v4701 = vshrl.u32 %v4552, 16
      %v4703 = vrot.slane %v4701, 4
      %v4704 = vor.u32 %v4703, %v4699
      %v4705 = vrot.slane %v4704, 4
      %v4707 = vshll.u32 %v4579, 16
      %v4709 = vrot.slane %v4707, 5
      %v4710 = vsel %vm771, %v4705, %v4709
      %v4712 = vshrl.u32 %v4553, 16
      %v4714 = vrot.slane %v4712, 4
      %v4715 = vshll.u32 %v4553, 16
      %v4717 = vrot.slane %v4715, 5
      %v4718 = vor.u32 %v4714, %v4717
      %v4719 = vrot.slane %v4718, 4
      %v4721 = vshll.u32 %v4554, 16
      %v4723 = vrot.slane %v4721, 5
      %v4724 = vsel %vm771, %v4719, %v4723
      %v4725 = vshrl.u32 %v4554, 16
      %v4727 = vrot.slane %v4725, 4
      %v4728 = vor.u32 %v4727, %v4723
      %v4729 = vrot.slane %v4728, 4
      %v4731 = vshll.u32 %v4580, 16
      %v4733 = vrot.slane %v4731, 5
      %v4734 = vsel %vm771, %v4729, %v4733
      %v4736 = vshrl.u32 %v4555, 16
      %v4738 = vrot.slane %v4736, 4
      %v4739 = vshll.u32 %v4555, 16
      %v4741 = vrot.slane %v4739, 5
      %v4742 = vor.u32 %v4738, %v4741
      %v4743 = vrot.slane %v4742, 4
      %v4745 = vshll.u32 %v4556, 16
      %v4747 = vrot.slane %v4745, 5
      %v4748 = vsel %vm771, %v4743, %v4747
      %v4749 = vshrl.u32 %v4556, 16
      %v4751 = vrot.slane %v4749, 4
      %v4752 = vor.u32 %v4751, %v4747
      %v4753 = vrot.slane %v4752, 4
      %v4755 = vshll.u32 %v4581, 16
      %v4757 = vrot.slane %v4755, 5
      %v4758 = vsel %vm771, %v4753, %v4757
      %v4760 = vshrl.u32 %v4557, 16
      %v4762 = vrot.slane %v4760, 4
      %v4763 = vshll.u32 %v4557, 16
      %v4765 = vrot.slane %v4763, 5
      %v4766 = vor.u32 %v4762, %v4765
      %v4767 = vrot.slane %v4766, 4
      %v4769 = vshll.u32 %v4558, 16
      %v4771 = vrot.slane %v4769, 5
      %v4772 = vsel %vm771, %v4767, %v4771
      %v4773 = vshrl.u32 %v4558, 16
      %v4775 = vrot.slane %v4773, 4
      %v4776 = vor.u32 %v4775, %v4771
      %v4777 = vrot.slane %v4776, 4
      %v4779 = vshll.u32 %v4582, 16
      %v4781 = vrot.slane %v4779, 5
      %v4782 = vsel %vm771, %v4777, %v4781
      %v4784 = vshrl.u32 %v4559, 16
      %v4786 = vrot.slane %v4784, 4
      %v4787 = vshll.u32 %v4559, 16
      %v4789 = vrot.slane %v4787, 5
      %v4790 = vor.u32 %v4786, %v4789
      %v4791 = vrot.slane %v4790, 4
      %v4793 = vshll.u32 %v4560, 16
      %v4795 = vrot.slane %v4793, 5
      %v4796 = vsel %vm771, %v4791, %v4795
      %v4797 = vshrl.u32 %v4560, 16
      %v4799 = vrot.slane %v4797, 4
      %v4800 = vor.u32 %v4799, %v4795
      %v4801 = vrot.slane %v4800, 4
      %v4803 = vshll.u32 %v4583, 16
      %v4805 = vrot.slane %v4803, 5
      %v4806 = vsel %vm771, %v4801, %v4805
      %v4808 = vshrl.u32 %v4561, 16
      %v4810 = vrot.slane %v4808, 4
      %v4811 = vshll.u32 %v4561, 16
      %v4813 = vrot.slane %v4811, 5
      %v4814 = vor.u32 %v4810, %v4813
      %v4815 = vrot.slane %v4814, 4
      %v4817 = vshll.u32 %v4562, 16
      %v4819 = vrot.slane %v4817, 5
      %v4820 = vsel %vm771, %v4815, %v4819
      %v4821 = vshrl.u32 %v4562, 16
      %v4823 = vrot.slane %v4821, 4
      %v4824 = vor.u32 %v4823, %v4819
      %v4825 = vrot.slane %v4824, 4
      %v4827 = vshll.u32 %v4584, 16
      %v4829 = vrot.slane %v4827, 5
      %v4830 = vsel %vm771, %v4825, %v4829
      %v4832 = vshrl.u32 %v4563, 16
      %v4834 = vrot.slane %v4832, 4
      %v4835 = vshll.u32 %v4563, 16
      %v4837 = vrot.slane %v4835, 5
      %v4838 = vor.u32 %v4834, %v4837
      %v4839 = vrot.slane %v4838, 4
      %v4841 = vshll.u32 %v4564, 16
      %v4843 = vrot.slane %v4841, 5
      %v4844 = vsel %vm771, %v4839, %v4843
      %v4845 = vshrl.u32 %v4564, 16
      %v4847 = vrot.slane %v4845, 4
      %v4848 = vor.u32 %v4847, %v4843
      %v4849 = vrot.slane %v4848, 4
      %v4851 = vshll.u32 %v4585, 16
      %v4853 = vrot.slane %v4851, 5
      %v4854 = vsel %vm771, %v4849, %v4853
      %v4856 = vshrl.u32 %v4565, 16
      %v4858 = vrot.slane %v4856, 4
      %v4859 = vshll.u32 %v4565, 16
      %v4861 = vrot.slane %v4859, 5
      %v4862 = vor.u32 %v4858, %v4861
      %v4863 = vrot.slane %v4862, 4
      %v4865 = vshll.u32 %v4566, 16
      %v4867 = vrot.slane %v4865, 5
      %v4868 = vsel %vm771, %v4863, %v4867
      %v4869 = vshrl.u32 %v4566, 16
      %v4871 = vrot.slane %v4869, 4
      %v4872 = vor.u32 %v4871, %v4867
      %v4873 = vrot.slane %v4872, 4
      %v4875 = vshll.u32 %v4586, 16
      %v4877 = vrot.slane %v4875, 5
      %v4878 = vsel %vm771, %v4873, %v4877
      %v4880 = vshrl.u32 %v4567, 16
      %v4882 = vrot.slane %v4880, 4
      %v4883 = vshll.u32 %v4567, 16
      %v4885 = vrot.slane %v4883, 5
      %v4886 = vor.u32 %v4882, %v4885
      %v4887 = vrot.slane %v4886, 4
      %v4889 = vshll.u32 %v4568, 16
      %v4891 = vrot.slane %v4889, 5
      %v4892 = vsel %vm771, %v4887, %v4891
      %v4893 = vshrl.u32 %v4568, 16
      %v4895 = vrot.slane %v4893, 4
      %v4896 = vor.u32 %v4895, %v4891
      %v4897 = vrot.slane %v4896, 4
      %v4899 = vshll.u32 %v4587, 16
      %v4901 = vrot.slane %v4899, 5
      %v4902 = vsel %vm771, %v4897, %v4901
      %v4904 = vshrl.u32 %v4569, 16
      %v4906 = vrot.slane %v4904, 4
      %v4907 = vshll.u32 %v4569, 16
      %v4909 = vrot.slane %v4907, 5
      %v4910 = vor.u32 %v4906, %v4909
      %v4911 = vrot.slane %v4910, 4
      %v4913 = vshll.u32 %v4570, 16
      %v4915 = vrot.slane %v4913, 5
      %v4916 = vsel %vm771, %v4911, %v4915
      %v4917 = vshrl.u32 %v4570, 16
      %v4919 = vrot.slane %v4917, 4
      %v4920 = vor.u32 %v4919, %v4915
      %v4921 = vrot.slane %v4920, 4
      %v4923 = vshll.u32 %v4588, 16
      %v4925 = vrot.slane %v4923, 5
      %v4926 = vsel %vm771, %v4921, %v4925
      %v4928 = vshrl.u32 %v4571, 16
      %v4930 = vrot.slane %v4928, 4
      %v4931 = vshll.u32 %v4571, 16
      %v4933 = vrot.slane %v4931, 5
      %v4934 = vor.u32 %v4930, %v4933
      %v4935 = vrot.slane %v4934, 4
      %v4937 = vshll.u32 %v4572, 16
      %v4939 = vrot.slane %v4937, 5
      %v4940 = vsel %vm771, %v4935, %v4939
      %v4941 = vshrl.u32 %v4572, 16
      %v4943 = vrot.slane %v4941, 4
      %v4944 = vor.u32 %v4943, %v4939
      %v4945 = vrot.slane %v4944, 4
      %v4947 = vshll.u32 %v4589, 16
      %v4949 = vrot.slane %v4947, 5
      %v4950 = vsel %vm771, %v4945, %v4949
      %v4952 = vshrl.u32 %v4573, 16
      %v4954 = vrot.slane %v4952, 4
      %v4955 = vshll.u32 %v4573, 16
      %v4957 = vrot.slane %v4955, 5
      %v4958 = vor.u32 %v4954, %v4957
      %v4959 = vrot.slane %v4958, 4
      %v4961 = vshll.u32 %v4574, 16
      %v4963 = vrot.slane %v4961, 5
      %v4964 = vsel %vm771, %v4959, %v4963
      %v4965 = vshrl.u32 %v4574, 16
      %v4967 = vrot.slane %v4965, 4
      %v4968 = vor.u32 %v4967, %v4963
      %v4969 = vrot.slane %v4968, 4
      %v4971 = vshll.u32 %v4590, 16
      %v4973 = vrot.slane %v4971, 5
      %v4974 = vsel %vm771, %v4969, %v4973
      %v5007 = vunpack.c.l.b16 %v4543
      %v5008 = vunpack.c.l.b16 %v4544
      %v5009 = vunpack.c.l.b16 %v4545
      %v5010 = vunpack.c.l.b16 %v4546
      %v5011 = vunpack.c.l.b16 %v4547
      %v5012 = vunpack.c.l.b16 %v4548
      %v5013 = vunpack.c.l.b16 %v4549
      %v5014 = vunpack.c.l.b16 %v4550
      %v5015 = vunpack.c.l.b16 %v4551
      %v5016 = vunpack.c.l.b16 %v4552
      %v5017 = vunpack.c.l.b16 %v4553
      %v5018 = vunpack.c.l.b16 %v4554
      %v5019 = vunpack.c.l.b16 %v4555
      %v5020 = vunpack.c.l.b16 %v4556
      %v5021 = vunpack.c.l.b16 %v4557
      %v5022 = vunpack.c.l.b16 %v4558
      %v5023 = vunpack.c.l.b16 %v4559
      %v5024 = vunpack.c.l.b16 %v4560
      %v5025 = vunpack.c.l.b16 %v4561
      %v5026 = vunpack.c.l.b16 %v4562
      %v5027 = vunpack.c.l.b16 %v4563
      %v5028 = vunpack.c.l.b16 %v4564
      %v5029 = vunpack.c.l.b16 %v4565
      %v5030 = vunpack.c.l.b16 %v4566
      %v5031 = vunpack.c.l.b16 %v4567
      %v5032 = vunpack.c.l.b16 %v4568
      %v5033 = vunpack.c.l.b16 %v4569
      %v5034 = vunpack.c.l.b16 %v4570
      %v5035 = vunpack.c.l.b16 %v4571
      %v5036 = vunpack.c.l.b16 %v4572
      %v5037 = vunpack.c.l.b16 %v4573
      %v5038 = vunpack.c.l.b16 %v4574
      %v5039 = vpack.c.b16 %v5008, %v5007
      %v5040 = vpack.c.b16 %v5010, %v5009
      %v5041 = vpack.c.b16 %v5012, %v5011
      %v5042 = vpack.c.b16 %v5014, %v5013
      %v5043 = vpack.c.b16 %v5016, %v5015
      %v5044 = vpack.c.b16 %v5018, %v5017
      %v5045 = vpack.c.b16 %v5020, %v5019
      %v5046 = vpack.c.b16 %v5022, %v5021
      %v5047 = vpack.c.b16 %v5024, %v5023
      %v5048 = vpack.c.b16 %v5026, %v5025
      %v5049 = vpack.c.b16 %v5028, %v5027
      %v5050 = vpack.c.b16 %v5030, %v5029
      %v5051 = vpack.c.b16 %v5032, %v5031
      %v5052 = vpack.c.b16 %v5034, %v5033
      %v5053 = vpack.c.b16 %v5036, %v5035
      %v5054 = vpack.c.b16 %v5038, %v5037
      %v5055 = vunpack.c.l.b16 %v4604
      %v5056 = vunpack.c.l.b16 %v4614
      %v5057 = vunpack.c.l.b16 %v4628
      %v5058 = vunpack.c.l.b16 %v4638
      %v5059 = vunpack.c.l.b16 %v4652
      %v5060 = vunpack.c.l.b16 %v4662
      %v5061 = vunpack.c.l.b16 %v4676
      %v5062 = vunpack.c.l.b16 %v4686
      %v5063 = vunpack.c.l.b16 %v4700
      %v5064 = vunpack.c.l.b16 %v4710
      %v5065 = vunpack.c.l.b16 %v4724
      %v5066 = vunpack.c.l.b16 %v4734
      %v5067 = vunpack.c.l.b16 %v4748
      %v5068 = vunpack.c.l.b16 %v4758
      %v5069 = vunpack.c.l.b16 %v4772
      %v5070 = vunpack.c.l.b16 %v4782
      %v5071 = vunpack.c.l.b16 %v4796
      %v5072 = vunpack.c.l.b16 %v4806
      %v5073 = vunpack.c.l.b16 %v4820
      %v5074 = vunpack.c.l.b16 %v4830
      %v5075 = vunpack.c.l.b16 %v4844
      %v5076 = vunpack.c.l.b16 %v4854
      %v5077 = vunpack.c.l.b16 %v4868
      %v5078 = vunpack.c.l.b16 %v4878
      %v5079 = vunpack.c.l.b16 %v4892
      %v5080 = vunpack.c.l.b16 %v4902
      %v5081 = vunpack.c.l.b16 %v4916
      %v5082 = vunpack.c.l.b16 %v4926
      %v5083 = vunpack.c.l.b16 %v4940
      %v5084 = vunpack.c.l.b16 %v4950
      %v5085 = vunpack.c.l.b16 %v4964
      %v5086 = vunpack.c.l.b16 %v4974
      %v5087 = vpack.c.b16 %v5056, %v5055
      %v5088 = vpack.c.b16 %v5058, %v5057
      %v5089 = vpack.c.b16 %v5060, %v5059
      %v5090 = vpack.c.b16 %v5062, %v5061
      %v5091 = vpack.c.b16 %v5064, %v5063
      %v5092 = vpack.c.b16 %v5066, %v5065
      %v5093 = vpack.c.b16 %v5068, %v5067
      %v5094 = vpack.c.b16 %v5070, %v5069
      %v5095 = vpack.c.b16 %v5072, %v5071
      %v5096 = vpack.c.b16 %v5074, %v5073
      %v5097 = vpack.c.b16 %v5076, %v5075
      %v5098 = vpack.c.b16 %v5078, %v5077
      %v5099 = vpack.c.b16 %v5080, %v5079
      %v5100 = vpack.c.b16 %v5082, %v5081
      %v5101 = vpack.c.b16 %v5084, %v5083
      %v5102 = vpack.c.b16 %v5086, %v5085
      %5103 = vrot.lane.b32.xlu0 %v5087, 4
      %v5104 = vpop.permute.xlu0 %5103
      %5105 = vrot.lane.b32.xlu0 %v5088, 4
      %v5106 = vpop.permute.xlu0 %5105
      %5107 = vrot.lane.b32.xlu0 %v5089, 4
      %v5108 = vpop.permute.xlu0 %5107
      %5109 = vrot.lane.b32.xlu0 %v5090, 4
      %v5110 = vpop.permute.xlu0 %5109
      %5111 = vrot.lane.b32.xlu0 %v5091, 4
      %v5112 = vpop.permute.xlu0 %5111
      %5113 = vrot.lane.b32.xlu0 %v5092, 4
      %v5114 = vpop.permute.xlu0 %5113
      %5115 = vrot.lane.b32.xlu0 %v5093, 4
      %v5116 = vpop.permute.xlu0 %5115
      %5117 = vrot.lane.b32.xlu0 %v5094, 4
      %v5118 = vpop.permute.xlu0 %5117
      %5119 = vrot.lane.b32.xlu0 %v5095, 4
      %v5120 = vpop.permute.xlu0 %5119
      %5121 = vrot.lane.b32.xlu0 %v5096, 4
      %v5122 = vpop.permute.xlu0 %5121
      %5123 = vrot.lane.b32.xlu0 %v5097, 4
      %v5124 = vpop.permute.xlu0 %5123
      %5125 = vrot.lane.b32.xlu0 %v5098, 4
      %v5126 = vpop.permute.xlu0 %5125
      %5127 = vrot.lane.b32.xlu0 %v5099, 4
      %v5128 = vpop.permute.xlu0 %5127
      %5129 = vrot.lane.b32.xlu0 %v5100, 4
      %v5130 = vpop.permute.xlu0 %5129
      %5131 = vrot.lane.b32.xlu0 %v5101, 4
      %v5132 = vpop.permute.xlu0 %5131
      %5133 = vrot.lane.b32.xlu0 %v5102, 4
      %v5134 = vpop.permute.xlu0 %5133
      %v5137 = vsel %vm1316, %v5039, %v5104
      %v5141 = vsel %vm1316, %v5040, %v5106
      %v5145 = vsel %vm1316, %v5041, %v5108
      %v5149 = vsel %vm1316, %v5042, %v5110
      %v5153 = vsel %vm1316, %v5043, %v5112
      %v5157 = vsel %vm1316, %v5044, %v5114
      %v5161 = vsel %vm1316, %v5045, %v5116
      %v5165 = vsel %vm1316, %v5046, %v5118
      %v5169 = vsel %vm1316, %v5047, %v5120
      %v5173 = vsel %vm1316, %v5048, %v5122
      %v5177 = vsel %vm1316, %v5049, %v5124
      %v5181 = vsel %vm1316, %v5050, %v5126
      %v5185 = vsel %vm1316, %v5051, %v5128
      %v5189 = vsel %vm1316, %v5052, %v5130
      %v5193 = vsel %vm1316, %v5053, %v5132
      %v5197 = vsel %vm1316, %v5054, %v5134
      %5199 = vst.msk [vmem:[#allocation3] sm:$0xff] %vm1381, %v5137
      %5200 = vst.msk [vmem:[#allocation3 + $0x8] sm:$0xff] %vm1381, %v5141
      %5201 = vst.msk [vmem:[#allocation3 + $0x10] sm:$0xff] %vm1381, %v5145
      %5202 = vst.msk [vmem:[#allocation3 + $0x18] sm:$0xff] %vm1381, %v5149
      %5203 = vst.msk [vmem:[#allocation3 + $0x20] sm:$0xff] %vm1381, %v5153
      %5204 = vst.msk [vmem:[#allocation3 + $0x28] sm:$0xff] %vm1381, %v5157
      %5205 = vst.msk [vmem:[#allocation3 + $0x30] sm:$0xff] %vm1381, %v5161
      %5206 = vst.msk [vmem:[#allocation3 + $0x38] sm:$0xff] %vm1381, %v5165
      %5207 = vst.msk [vmem:[#allocation3 + $0x40] sm:$0xff] %vm1381, %v5169
      %5208 = vst.msk [vmem:[#allocation3 + $0x48] sm:$0xff] %vm1381, %v5173
      %5209 = vst.msk [vmem:[#allocation3 + $0x50] sm:$0xff] %vm1381, %v5177
      %5210 = vst.msk [vmem:[#allocation3 + $0x58] sm:$0xff] %vm1381, %v5181
      %5211 = vst.msk [vmem:[#allocation3 + $0x60] sm:$0xff] %vm1381, %v5185
      %5212 = vst.msk [vmem:[#allocation3 + $0x68] sm:$0xff] %vm1381, %v5189
      %5213 = vst.msk [vmem:[#allocation3 + $0x70] sm:$0xff] %vm1381, %v5193
      %5214 = vst.msk [vmem:[#allocation3 + $0x78] sm:$0xff] %vm1381, %v5197
      %v5215 = vld [vmem:[#allocation2] sm:$0xe]
      %v5216 = vld [vmem:[#allocation2 + $0x4] sm:$0xf]
      %v5217 = vld [vmem:[#allocation2 + $0x8] sm:$0x1]
      %v5218 = vld [vmem:[#allocation2 + $0xc] sm:$0xe]
      %v5219 = vld [vmem:[#allocation2 + $0x10] sm:$0xf]
      %v5220 = vld [vmem:[#allocation2 + $0x14] sm:$0x1]
      %v5221 = vld [vmem:[#allocation2 + $0x18] sm:$0xe]
      %v5222 = vld [vmem:[#allocation2 + $0x1c] sm:$0xf]
      %v5223 = vld [vmem:[#allocation2 + $0x20] sm:$0x1]
      %v5224 = vld [vmem:[#allocation2 + $0x24] sm:$0xe]
      %v5225 = vld [vmem:[#allocation2 + $0x28] sm:$0xf]
      %v5226 = vld [vmem:[#allocation2 + $0x2c] sm:$0x1]
      %v5227 = vld [vmem:[#allocation2 + $0x30] sm:$0xe]
      %v5228 = vld [vmem:[#allocation2 + $0x34] sm:$0xf]
      %v5229 = vld [vmem:[#allocation2 + $0x38] sm:$0x1]
      %v5230 = vld [vmem:[#allocation2 + $0x3c] sm:$0xe]
      %v5231 = vld [vmem:[#allocation2 + $0x40] sm:$0xf]
      %v5232 = vld [vmem:[#allocation2 + $0x44] sm:$0x1]
      %v5233 = vld [vmem:[#allocation2 + $0x48] sm:$0xe]
      %v5234 = vld [vmem:[#allocation2 + $0x4c] sm:$0xf]
      %v5235 = vld [vmem:[#allocation2 + $0x50] sm:$0x1]
      %v5236 = vld [vmem:[#allocation2 + $0x54] sm:$0xe]
      %v5237 = vld [vmem:[#allocation2 + $0x58] sm:$0xf]
      %v5238 = vld [vmem:[#allocation2 + $0x5c] sm:$0x1]
      %v5239 = vld [vmem:[#allocation2 + $0x60] sm:$0xe]
      %v5240 = vld [vmem:[#allocation2 + $0x64] sm:$0xf]
      %v5241 = vld [vmem:[#allocation2 + $0x68] sm:$0x1]
      %v5242 = vld [vmem:[#allocation2 + $0x6c] sm:$0xe]
      %v5243 = vld [vmem:[#allocation2 + $0x70] sm:$0xf]
      %v5244 = vld [vmem:[#allocation2 + $0x74] sm:$0x1]
      %v5245 = vld [vmem:[#allocation2 + $0x78] sm:$0xe]
      %v5246 = vld [vmem:[#allocation2 + $0x7c] sm:$0xf]
      %v5247 = vld [vmem:[#allocation2 + $0x80] sm:$0x1]
      %v5248 = vld [vmem:[#allocation2 + $0x84] sm:$0xe]
      %v5249 = vld [vmem:[#allocation2 + $0x88] sm:$0xf]
      %v5250 = vld [vmem:[#allocation2 + $0x8c] sm:$0x1]
      %v5251 = vld [vmem:[#allocation2 + $0x90] sm:$0xe]
      %v5252 = vld [vmem:[#allocation2 + $0x94] sm:$0xf]
      %v5253 = vld [vmem:[#allocation2 + $0x98] sm:$0x1]
      %v5254 = vld [vmem:[#allocation2 + $0x9c] sm:$0xe]
      %v5255 = vld [vmem:[#allocation2 + $0xa0] sm:$0xf]
      %v5256 = vld [vmem:[#allocation2 + $0xa4] sm:$0x1]
      %v5257 = vld [vmem:[#allocation2 + $0xa8] sm:$0xe]
      %v5258 = vld [vmem:[#allocation2 + $0xac] sm:$0xf]
      %v5259 = vld [vmem:[#allocation2 + $0xb0] sm:$0x1]
      %v5260 = vld [vmem:[#allocation2 + $0xb4] sm:$0xe]
      %v5261 = vld [vmem:[#allocation2 + $0xb8] sm:$0xf]
      %v5262 = vld [vmem:[#allocation2 + $0xbc] sm:$0x1]
      %v5311 = vrot.slane %v5215, 5
      %v5312 = vrot.slane %v5311, 4
      %v5313 = vrot.slane %v5216, 5
      %v5314 = vsel %vm1496, %v5312, %v5313
      %v5315 = vrot.slane %v5313, 4
      %v5316 = vrot.slane %v5217, 5
      %v5317 = vsel %vm1496, %v5315, %v5316
      %v5318 = vrot.slane %v5218, 5
      %v5319 = vrot.slane %v5318, 4
      %v5320 = vrot.slane %v5219, 5
      %v5321 = vsel %vm1496, %v5319, %v5320
      %v5322 = vrot.slane %v5320, 4
      %v5323 = vrot.slane %v5220, 5
      %v5324 = vsel %vm1496, %v5322, %v5323
      %v5325 = vrot.slane %v5221, 5
      %v5326 = vrot.slane %v5325, 4
      %v5327 = vrot.slane %v5222, 5
      %v5328 = vsel %vm1496, %v5326, %v5327
      %v5329 = vrot.slane %v5327, 4
      %v5330 = vrot.slane %v5223, 5
      %v5331 = vsel %vm1496, %v5329, %v5330
      %v5332 = vrot.slane %v5224, 5
      %v5333 = vrot.slane %v5332, 4
      %v5334 = vrot.slane %v5225, 5
      %v5335 = vsel %vm1496, %v5333, %v5334
      %v5336 = vrot.slane %v5334, 4
      %v5337 = vrot.slane %v5226, 5
      %v5338 = vsel %vm1496, %v5336, %v5337
      %v5339 = vrot.slane %v5227, 5
      %v5340 = vrot.slane %v5339, 4
      %v5341 = vrot.slane %v5228, 5
      %v5342 = vsel %vm1496, %v5340, %v5341
      %v5343 = vrot.slane %v5341, 4
      %v5344 = vrot.slane %v5229, 5
      %v5345 = vsel %vm1496, %v5343, %v5344
      %v5346 = vrot.slane %v5230, 5
      %v5347 = vrot.slane %v5346, 4
      %v5348 = vrot.slane %v5231, 5
      %v5349 = vsel %vm1496, %v5347, %v5348
      %v5350 = vrot.slane %v5348, 4
      %v5351 = vrot.slane %v5232, 5
      %v5352 = vsel %vm1496, %v5350, %v5351
      %v5353 = vrot.slane %v5233, 5
      %v5354 = vrot.slane %v5353, 4
      %v5355 = vrot.slane %v5234, 5
      %v5356 = vsel %vm1496, %v5354, %v5355
      %v5357 = vrot.slane %v5355, 4
      %v5358 = vrot.slane %v5235, 5
      %v5359 = vsel %vm1496, %v5357, %v5358
      %v5360 = vrot.slane %v5236, 5
      %v5361 = vrot.slane %v5360, 4
      %v5362 = vrot.slane %v5237, 5
      %v5363 = vsel %vm1496, %v5361, %v5362
      %v5364 = vrot.slane %v5362, 4
      %v5365 = vrot.slane %v5238, 5
      %v5366 = vsel %vm1496, %v5364, %v5365
      %v5367 = vrot.slane %v5239, 5
      %v5368 = vrot.slane %v5367, 4
      %v5369 = vrot.slane %v5240, 5
      %v5370 = vsel %vm1496, %v5368, %v5369
      %v5371 = vrot.slane %v5369, 4
      %v5372 = vrot.slane %v5241, 5
      %v5373 = vsel %vm1496, %v5371, %v5372
      %v5374 = vrot.slane %v5242, 5
      %v5375 = vrot.slane %v5374, 4
      %v5376 = vrot.slane %v5243, 5
      %v5377 = vsel %vm1496, %v5375, %v5376
      %v5378 = vrot.slane %v5376, 4
      %v5379 = vrot.slane %v5244, 5
      %v5380 = vsel %vm1496, %v5378, %v5379
      %v5381 = vrot.slane %v5245, 5
      %v5382 = vrot.slane %v5381, 4
      %v5383 = vrot.slane %v5246, 5
      %v5384 = vsel %vm1496, %v5382, %v5383
      %v5385 = vrot.slane %v5383, 4
      %v5386 = vrot.slane %v5247, 5
      %v5387 = vsel %vm1496, %v5385, %v5386
      %v5388 = vrot.slane %v5248, 5
      %v5389 = vrot.slane %v5388, 4
      %v5390 = vrot.slane %v5249, 5
      %v5391 = vsel %vm1496, %v5389, %v5390
      %v5392 = vrot.slane %v5390, 4
      %v5393 = vrot.slane %v5250, 5
      %v5394 = vsel %vm1496, %v5392, %v5393
      %v5395 = vrot.slane %v5251, 5
      %v5396 = vrot.slane %v5395, 4
      %v5397 = vrot.slane %v5252, 5
      %v5398 = vsel %vm1496, %v5396, %v5397
      %v5399 = vrot.slane %v5397, 4
      %v5400 = vrot.slane %v5253, 5
      %v5401 = vsel %vm1496, %v5399, %v5400
      %v5402 = vrot.slane %v5254, 5
      %v5403 = vrot.slane %v5402, 4
      %v5404 = vrot.slane %v5255, 5
      %v5405 = vsel %vm1496, %v5403, %v5404
      %v5406 = vrot.slane %v5404, 4
      %v5407 = vrot.slane %v5256, 5
      %v5408 = vsel %vm1496, %v5406, %v5407
      %v5409 = vrot.slane %v5257, 5
      %v5410 = vrot.slane %v5409, 4
      %v5411 = vrot.slane %v5258, 5
      %v5412 = vsel %vm1496, %v5410, %v5411
      %v5413 = vrot.slane %v5411, 4
      %v5414 = vrot.slane %v5259, 5
      %v5415 = vsel %vm1496, %v5413, %v5414
      %v5416 = vrot.slane %v5260, 5
      %v5417 = vrot.slane %v5416, 4
      %v5418 = vrot.slane %v5261, 5
      %v5419 = vsel %vm1496, %v5417, %v5418
      %v5420 = vrot.slane %v5418, 4
      %v5421 = vrot.slane %v5262, 5
      %v5422 = vsel %vm1496, %v5420, %v5421
      %v5423 = vld [vmem:[%s672] sm:$0xf]
      %v5424 = vld [vmem:[%s672 + $0x4] sm:$0xf]
      %v5425 = vld [vmem:[%s672 + $0xc] sm:$0xf]
      %v5426 = vld [vmem:[%s672 + $0x10] sm:$0xf]
      %v5427 = vld [vmem:[%s672 + $0x18] sm:$0xf]
      %v5428 = vld [vmem:[%s672 + $0x1c] sm:$0xf]
      %v5429 = vld [vmem:[%s672 + $0x24] sm:$0xf]
      %v5430 = vld [vmem:[%s672 + $0x28] sm:$0xf]
      %v5431 = vld [vmem:[%s672 + $0x30] sm:$0xf]
      %v5432 = vld [vmem:[%s672 + $0x34] sm:$0xf]
      %v5433 = vld [vmem:[%s672 + $0x3c] sm:$0xf]
      %v5434 = vld [vmem:[%s672 + $0x40] sm:$0xf]
      %v5435 = vld [vmem:[%s672 + $0x48] sm:$0xf]
      %v5436 = vld [vmem:[%s672 + $0x4c] sm:$0xf]
      %v5437 = vld [vmem:[%s672 + $0x54] sm:$0xf]
      %v5438 = vld [vmem:[%s672 + $0x58] sm:$0xf]
      %v5439 = vld [vmem:[%s672 + $0x60] sm:$0xf]
      %v5440 = vld [vmem:[%s672 + $0x64] sm:$0xf]
      %v5441 = vld [vmem:[%s672 + $0x6c] sm:$0xf]
      %v5442 = vld [vmem:[%s672 + $0x70] sm:$0xf]
      %v5443 = vld [vmem:[%s672 + $0x78] sm:$0xf]
      %v5444 = vld [vmem:[%s672 + $0x7c] sm:$0xf]
      %v5445 = vld [vmem:[%s672 + $0x84] sm:$0xf]
      %v5446 = vld [vmem:[%s672 + $0x88] sm:$0xf]
      %v5447 = vld [vmem:[%s672 + $0x90] sm:$0xf]
      %v5448 = vld [vmem:[%s672 + $0x94] sm:$0xf]
      %v5449 = vld [vmem:[%s672 + $0x9c] sm:$0xf]
      %v5450 = vld [vmem:[%s672 + $0xa0] sm:$0xf]
      %v5451 = vld [vmem:[%s672 + $0xa8] sm:$0xf]
      %v5452 = vld [vmem:[%s672 + $0xac] sm:$0xf]
      %v5453 = vld [vmem:[%s672 + $0xb4] sm:$0xf]
      %v5454 = vld [vmem:[%s672 + $0xb8] sm:$0xf]
      %v5455 = vunpack.c.l.b16 %v5314
      %v5456 = vunpack.c.l.b16 %v5317
      %v5457 = vunpack.c.l.b16 %v5321
      %v5458 = vunpack.c.l.b16 %v5324
      %v5459 = vunpack.c.l.b16 %v5328
      %v5460 = vunpack.c.l.b16 %v5331
      %v5461 = vunpack.c.l.b16 %v5335
      %v5462 = vunpack.c.l.b16 %v5338
      %v5463 = vunpack.c.l.b16 %v5342
      %v5464 = vunpack.c.l.b16 %v5345
      %v5465 = vunpack.c.l.b16 %v5349
      %v5466 = vunpack.c.l.b16 %v5352
      %v5467 = vunpack.c.l.b16 %v5356
      %v5468 = vunpack.c.l.b16 %v5359
      %v5469 = vunpack.c.l.b16 %v5363
      %v5470 = vunpack.c.l.b16 %v5366
      %v5471 = vunpack.c.l.b16 %v5370
      %v5472 = vunpack.c.l.b16 %v5373
      %v5473 = vunpack.c.l.b16 %v5377
      %v5474 = vunpack.c.l.b16 %v5380
      %v5475 = vunpack.c.l.b16 %v5384
      %v5476 = vunpack.c.l.b16 %v5387
      %v5477 = vunpack.c.l.b16 %v5391
      %v5478 = vunpack.c.l.b16 %v5394
      %v5479 = vunpack.c.l.b16 %v5398
      %v5480 = vunpack.c.l.b16 %v5401
      %v5481 = vunpack.c.l.b16 %v5405
      %v5482 = vunpack.c.l.b16 %v5408
      %v5483 = vunpack.c.l.b16 %v5412
      %v5484 = vunpack.c.l.b16 %v5415
      %v5485 = vunpack.c.l.b16 %v5419
      %v5486 = vunpack.c.l.b16 %v5422
      %v5487 = vpack.c.b16 %v5456, %v5455
      %v5488 = vpack.c.b16 %v5458, %v5457
      %v5489 = vpack.c.b16 %v5460, %v5459
      %v5490 = vpack.c.b16 %v5462, %v5461
      %v5491 = vpack.c.b16 %v5464, %v5463
      %v5492 = vpack.c.b16 %v5466, %v5465
      %v5493 = vpack.c.b16 %v5468, %v5467
      %v5494 = vpack.c.b16 %v5470, %v5469
      %v5495 = vpack.c.b16 %v5472, %v5471
      %v5496 = vpack.c.b16 %v5474, %v5473
      %v5497 = vpack.c.b16 %v5476, %v5475
      %v5498 = vpack.c.b16 %v5478, %v5477
      %v5499 = vpack.c.b16 %v5480, %v5479
      %v5500 = vpack.c.b16 %v5482, %v5481
      %v5501 = vpack.c.b16 %v5484, %v5483
      %v5502 = vpack.c.b16 %v5486, %v5485
      %v5535 = vunpack.c.l.b16 %v5423
      %v5536 = vunpack.c.l.b16 %v5424
      %v5537 = vunpack.c.l.b16 %v5425
      %v5538 = vunpack.c.l.b16 %v5426
      %v5539 = vunpack.c.l.b16 %v5427
      %v5540 = vunpack.c.l.b16 %v5428
      %v5541 = vunpack.c.l.b16 %v5429
      %v5542 = vunpack.c.l.b16 %v5430
      %v5543 = vunpack.c.l.b16 %v5431
      %v5544 = vunpack.c.l.b16 %v5432
      %v5545 = vunpack.c.l.b16 %v5433
      %v5546 = vunpack.c.l.b16 %v5434
      %v5547 = vunpack.c.l.b16 %v5435
      %v5548 = vunpack.c.l.b16 %v5436
      %v5549 = vunpack.c.l.b16 %v5437
      %v5550 = vunpack.c.l.b16 %v5438
      %v5551 = vunpack.c.l.b16 %v5439
      %v5552 = vunpack.c.l.b16 %v5440
      %v5553 = vunpack.c.l.b16 %v5441
      %v5554 = vunpack.c.l.b16 %v5442
      %v5555 = vunpack.c.l.b16 %v5443
      %v5556 = vunpack.c.l.b16 %v5444
      %v5557 = vunpack.c.l.b16 %v5445
      %v5558 = vunpack.c.l.b16 %v5446
      %v5559 = vunpack.c.l.b16 %v5447
      %v5560 = vunpack.c.l.b16 %v5448
      %v5561 = vunpack.c.l.b16 %v5449
      %v5562 = vunpack.c.l.b16 %v5450
      %v5563 = vunpack.c.l.b16 %v5451
      %v5564 = vunpack.c.l.b16 %v5452
      %v5565 = vunpack.c.l.b16 %v5453
      %v5566 = vunpack.c.l.b16 %v5454
      %v5567 = vpack.c.b16 %v5536, %v5535
      %v5568 = vpack.c.b16 %v5538, %v5537
      %v5569 = vpack.c.b16 %v5540, %v5539
      %v5570 = vpack.c.b16 %v5542, %v5541
      %v5571 = vpack.c.b16 %v5544, %v5543
      %v5572 = vpack.c.b16 %v5546, %v5545
      %v5573 = vpack.c.b16 %v5548, %v5547
      %v5574 = vpack.c.b16 %v5550, %v5549
      %v5575 = vpack.c.b16 %v5552, %v5551
      %v5576 = vpack.c.b16 %v5554, %v5553
      %v5577 = vpack.c.b16 %v5556, %v5555
      %v5578 = vpack.c.b16 %v5558, %v5557
      %v5579 = vpack.c.b16 %v5560, %v5559
      %v5580 = vpack.c.b16 %v5562, %v5561
      %v5581 = vpack.c.b16 %v5564, %v5563
      %v5582 = vpack.c.b16 %v5566, %v5565
      %5583 = vrot.lane.b32.xlu0 %v5567, 4
      %v5584 = vpop.permute.xlu0 %5583
      %5585 = vrot.lane.b32.xlu0 %v5568, 4
      %v5586 = vpop.permute.xlu0 %5585
      %5587 = vrot.lane.b32.xlu0 %v5569, 4
      %v5588 = vpop.permute.xlu0 %5587
      %5589 = vrot.lane.b32.xlu0 %v5570, 4
      %v5590 = vpop.permute.xlu0 %5589
      %5591 = vrot.lane.b32.xlu0 %v5571, 4
      %v5592 = vpop.permute.xlu0 %5591
      %5593 = vrot.lane.b32.xlu0 %v5572, 4
      %v5594 = vpop.permute.xlu0 %5593
      %5595 = vrot.lane.b32.xlu0 %v5573, 4
      %v5596 = vpop.permute.xlu0 %5595
      %5597 = vrot.lane.b32.xlu0 %v5574, 4
      %v5598 = vpop.permute.xlu0 %5597
      %5599 = vrot.lane.b32.xlu0 %v5575, 4
      %v5600 = vpop.permute.xlu0 %5599
      %5601 = vrot.lane.b32.xlu0 %v5576, 4
      %v5602 = vpop.permute.xlu0 %5601
      %5603 = vrot.lane.b32.xlu0 %v5577, 4
      %v5604 = vpop.permute.xlu0 %5603
      %5605 = vrot.lane.b32.xlu0 %v5578, 4
      %v5606 = vpop.permute.xlu0 %5605
      %5607 = vrot.lane.b32.xlu0 %v5579, 4
      %v5608 = vpop.permute.xlu0 %5607
      %5609 = vrot.lane.b32.xlu0 %v5580, 4
      %v5610 = vpop.permute.xlu0 %5609
      %5611 = vrot.lane.b32.xlu0 %v5581, 4
      %v5612 = vpop.permute.xlu0 %5611
      %5613 = vrot.lane.b32.xlu0 %v5582, 4
      %v5614 = vpop.permute.xlu0 %5613
      %v5617 = vsel %vm1316, %v5487, %v5584
      %v5620 = vsel %vm1316, %v5488, %v5586
      %v5623 = vsel %vm1316, %v5489, %v5588
      %v5626 = vsel %vm1316, %v5490, %v5590
      %v5629 = vsel %vm1316, %v5491, %v5592
      %v5632 = vsel %vm1316, %v5492, %v5594
      %v5635 = vsel %vm1316, %v5493, %v5596
      %v5638 = vsel %vm1316, %v5494, %v5598
      %v5641 = vsel %vm1316, %v5495, %v5600
      %v5644 = vsel %vm1316, %v5496, %v5602
      %v5647 = vsel %vm1316, %v5497, %v5604
      %v5650 = vsel %vm1316, %v5498, %v5606
      %v5653 = vsel %vm1316, %v5499, %v5608
      %v5656 = vsel %vm1316, %v5500, %v5610
      %v5659 = vsel %vm1316, %v5501, %v5612
      %v5662 = vsel %vm1316, %v5502, %v5614
      %5679 = vrot.lane.b32.xlu0 %v5617, 8
      %v5680 = vpop.permute.xlu0 %5679
      %5681 = vrot.lane.b32.xlu0 %v5620, 8
      %v5682 = vpop.permute.xlu0 %5681
      %5683 = vrot.lane.b32.xlu0 %v5623, 8
      %v5684 = vpop.permute.xlu0 %5683
      %5685 = vrot.lane.b32.xlu0 %v5626, 8
      %v5686 = vpop.permute.xlu0 %5685
      %5687 = vrot.lane.b32.xlu0 %v5629, 8
      %v5688 = vpop.permute.xlu0 %5687
      %5689 = vrot.lane.b32.xlu0 %v5632, 8
      %v5690 = vpop.permute.xlu0 %5689
      %5691 = vrot.lane.b32.xlu0 %v5635, 8
      %v5692 = vpop.permute.xlu0 %5691
      %5693 = vrot.lane.b32.xlu0 %v5638, 8
      %v5694 = vpop.permute.xlu0 %5693
      %5695 = vrot.lane.b32.xlu0 %v5641, 8
      %v5696 = vpop.permute.xlu0 %5695
      %5697 = vrot.lane.b32.xlu0 %v5644, 8
      %v5698 = vpop.permute.xlu0 %5697
      %5699 = vrot.lane.b32.xlu0 %v5647, 8
      %v5700 = vpop.permute.xlu0 %5699
      %5701 = vrot.lane.b32.xlu0 %v5650, 8
      %v5702 = vpop.permute.xlu0 %5701
      %5703 = vrot.lane.b32.xlu0 %v5653, 8
      %v5704 = vpop.permute.xlu0 %5703
      %5705 = vrot.lane.b32.xlu0 %v5656, 8
      %v5706 = vpop.permute.xlu0 %5705
      %5707 = vrot.lane.b32.xlu0 %v5659, 8
      %v5708 = vpop.permute.xlu0 %5707
      %5709 = vrot.lane.b32.xlu0 %v5662, 8
      %v5710 = vpop.permute.xlu0 %5709
      %5727 = vst.msk [vmem:[#allocation3] sm:$0xff] %vm1913, %v5680
      %5728 = vst.msk [vmem:[#allocation3 + $0x8] sm:$0xff] %vm1913, %v5682
      %5729 = vst.msk [vmem:[#allocation3 + $0x10] sm:$0xff] %vm1913, %v5684
      %5730 = vst.msk [vmem:[#allocation3 + $0x18] sm:$0xff] %vm1913, %v5686
      %5731 = vst.msk [vmem:[#allocation3 + $0x20] sm:$0xff] %vm1913, %v5688
      %5732 = vst.msk [vmem:[#allocation3 + $0x28] sm:$0xff] %vm1913, %v5690
      %5733 = vst.msk [vmem:[#allocation3 + $0x30] sm:$0xff] %vm1913, %v5692
      %5734 = vst.msk [vmem:[#allocation3 + $0x38] sm:$0xff] %vm1913, %v5694
      %5735 = vst.msk [vmem:[#allocation3 + $0x40] sm:$0xff] %vm1913, %v5696
      %5736 = vst.msk [vmem:[#allocation3 + $0x48] sm:$0xff] %vm1913, %v5698
      %5737 = vst.msk [vmem:[#allocation3 + $0x50] sm:$0xff] %vm1913, %v5700
      %5738 = vst.msk [vmem:[#allocation3 + $0x58] sm:$0xff] %vm1913, %v5702
      %5739 = vst.msk [vmem:[#allocation3 + $0x60] sm:$0xff] %vm1913, %v5704
      %5740 = vst.msk [vmem:[#allocation3 + $0x68] sm:$0xff] %vm1913, %v5706
      %5741 = vst.msk [vmem:[#allocation3 + $0x70] sm:$0xff] %vm1913, %v5708
      %5742 = vst.msk [vmem:[#allocation3 + $0x78] sm:$0xff] %vm1913, %v5710
      %v5743 = vld [vmem:[%s672] sm:$0xf]
      %v5744 = vld [vmem:[%s672 + $0x4] sm:$0xf]
      %v5745 = vld [vmem:[%s672 + $0x8] sm:$0x1]
      %v5746 = vld [vmem:[%s672 + $0xc] sm:$0xf]
      %v5747 = vld [vmem:[%s672 + $0x10] sm:$0xf]
      %v5748 = vld [vmem:[%s672 + $0x14] sm:$0x1]
      %v5749 = vld [vmem:[%s672 + $0x18] sm:$0xf]
      %v5750 = vld [vmem:[%s672 + $0x1c] sm:$0xf]
      %v5751 = vld [vmem:[%s672 + $0x20] sm:$0x1]
      %v5752 = vld [vmem:[%s672 + $0x24] sm:$0xf]
      %v5753 = vld [vmem:[%s672 + $0x28] sm:$0xf]
      %v5754 = vld [vmem:[%s672 + $0x2c] sm:$0x1]
      %v5755 = vld [vmem:[%s672 + $0x30] sm:$0xf]
      %v5756 = vld [vmem:[%s672 + $0x34] sm:$0xf]
      %v5757 = vld [vmem:[%s672 + $0x38] sm:$0x1]
      %v5758 = vld [vmem:[%s672 + $0x3c] sm:$0xf]
      %v5759 = vld [vmem:[%s672 + $0x40] sm:$0xf]
      %v5760 = vld [vmem:[%s672 + $0x44] sm:$0x1]
      %v5761 = vld [vmem:[%s672 + $0x48] sm:$0xf]
      %v5762 = vld [vmem:[%s672 + $0x4c] sm:$0xf]
      %v5763 = vld [vmem:[%s672 + $0x50] sm:$0x1]
      %v5764 = vld [vmem:[%s672 + $0x54] sm:$0xf]
      %v5765 = vld [vmem:[%s672 + $0x58] sm:$0xf]
      %v5766 = vld [vmem:[%s672 + $0x5c] sm:$0x1]
      %v5767 = vld [vmem:[%s672 + $0x60] sm:$0xf]
      %v5768 = vld [vmem:[%s672 + $0x64] sm:$0xf]
      %v5769 = vld [vmem:[%s672 + $0x68] sm:$0x1]
      %v5770 = vld [vmem:[%s672 + $0x6c] sm:$0xf]
      %v5771 = vld [vmem:[%s672 + $0x70] sm:$0xf]
      %v5772 = vld [vmem:[%s672 + $0x74] sm:$0x1]
      %v5773 = vld [vmem:[%s672 + $0x78] sm:$0xf]
      %v5774 = vld [vmem:[%s672 + $0x7c] sm:$0xf]
      %v5775 = vld [vmem:[%s672 + $0x80] sm:$0x1]
      %v5776 = vld [vmem:[%s672 + $0x84] sm:$0xf]
      %v5777 = vld [vmem:[%s672 + $0x88] sm:$0xf]
      %v5778 = vld [vmem:[%s672 + $0x8c] sm:$0x1]
      %v5779 = vld [vmem:[%s672 + $0x90] sm:$0xf]
      %v5780 = vld [vmem:[%s672 + $0x94] sm:$0xf]
      %v5781 = vld [vmem:[%s672 + $0x98] sm:$0x1]
      %v5782 = vld [vmem:[%s672 + $0x9c] sm:$0xf]
      %v5783 = vld [vmem:[%s672 + $0xa0] sm:$0xf]
      %v5784 = vld [vmem:[%s672 + $0xa4] sm:$0x1]
      %v5785 = vld [vmem:[%s672 + $0xa8] sm:$0xf]
      %v5786 = vld [vmem:[%s672 + $0xac] sm:$0xf]
      %v5787 = vld [vmem:[%s672 + $0xb0] sm:$0x1]
      %v5788 = vld [vmem:[%s672 + $0xb4] sm:$0xf]
      %v5789 = vld [vmem:[%s672 + $0xb8] sm:$0xf]
      %v5790 = vld [vmem:[%s672 + $0xbc] sm:$0x1]
      %v5792 = vshrl.u32 %v5743, 16
      %v5794 = vrot.slane %v5792, 4
      %v5795 = vshll.u32 %v5743, 16
      %v5797 = vrot.slane %v5795, 5
      %v5798 = vor.u32 %v5794, %v5797
      %v5799 = vrot.slane %v5798, 4
      %v5801 = vshll.u32 %v5744, 16
      %v5803 = vrot.slane %v5801, 5
      %v5804 = vsel %vm771, %v5799, %v5803
      %v5805 = vshrl.u32 %v5744, 16
      %v5807 = vrot.slane %v5805, 4
      %v5808 = vor.u32 %v5807, %v5803
      %v5809 = vrot.slane %v5808, 4
      %v5811 = vshll.u32 %v5745, 16
      %v5813 = vrot.slane %v5811, 5
      %v5814 = vsel %vm771, %v5809, %v5813
      %v5816 = vshrl.u32 %v5746, 16
      %v5818 = vrot.slane %v5816, 4
      %v5819 = vshll.u32 %v5746, 16
      %v5821 = vrot.slane %v5819, 5
      %v5822 = vor.u32 %v5818, %v5821
      %v5823 = vrot.slane %v5822, 4
      %v5825 = vshll.u32 %v5747, 16
      %v5827 = vrot.slane %v5825, 5
      %v5828 = vsel %vm771, %v5823, %v5827
      %v5829 = vshrl.u32 %v5747, 16
      %v5831 = vrot.slane %v5829, 4
      %v5832 = vor.u32 %v5831, %v5827
      %v5833 = vrot.slane %v5832, 4
      %v5835 = vshll.u32 %v5748, 16
      %v5837 = vrot.slane %v5835, 5
      %v5838 = vsel %vm771, %v5833, %v5837
      %v5840 = vshrl.u32 %v5749, 16
      %v5842 = vrot.slane %v5840, 4
      %v5843 = vshll.u32 %v5749, 16
      %v5845 = vrot.slane %v5843, 5
      %v5846 = vor.u32 %v5842, %v5845
      %v5847 = vrot.slane %v5846, 4
      %v5849 = vshll.u32 %v5750, 16
      %v5851 = vrot.slane %v5849, 5
      %v5852 = vsel %vm771, %v5847, %v5851
      %v5853 = vshrl.u32 %v5750, 16
      %v5855 = vrot.slane %v5853, 4
      %v5856 = vor.u32 %v5855, %v5851
      %v5857 = vrot.slane %v5856, 4
      %v5859 = vshll.u32 %v5751, 16
      %v5861 = vrot.slane %v5859, 5
      %v5862 = vsel %vm771, %v5857, %v5861
      %v5864 = vshrl.u32 %v5752, 16
      %v5866 = vrot.slane %v5864, 4
      %v5867 = vshll.u32 %v5752, 16
      %v5869 = vrot.slane %v5867, 5
      %v5870 = vor.u32 %v5866, %v5869
      %v5871 = vrot.slane %v5870, 4
      %v5873 = vshll.u32 %v5753, 16
      %v5875 = vrot.slane %v5873, 5
      %v5876 = vsel %vm771, %v5871, %v5875
      %v5877 = vshrl.u32 %v5753, 16
      %v5879 = vrot.slane %v5877, 4
      %v5880 = vor.u32 %v5879, %v5875
      %v5881 = vrot.slane %v5880, 4
      %v5883 = vshll.u32 %v5754, 16
      %v5885 = vrot.slane %v5883, 5
      %v5886 = vsel %vm771, %v5881, %v5885
      %v5888 = vshrl.u32 %v5755, 16
      %v5890 = vrot.slane %v5888, 4
      %v5891 = vshll.u32 %v5755, 16
      %v5893 = vrot.slane %v5891, 5
      %v5894 = vor.u32 %v5890, %v5893
      %v5895 = vrot.slane %v5894, 4
      %v5897 = vshll.u32 %v5756, 16
      %v5899 = vrot.slane %v5897, 5
      %v5900 = vsel %vm771, %v5895, %v5899
      %v5901 = vshrl.u32 %v5756, 16
      %v5903 = vrot.slane %v5901, 4
      %v5904 = vor.u32 %v5903, %v5899
      %v5905 = vrot.slane %v5904, 4
      %v5907 = vshll.u32 %v5757, 16
      %v5909 = vrot.slane %v5907, 5
      %v5910 = vsel %vm771, %v5905, %v5909
      %v5912 = vshrl.u32 %v5758, 16
      %v5914 = vrot.slane %v5912, 4
      %v5915 = vshll.u32 %v5758, 16
      %v5917 = vrot.slane %v5915, 5
      %v5918 = vor.u32 %v5914, %v5917
      %v5919 = vrot.slane %v5918, 4
      %v5921 = vshll.u32 %v5759, 16
      %v5923 = vrot.slane %v5921, 5
      %v5924 = vsel %vm771, %v5919, %v5923
      %v5925 = vshrl.u32 %v5759, 16
      %v5927 = vrot.slane %v5925, 4
      %v5928 = vor.u32 %v5927, %v5923
      %v5929 = vrot.slane %v5928, 4
      %v5931 = vshll.u32 %v5760, 16
      %v5933 = vrot.slane %v5931, 5
      %v5934 = vsel %vm771, %v5929, %v5933
      %v5936 = vshrl.u32 %v5761, 16
      %v5938 = vrot.slane %v5936, 4
      %v5939 = vshll.u32 %v5761, 16
      %v5941 = vrot.slane %v5939, 5
      %v5942 = vor.u32 %v5938, %v5941
      %v5943 = vrot.slane %v5942, 4
      %v5945 = vshll.u32 %v5762, 16
      %v5947 = vrot.slane %v5945, 5
      %v5948 = vsel %vm771, %v5943, %v5947
      %v5949 = vshrl.u32 %v5762, 16
      %v5951 = vrot.slane %v5949, 4
      %v5952 = vor.u32 %v5951, %v5947
      %v5953 = vrot.slane %v5952, 4
      %v5955 = vshll.u32 %v5763, 16
      %v5957 = vrot.slane %v5955, 5
      %v5958 = vsel %vm771, %v5953, %v5957
      %v5960 = vshrl.u32 %v5764, 16
      %v5962 = vrot.slane %v5960, 4
      %v5963 = vshll.u32 %v5764, 16
      %v5965 = vrot.slane %v5963, 5
      %v5966 = vor.u32 %v5962, %v5965
      %v5967 = vrot.slane %v5966, 4
      %v5969 = vshll.u32 %v5765, 16
      %v5971 = vrot.slane %v5969, 5
      %v5972 = vsel %vm771, %v5967, %v5971
      %v5973 = vshrl.u32 %v5765, 16
      %v5975 = vrot.slane %v5973, 4
      %v5976 = vor.u32 %v5975, %v5971
      %v5977 = vrot.slane %v5976, 4
      %v5979 = vshll.u32 %v5766, 16
      %v5981 = vrot.slane %v5979, 5
      %v5982 = vsel %vm771, %v5977, %v5981
      %v5984 = vshrl.u32 %v5767, 16
      %v5986 = vrot.slane %v5984, 4
      %v5987 = vshll.u32 %v5767, 16
      %v5989 = vrot.slane %v5987, 5
      %v5990 = vor.u32 %v5986, %v5989
      %v5991 = vrot.slane %v5990, 4
      %v5993 = vshll.u32 %v5768, 16
      %v5995 = vrot.slane %v5993, 5
      %v5996 = vsel %vm771, %v5991, %v5995
      %v5997 = vshrl.u32 %v5768, 16
      %v5999 = vrot.slane %v5997, 4
      %v6000 = vor.u32 %v5999, %v5995
      %v6001 = vrot.slane %v6000, 4
      %v6003 = vshll.u32 %v5769, 16
      %v6005 = vrot.slane %v6003, 5
      %v6006 = vsel %vm771, %v6001, %v6005
      %v6008 = vshrl.u32 %v5770, 16
      %v6010 = vrot.slane %v6008, 4
      %v6011 = vshll.u32 %v5770, 16
      %v6013 = vrot.slane %v6011, 5
      %v6014 = vor.u32 %v6010, %v6013
      %v6015 = vrot.slane %v6014, 4
      %v6017 = vshll.u32 %v5771, 16
      %v6019 = vrot.slane %v6017, 5
      %v6020 = vsel %vm771, %v6015, %v6019
      %v6021 = vshrl.u32 %v5771, 16
      %v6023 = vrot.slane %v6021, 4
      %v6024 = vor.u32 %v6023, %v6019
      %v6025 = vrot.slane %v6024, 4
      %v6027 = vshll.u32 %v5772, 16
      %v6029 = vrot.slane %v6027, 5
      %v6030 = vsel %vm771, %v6025, %v6029
      %v6032 = vshrl.u32 %v5773, 16
      %v6034 = vrot.slane %v6032, 4
      %v6035 = vshll.u32 %v5773, 16
      %v6037 = vrot.slane %v6035, 5
      %v6038 = vor.u32 %v6034, %v6037
      %v6039 = vrot.slane %v6038, 4
      %v6041 = vshll.u32 %v5774, 16
      %v6043 = vrot.slane %v6041, 5
      %v6044 = vsel %vm771, %v6039, %v6043
      %v6045 = vshrl.u32 %v5774, 16
      %v6047 = vrot.slane %v6045, 4
      %v6048 = vor.u32 %v6047, %v6043
      %v6049 = vrot.slane %v6048, 4
      %v6051 = vshll.u32 %v5775, 16
      %v6053 = vrot.slane %v6051, 5
      %v6054 = vsel %vm771, %v6049, %v6053
      %v6056 = vshrl.u32 %v5776, 16
      %v6058 = vrot.slane %v6056, 4
      %v6059 = vshll.u32 %v5776, 16
      %v6061 = vrot.slane %v6059, 5
      %v6062 = vor.u32 %v6058, %v6061
      %v6063 = vrot.slane %v6062, 4
      %v6065 = vshll.u32 %v5777, 16
      %v6067 = vrot.slane %v6065, 5
      %v6068 = vsel %vm771, %v6063, %v6067
      %v6069 = vshrl.u32 %v5777, 16
      %v6071 = vrot.slane %v6069, 4
      %v6072 = vor.u32 %v6071, %v6067
      %v6073 = vrot.slane %v6072, 4
      %v6075 = vshll.u32 %v5778, 16
      %v6077 = vrot.slane %v6075, 5
      %v6078 = vsel %vm771, %v6073, %v6077
      %v6080 = vshrl.u32 %v5779, 16
      %v6082 = vrot.slane %v6080, 4
      %v6083 = vshll.u32 %v5779, 16
      %v6085 = vrot.slane %v6083, 5
      %v6086 = vor.u32 %v6082, %v6085
      %v6087 = vrot.slane %v6086, 4
      %v6089 = vshll.u32 %v5780, 16
      %v6091 = vrot.slane %v6089, 5
      %v6092 = vsel %vm771, %v6087, %v6091
      %v6093 = vshrl.u32 %v5780, 16
      %v6095 = vrot.slane %v6093, 4
      %v6096 = vor.u32 %v6095, %v6091
      %v6097 = vrot.slane %v6096, 4
      %v6099 = vshll.u32 %v5781, 16
      %v6101 = vrot.slane %v6099, 5
      %v6102 = vsel %vm771, %v6097, %v6101
      %v6104 = vshrl.u32 %v5782, 16
      %v6106 = vrot.slane %v6104, 4
      %v6107 = vshll.u32 %v5782, 16
      %v6109 = vrot.slane %v6107, 5
      %v6110 = vor.u32 %v6106, %v6109
      %v6111 = vrot.slane %v6110, 4
      %v6113 = vshll.u32 %v5783, 16
      %v6115 = vrot.slane %v6113, 5
      %v6116 = vsel %vm771, %v6111, %v6115
      %v6117 = vshrl.u32 %v5783, 16
      %v6119 = vrot.slane %v6117, 4
      %v6120 = vor.u32 %v6119, %v6115
      %v6121 = vrot.slane %v6120, 4
      %v6123 = vshll.u32 %v5784, 16
      %v6125 = vrot.slane %v6123, 5
      %v6126 = vsel %vm771, %v6121, %v6125
      %v6128 = vshrl.u32 %v5785, 16
      %v6130 = vrot.slane %v6128, 4
      %v6131 = vshll.u32 %v5785, 16
      %v6133 = vrot.slane %v6131, 5
      %v6134 = vor.u32 %v6130, %v6133
      %v6135 = vrot.slane %v6134, 4
      %v6137 = vshll.u32 %v5786, 16
      %v6139 = vrot.slane %v6137, 5
      %v6140 = vsel %vm771, %v6135, %v6139
      %v6141 = vshrl.u32 %v5786, 16
      %v6143 = vrot.slane %v6141, 4
      %v6144 = vor.u32 %v6143, %v6139
      %v6145 = vrot.slane %v6144, 4
      %v6147 = vshll.u32 %v5787, 16
      %v6149 = vrot.slane %v6147, 5
      %v6150 = vsel %vm771, %v6145, %v6149
      %v6152 = vshrl.u32 %v5788, 16
      %v6154 = vrot.slane %v6152, 4
      %v6155 = vshll.u32 %v5788, 16
      %v6157 = vrot.slane %v6155, 5
      %v6158 = vor.u32 %v6154, %v6157
      %v6159 = vrot.slane %v6158, 4
      %v6161 = vshll.u32 %v5789, 16
      %v6163 = vrot.slane %v6161, 5
      %v6164 = vsel %vm771, %v6159, %v6163
      %v6165 = vshrl.u32 %v5789, 16
      %v6167 = vrot.slane %v6165, 4
      %v6168 = vor.u32 %v6167, %v6163
      %v6169 = vrot.slane %v6168, 4
      %v6171 = vshll.u32 %v5790, 16
      %v6173 = vrot.slane %v6171, 5
      %v6174 = vsel %vm771, %v6169, %v6173
      %v6175 = vld [vmem:[%s672] sm:$0xe]
      %v6176 = vld [vmem:[%s672 + $0xc] sm:$0xe]
      %v6177 = vld [vmem:[%s672 + $0x18] sm:$0xe]
      %v6178 = vld [vmem:[%s672 + $0x24] sm:$0xe]
      %v6179 = vld [vmem:[%s672 + $0x30] sm:$0xe]
      %v6180 = vld [vmem:[%s672 + $0x3c] sm:$0xe]
      %v6181 = vld [vmem:[%s672 + $0x48] sm:$0xe]
      %v6182 = vld [vmem:[%s672 + $0x54] sm:$0xe]
      %v6183 = vld [vmem:[%s672 + $0x60] sm:$0xe]
      %v6184 = vld [vmem:[%s672 + $0x6c] sm:$0xe]
      %v6185 = vld [vmem:[%s672 + $0x78] sm:$0xe]
      %v6186 = vld [vmem:[%s672 + $0x84] sm:$0xe]
      %v6187 = vld [vmem:[%s672 + $0x90] sm:$0xe]
      %v6188 = vld [vmem:[%s672 + $0x9c] sm:$0xe]
      %v6189 = vld [vmem:[%s672 + $0xa8] sm:$0xe]
      %v6190 = vld [vmem:[%s672 + $0xb4] sm:$0xe]
      %v6239 = vrot.slane %v6175, 5
      %v6240 = vrot.slane %v6239, 4
      %v6241 = vrot.slane %v5744, 5
      %v6242 = vsel %vm1496, %v6240, %v6241
      %v6243 = vrot.slane %v6241, 4
      %v6244 = vrot.slane %v5745, 5
      %v6245 = vsel %vm1496, %v6243, %v6244
      %v6246 = vrot.slane %v6176, 5
      %v6247 = vrot.slane %v6246, 4
      %v6248 = vrot.slane %v5747, 5
      %v6249 = vsel %vm1496, %v6247, %v6248
      %v6250 = vrot.slane %v6248, 4
      %v6251 = vrot.slane %v5748, 5
      %v6252 = vsel %vm1496, %v6250, %v6251
      %v6253 = vrot.slane %v6177, 5
      %v6254 = vrot.slane %v6253, 4
      %v6255 = vrot.slane %v5750, 5
      %v6256 = vsel %vm1496, %v6254, %v6255
      %v6257 = vrot.slane %v6255, 4
      %v6258 = vrot.slane %v5751, 5
      %v6259 = vsel %vm1496, %v6257, %v6258
      %v6260 = vrot.slane %v6178, 5
      %v6261 = vrot.slane %v6260, 4
      %v6262 = vrot.slane %v5753, 5
      %v6263 = vsel %vm1496, %v6261, %v6262
      %v6264 = vrot.slane %v6262, 4
      %v6265 = vrot.slane %v5754, 5
      %v6266 = vsel %vm1496, %v6264, %v6265
      %v6267 = vrot.slane %v6179, 5
      %v6268 = vrot.slane %v6267, 4
      %v6269 = vrot.slane %v5756, 5
      %v6270 = vsel %vm1496, %v6268, %v6269
      %v6271 = vrot.slane %v6269, 4
      %v6272 = vrot.slane %v5757, 5
      %v6273 = vsel %vm1496, %v6271, %v6272
      %v6274 = vrot.slane %v6180, 5
      %v6275 = vrot.slane %v6274, 4
      %v6276 = vrot.slane %v5759, 5
      %v6277 = vsel %vm1496, %v6275, %v6276
      %v6278 = vrot.slane %v6276, 4
      %v6279 = vrot.slane %v5760, 5
      %v6280 = vsel %vm1496, %v6278, %v6279
      %v6281 = vrot.slane %v6181, 5
      %v6282 = vrot.slane %v6281, 4
      %v6283 = vrot.slane %v5762, 5
      %v6284 = vsel %vm1496, %v6282, %v6283
      %v6285 = vrot.slane %v6283, 4
      %v6286 = vrot.slane %v5763, 5
      %v6287 = vsel %vm1496, %v6285, %v6286
      %v6288 = vrot.slane %v6182, 5
      %v6289 = vrot.slane %v6288, 4
      %v6290 = vrot.slane %v5765, 5
      %v6291 = vsel %vm1496, %v6289, %v6290
      %v6292 = vrot.slane %v6290, 4
      %v6293 = vrot.slane %v5766, 5
      %v6294 = vsel %vm1496, %v6292, %v6293
      %v6295 = vrot.slane %v6183, 5
      %v6296 = vrot.slane %v6295, 4
      %v6297 = vrot.slane %v5768, 5
      %v6298 = vsel %vm1496, %v6296, %v6297
      %v6299 = vrot.slane %v6297, 4
      %v6300 = vrot.slane %v5769, 5
      %v6301 = vsel %vm1496, %v6299, %v6300
      %v6302 = vrot.slane %v6184, 5
      %v6303 = vrot.slane %v6302, 4
      %v6304 = vrot.slane %v5771, 5
      %v6305 = vsel %vm1496, %v6303, %v6304
      %v6306 = vrot.slane %v6304, 4
      %v6307 = vrot.slane %v5772, 5
      %v6308 = vsel %vm1496, %v6306, %v6307
      %v6309 = vrot.slane %v6185, 5
      %v6310 = vrot.slane %v6309, 4
      %v6311 = vrot.slane %v5774, 5
      %v6312 = vsel %vm1496, %v6310, %v6311
      %v6313 = vrot.slane %v6311, 4
      %v6314 = vrot.slane %v5775, 5
      %v6315 = vsel %vm1496, %v6313, %v6314
      %v6316 = vrot.slane %v6186, 5
      %v6317 = vrot.slane %v6316, 4
      %v6318 = vrot.slane %v5777, 5
      %v6319 = vsel %vm1496, %v6317, %v6318
      %v6320 = vrot.slane %v6318, 4
      %v6321 = vrot.slane %v5778, 5
      %v6322 = vsel %vm1496, %v6320, %v6321
      %v6323 = vrot.slane %v6187, 5
      %v6324 = vrot.slane %v6323, 4
      %v6325 = vrot.slane %v5780, 5
      %v6326 = vsel %vm1496, %v6324, %v6325
      %v6327 = vrot.slane %v6325, 4
      %v6328 = vrot.slane %v5781, 5
      %v6329 = vsel %vm1496, %v6327, %v6328
      %v6330 = vrot.slane %v6188, 5
      %v6331 = vrot.slane %v6330, 4
      %v6332 = vrot.slane %v5783, 5
      %v6333 = vsel %vm1496, %v6331, %v6332
      %v6334 = vrot.slane %v6332, 4
      %v6335 = vrot.slane %v5784, 5
      %v6336 = vsel %vm1496, %v6334, %v6335
      %v6337 = vrot.slane %v6189, 5
      %v6338 = vrot.slane %v6337, 4
      %v6339 = vrot.slane %v5786, 5
      %v6340 = vsel %vm1496, %v6338, %v6339
      %v6341 = vrot.slane %v6339, 4
      %v6342 = vrot.slane %v5787, 5
      %v6343 = vsel %vm1496, %v6341, %v6342
      %v6344 = vrot.slane %v6190, 5
      %v6345 = vrot.slane %v6344, 4
      %v6346 = vrot.slane %v5789, 5
      %v6347 = vsel %vm1496, %v6345, %v6346
      %v6348 = vrot.slane %v6346, 4
      %v6349 = vrot.slane %v5790, 5
      %v6350 = vsel %vm1496, %v6348, %v6349
      %v6351 = vunpack.c.l.b16 %v5804
      %v6352 = vunpack.c.l.b16 %v5814
      %v6353 = vunpack.c.l.b16 %v5828
      %v6354 = vunpack.c.l.b16 %v5838
      %v6355 = vunpack.c.l.b16 %v5852
      %v6356 = vunpack.c.l.b16 %v5862
      %v6357 = vunpack.c.l.b16 %v5876
      %v6358 = vunpack.c.l.b16 %v5886
      %v6359 = vunpack.c.l.b16 %v5900
      %v6360 = vunpack.c.l.b16 %v5910
      %v6361 = vunpack.c.l.b16 %v5924
      %v6362 = vunpack.c.l.b16 %v5934
      %v6363 = vunpack.c.l.b16 %v5948
      %v6364 = vunpack.c.l.b16 %v5958
      %v6365 = vunpack.c.l.b16 %v5972
      %v6366 = vunpack.c.l.b16 %v5982
      %v6367 = vunpack.c.l.b16 %v5996
      %v6368 = vunpack.c.l.b16 %v6006
      %v6369 = vunpack.c.l.b16 %v6020
      %v6370 = vunpack.c.l.b16 %v6030
      %v6371 = vunpack.c.l.b16 %v6044
      %v6372 = vunpack.c.l.b16 %v6054
      %v6373 = vunpack.c.l.b16 %v6068
      %v6374 = vunpack.c.l.b16 %v6078
      %v6375 = vunpack.c.l.b16 %v6092
      %v6376 = vunpack.c.l.b16 %v6102
      %v6377 = vunpack.c.l.b16 %v6116
      %v6378 = vunpack.c.l.b16 %v6126
      %v6379 = vunpack.c.l.b16 %v6140
      %v6380 = vunpack.c.l.b16 %v6150
      %v6381 = vunpack.c.l.b16 %v6164
      %v6382 = vunpack.c.l.b16 %v6174
      %v6383 = vpack.c.b16 %v6352, %v6351
      %v6384 = vpack.c.b16 %v6354, %v6353
      %v6385 = vpack.c.b16 %v6356, %v6355
      %v6386 = vpack.c.b16 %v6358, %v6357
      %v6387 = vpack.c.b16 %v6360, %v6359
      %v6388 = vpack.c.b16 %v6362, %v6361
      %v6389 = vpack.c.b16 %v6364, %v6363
      %v6390 = vpack.c.b16 %v6366, %v6365
      %v6391 = vpack.c.b16 %v6368, %v6367
      %v6392 = vpack.c.b16 %v6370, %v6369
      %v6393 = vpack.c.b16 %v6372, %v6371
      %v6394 = vpack.c.b16 %v6374, %v6373
      %v6395 = vpack.c.b16 %v6376, %v6375
      %v6396 = vpack.c.b16 %v6378, %v6377
      %v6397 = vpack.c.b16 %v6380, %v6379
      %v6398 = vpack.c.b16 %v6382, %v6381
      %v6399 = vunpack.c.l.b16 %v6242
      %v6400 = vunpack.c.l.b16 %v6245
      %v6401 = vunpack.c.l.b16 %v6249
      %v6402 = vunpack.c.l.b16 %v6252
      %v6403 = vunpack.c.l.b16 %v6256
      %v6404 = vunpack.c.l.b16 %v6259
      %v6405 = vunpack.c.l.b16 %v6263
      %v6406 = vunpack.c.l.b16 %v6266
      %v6407 = vunpack.c.l.b16 %v6270
      %v6408 = vunpack.c.l.b16 %v6273
      %v6409 = vunpack.c.l.b16 %v6277
      %v6410 = vunpack.c.l.b16 %v6280
      %v6411 = vunpack.c.l.b16 %v6284
      %v6412 = vunpack.c.l.b16 %v6287
      %v6413 = vunpack.c.l.b16 %v6291
      %v6414 = vunpack.c.l.b16 %v6294
      %v6415 = vunpack.c.l.b16 %v6298
      %v6416 = vunpack.c.l.b16 %v6301
      %v6417 = vunpack.c.l.b16 %v6305
      %v6418 = vunpack.c.l.b16 %v6308
      %v6419 = vunpack.c.l.b16 %v6312
      %v6420 = vunpack.c.l.b16 %v6315
      %v6421 = vunpack.c.l.b16 %v6319
      %v6422 = vunpack.c.l.b16 %v6322
      %v6423 = vunpack.c.l.b16 %v6326
      %v6424 = vunpack.c.l.b16 %v6329
      %v6425 = vunpack.c.l.b16 %v6333
      %v6426 = vunpack.c.l.b16 %v6336
      %v6427 = vunpack.c.l.b16 %v6340
      %v6428 = vunpack.c.l.b16 %v6343
      %v6429 = vunpack.c.l.b16 %v6347
      %v6430 = vunpack.c.l.b16 %v6350
      %v6431 = vpack.c.b16 %v6400, %v6399
      %v6432 = vpack.c.b16 %v6402, %v6401
      %v6433 = vpack.c.b16 %v6404, %v6403
      %v6434 = vpack.c.b16 %v6406, %v6405
      %v6435 = vpack.c.b16 %v6408, %v6407
      %v6436 = vpack.c.b16 %v6410, %v6409
      %v6437 = vpack.c.b16 %v6412, %v6411
      %v6438 = vpack.c.b16 %v6414, %v6413
      %v6439 = vpack.c.b16 %v6416, %v6415
      %v6440 = vpack.c.b16 %v6418, %v6417
      %v6441 = vpack.c.b16 %v6420, %v6419
      %v6442 = vpack.c.b16 %v6422, %v6421
      %v6443 = vpack.c.b16 %v6424, %v6423
      %v6444 = vpack.c.b16 %v6426, %v6425
      %v6445 = vpack.c.b16 %v6428, %v6427
      %v6446 = vpack.c.b16 %v6430, %v6429
      %6447 = vrot.lane.b32.xlu0 %v6431, 4
      %v6448 = vpop.permute.xlu0 %6447
      %6449 = vrot.lane.b32.xlu0 %v6432, 4
      %v6450 = vpop.permute.xlu0 %6449
      %6451 = vrot.lane.b32.xlu0 %v6433, 4
      %v6452 = vpop.permute.xlu0 %6451
      %6453 = vrot.lane.b32.xlu0 %v6434, 4
      %v6454 = vpop.permute.xlu0 %6453
      %6455 = vrot.lane.b32.xlu0 %v6435, 4
      %v6456 = vpop.permute.xlu0 %6455
      %6457 = vrot.lane.b32.xlu0 %v6436, 4
      %v6458 = vpop.permute.xlu0 %6457
      %6459 = vrot.lane.b32.xlu0 %v6437, 4
      %v6460 = vpop.permute.xlu0 %6459
      %6461 = vrot.lane.b32.xlu0 %v6438, 4
      %v6462 = vpop.permute.xlu0 %6461
      %6463 = vrot.lane.b32.xlu0 %v6439, 4
      %v6464 = vpop.permute.xlu0 %6463
      %6465 = vrot.lane.b32.xlu0 %v6440, 4
      %v6466 = vpop.permute.xlu0 %6465
      %6467 = vrot.lane.b32.xlu0 %v6441, 4
      %v6468 = vpop.permute.xlu0 %6467
      %6469 = vrot.lane.b32.xlu0 %v6442, 4
      %v6470 = vpop.permute.xlu0 %6469
      %6471 = vrot.lane.b32.xlu0 %v6443, 4
      %v6472 = vpop.permute.xlu0 %6471
      %6473 = vrot.lane.b32.xlu0 %v6444, 4
      %v6474 = vpop.permute.xlu0 %6473
      %6475 = vrot.lane.b32.xlu0 %v6445, 4
      %v6476 = vpop.permute.xlu0 %6475
      %6477 = vrot.lane.b32.xlu0 %v6446, 4
      %v6478 = vpop.permute.xlu0 %6477
      %v6481 = vsel %vm1316, %v6383, %v6448
      %v6484 = vsel %vm1316, %v6384, %v6450
      %v6487 = vsel %vm1316, %v6385, %v6452
      %v6490 = vsel %vm1316, %v6386, %v6454
      %v6493 = vsel %vm1316, %v6387, %v6456
      %v6496 = vsel %vm1316, %v6388, %v6458
      %v6499 = vsel %vm1316, %v6389, %v6460
      %v6502 = vsel %vm1316, %v6390, %v6462
      %v6505 = vsel %vm1316, %v6391, %v6464
      %v6508 = vsel %vm1316, %v6392, %v6466
      %v6511 = vsel %vm1316, %v6393, %v6468
      %v6514 = vsel %vm1316, %v6394, %v6470
      %v6517 = vsel %vm1316, %v6395, %v6472
      %v6520 = vsel %vm1316, %v6396, %v6474
      %v6523 = vsel %vm1316, %v6397, %v6476
      %v6526 = vsel %vm1316, %v6398, %v6478
      %6543 = vrot.lane.b32.xlu0 %v6481, 16
      %v6544 = vpop.permute.xlu0 %6543
      %6545 = vrot.lane.b32.xlu0 %v6484, 16
      %v6546 = vpop.permute.xlu0 %6545
      %6547 = vrot.lane.b32.xlu0 %v6487, 16
      %v6548 = vpop.permute.xlu0 %6547
      %6549 = vrot.lane.b32.xlu0 %v6490, 16
      %v6550 = vpop.permute.xlu0 %6549
      %6551 = vrot.lane.b32.xlu0 %v6493, 16
      %v6552 = vpop.permute.xlu0 %6551
      %6553 = vrot.lane.b32.xlu0 %v6496, 16
      %v6554 = vpop.permute.xlu0 %6553
      %6555 = vrot.lane.b32.xlu0 %v6499, 16
      %v6556 = vpop.permute.xlu0 %6555
      %6557 = vrot.lane.b32.xlu0 %v6502, 16
      %v6558 = vpop.permute.xlu0 %6557
      %6559 = vrot.lane.b32.xlu0 %v6505, 16
      %v6560 = vpop.permute.xlu0 %6559
      %6561 = vrot.lane.b32.xlu0 %v6508, 16
      %v6562 = vpop.permute.xlu0 %6561
      %6563 = vrot.lane.b32.xlu0 %v6511, 16
      %v6564 = vpop.permute.xlu0 %6563
      %6565 = vrot.lane.b32.xlu0 %v6514, 16
      %v6566 = vpop.permute.xlu0 %6565
      %6567 = vrot.lane.b32.xlu0 %v6517, 16
      %v6568 = vpop.permute.xlu0 %6567
      %6569 = vrot.lane.b32.xlu0 %v6520, 16
      %v6570 = vpop.permute.xlu0 %6569
      %6571 = vrot.lane.b32.xlu0 %v6523, 16
      %v6572 = vpop.permute.xlu0 %6571
      %6573 = vrot.lane.b32.xlu0 %v6526, 16
      %v6574 = vpop.permute.xlu0 %6573
      %6591 = vst.msk [vmem:[#allocation3] sm:$0xff] %vm2778, %v6544
      %6592 = vst.msk [vmem:[#allocation3 + $0x8] sm:$0xff] %vm2778, %v6546
      %6593 = vst.msk [vmem:[#allocation3 + $0x10] sm:$0xff] %vm2778, %v6548
      %6594 = vst.msk [vmem:[#allocation3 + $0x18] sm:$0xff] %vm2778, %v6550
      %6595 = vst.msk [vmem:[#allocation3 + $0x20] sm:$0xff] %vm2778, %v6552
      %6596 = vst.msk [vmem:[#allocation3 + $0x28] sm:$0xff] %vm2778, %v6554
      %6597 = vst.msk [vmem:[#allocation3 + $0x30] sm:$0xff] %vm2778, %v6556
      %6598 = vst.msk [vmem:[#allocation3 + $0x38] sm:$0xff] %vm2778, %v6558
      %6599 = vst.msk [vmem:[#allocation3 + $0x40] sm:$0xff] %vm2778, %v6560
      %6600 = vst.msk [vmem:[#allocation3 + $0x48] sm:$0xff] %vm2778, %v6562
      %6601 = vst.msk [vmem:[#allocation3 + $0x50] sm:$0xff] %vm2778, %v6564
      %6602 = vst.msk [vmem:[#allocation3 + $0x58] sm:$0xff] %vm2778, %v6566
      %6603 = vst.msk [vmem:[#allocation3 + $0x60] sm:$0xff] %vm2778, %v6568
      %6604 = vst.msk [vmem:[#allocation3 + $0x68] sm:$0xff] %vm2778, %v6570
      %6605 = vst.msk [vmem:[#allocation3 + $0x70] sm:$0xff] %vm2778, %v6572
      %6606 = vst.msk [vmem:[#allocation3 + $0x78] sm:$0xff] %vm2778, %v6574
      %v6607 = vld [vmem:[%s2795] sm:$0xf]
      %v6608 = vld [vmem:[%s2795 + $0x4] sm:$0xf]
      %v6609 = vld [vmem:[%s2795 + $0xc] sm:$0xf]
      %v6610 = vld [vmem:[%s2795 + $0x10] sm:$0xf]
      %v6611 = vld [vmem:[%s2795 + $0x18] sm:$0xf]
      %v6612 = vld [vmem:[%s2795 + $0x1c] sm:$0xf]
      %v6613 = vld [vmem:[%s2795 + $0x24] sm:$0xf]
      %v6614 = vld [vmem:[%s2795 + $0x28] sm:$0xf]
      %v6615 = vld [vmem:[%s2795 + $0x30] sm:$0xf]
      %v6616 = vld [vmem:[%s2795 + $0x34] sm:$0xf]
      %v6617 = vld [vmem:[%s2795 + $0x3c] sm:$0xf]
      %v6618 = vld [vmem:[%s2795 + $0x40] sm:$0xf]
      %v6619 = vld [vmem:[%s2795 + $0x48] sm:$0xf]
      %v6620 = vld [vmem:[%s2795 + $0x4c] sm:$0xf]
      %v6621 = vld [vmem:[%s2795 + $0x54] sm:$0xf]
      %v6622 = vld [vmem:[%s2795 + $0x58] sm:$0xf]
      %v6623 = vld [vmem:[%s2795 + $0x60] sm:$0xf]
      %v6624 = vld [vmem:[%s2795 + $0x64] sm:$0xf]
      %v6625 = vld [vmem:[%s2795 + $0x6c] sm:$0xf]
      %v6626 = vld [vmem:[%s2795 + $0x70] sm:$0xf]
      %v6627 = vld [vmem:[%s2795 + $0x78] sm:$0xf]
      %v6628 = vld [vmem:[%s2795 + $0x7c] sm:$0xf]
      %v6629 = vld [vmem:[%s2795 + $0x84] sm:$0xf]
      %v6630 = vld [vmem:[%s2795 + $0x88] sm:$0xf]
      %v6631 = vld [vmem:[%s2795 + $0x90] sm:$0xf]
      %v6632 = vld [vmem:[%s2795 + $0x94] sm:$0xf]
      %v6633 = vld [vmem:[%s2795 + $0x9c] sm:$0xf]
      %v6634 = vld [vmem:[%s2795 + $0xa0] sm:$0xf]
      %v6635 = vld [vmem:[%s2795 + $0xa8] sm:$0xf]
      %v6636 = vld [vmem:[%s2795 + $0xac] sm:$0xf]
      %v6637 = vld [vmem:[%s2795 + $0xb4] sm:$0xf]
      %v6638 = vld [vmem:[%s2795 + $0xb8] sm:$0xf]
      %v6639 = vld [vmem:[%s2795 + $0x8] sm:$0x1]
      %v6640 = vld [vmem:[%s2795 + $0x14] sm:$0x1]
      %v6641 = vld [vmem:[%s2795 + $0x20] sm:$0x1]
      %v6642 = vld [vmem:[%s2795 + $0x2c] sm:$0x1]
      %v6643 = vld [vmem:[%s2795 + $0x38] sm:$0x1]
      %v6644 = vld [vmem:[%s2795 + $0x44] sm:$0x1]
      %v6645 = vld [vmem:[%s2795 + $0x50] sm:$0x1]
      %v6646 = vld [vmem:[%s2795 + $0x5c] sm:$0x1]
      %v6647 = vld [vmem:[%s2795 + $0x68] sm:$0x1]
      %v6648 = vld [vmem:[%s2795 + $0x74] sm:$0x1]
      %v6649 = vld [vmem:[%s2795 + $0x80] sm:$0x1]
      %v6650 = vld [vmem:[%s2795 + $0x8c] sm:$0x1]
      %v6651 = vld [vmem:[%s2795 + $0x98] sm:$0x1]
      %v6652 = vld [vmem:[%s2795 + $0xa4] sm:$0x1]
      %v6653 = vld [vmem:[%s2795 + $0xb0] sm:$0x1]
      %v6654 = vld [vmem:[%s2795 + $0xbc] sm:$0x1]
      %v6656 = vshrl.u32 %v6607, 16
      %v6658 = vrot.slane %v6656, 4
      %v6659 = vshll.u32 %v6607, 16
      %v6661 = vrot.slane %v6659, 5
      %v6662 = vor.u32 %v6658, %v6661
      %v6663 = vrot.slane %v6662, 4
      %v6665 = vshll.u32 %v6608, 16
      %v6667 = vrot.slane %v6665, 5
      %v6668 = vsel %vm771, %v6663, %v6667
      %v6669 = vshrl.u32 %v6608, 16
      %v6671 = vrot.slane %v6669, 4
      %v6672 = vor.u32 %v6671, %v6667
      %v6673 = vrot.slane %v6672, 4
      %v6675 = vshll.u32 %v6639, 16
      %v6677 = vrot.slane %v6675, 5
      %v6678 = vsel %vm771, %v6673, %v6677
      %v6680 = vshrl.u32 %v6609, 16
      %v6682 = vrot.slane %v6680, 4
      %v6683 = vshll.u32 %v6609, 16
      %v6685 = vrot.slane %v6683, 5
      %v6686 = vor.u32 %v6682, %v6685
      %v6687 = vrot.slane %v6686, 4
      %v6689 = vshll.u32 %v6610, 16
      %v6691 = vrot.slane %v6689, 5
      %v6692 = vsel %vm771, %v6687, %v6691
      %v6693 = vshrl.u32 %v6610, 16
      %v6695 = vrot.slane %v6693, 4
      %v6696 = vor.u32 %v6695, %v6691
      %v6697 = vrot.slane %v6696, 4
      %v6699 = vshll.u32 %v6640, 16
      %v6701 = vrot.slane %v6699, 5
      %v6702 = vsel %vm771, %v6697, %v6701
      %v6704 = vshrl.u32 %v6611, 16
      %v6706 = vrot.slane %v6704, 4
      %v6707 = vshll.u32 %v6611, 16
      %v6709 = vrot.slane %v6707, 5
      %v6710 = vor.u32 %v6706, %v6709
      %v6711 = vrot.slane %v6710, 4
      %v6713 = vshll.u32 %v6612, 16
      %v6715 = vrot.slane %v6713, 5
      %v6716 = vsel %vm771, %v6711, %v6715
      %v6717 = vshrl.u32 %v6612, 16
      %v6719 = vrot.slane %v6717, 4
      %v6720 = vor.u32 %v6719, %v6715
      %v6721 = vrot.slane %v6720, 4
      %v6723 = vshll.u32 %v6641, 16
      %v6725 = vrot.slane %v6723, 5
      %v6726 = vsel %vm771, %v6721, %v6725
      %v6728 = vshrl.u32 %v6613, 16
      %v6730 = vrot.slane %v6728, 4
      %v6731 = vshll.u32 %v6613, 16
      %v6733 = vrot.slane %v6731, 5
      %v6734 = vor.u32 %v6730, %v6733
      %v6735 = vrot.slane %v6734, 4
      %v6737 = vshll.u32 %v6614, 16
      %v6739 = vrot.slane %v6737, 5
      %v6740 = vsel %vm771, %v6735, %v6739
      %v6741 = vshrl.u32 %v6614, 16
      %v6743 = vrot.slane %v6741, 4
      %v6744 = vor.u32 %v6743, %v6739
      %v6745 = vrot.slane %v6744, 4
      %v6747 = vshll.u32 %v6642, 16
      %v6749 = vrot.slane %v6747, 5
      %v6750 = vsel %vm771, %v6745, %v6749
      %v6752 = vshrl.u32 %v6615, 16
      %v6754 = vrot.slane %v6752, 4
      %v6755 = vshll.u32 %v6615, 16
      %v6757 = vrot.slane %v6755, 5
      %v6758 = vor.u32 %v6754, %v6757
      %v6759 = vrot.slane %v6758, 4
      %v6761 = vshll.u32 %v6616, 16
      %v6763 = vrot.slane %v6761, 5
      %v6764 = vsel %vm771, %v6759, %v6763
      %v6765 = vshrl.u32 %v6616, 16
      %v6767 = vrot.slane %v6765, 4
      %v6768 = vor.u32 %v6767, %v6763
      %v6769 = vrot.slane %v6768, 4
      %v6771 = vshll.u32 %v6643, 16
      %v6773 = vrot.slane %v6771, 5
      %v6774 = vsel %vm771, %v6769, %v6773
      %v6776 = vshrl.u32 %v6617, 16
      %v6778 = vrot.slane %v6776, 4
      %v6779 = vshll.u32 %v6617, 16
      %v6781 = vrot.slane %v6779, 5
      %v6782 = vor.u32 %v6778, %v6781
      %v6783 = vrot.slane %v6782, 4
      %v6785 = vshll.u32 %v6618, 16
      %v6787 = vrot.slane %v6785, 5
      %v6788 = vsel %vm771, %v6783, %v6787
      %v6789 = vshrl.u32 %v6618, 16
      %v6791 = vrot.slane %v6789, 4
      %v6792 = vor.u32 %v6791, %v6787
      %v6793 = vrot.slane %v6792, 4
      %v6795 = vshll.u32 %v6644, 16
      %v6797 = vrot.slane %v6795, 5
      %v6798 = vsel %vm771, %v6793, %v6797
      %v6800 = vshrl.u32 %v6619, 16
      %v6802 = vrot.slane %v6800, 4
      %v6803 = vshll.u32 %v6619, 16
      %v6805 = vrot.slane %v6803, 5
      %v6806 = vor.u32 %v6802, %v6805
      %v6807 = vrot.slane %v6806, 4
      %v6809 = vshll.u32 %v6620, 16
      %v6811 = vrot.slane %v6809, 5
      %v6812 = vsel %vm771, %v6807, %v6811
      %v6813 = vshrl.u32 %v6620, 16
      %v6815 = vrot.slane %v6813, 4
      %v6816 = vor.u32 %v6815, %v6811
      %v6817 = vrot.slane %v6816, 4
      %v6819 = vshll.u32 %v6645, 16
      %v6821 = vrot.slane %v6819, 5
      %v6822 = vsel %vm771, %v6817, %v6821
      %v6824 = vshrl.u32 %v6621, 16
      %v6826 = vrot.slane %v6824, 4
      %v6827 = vshll.u32 %v6621, 16
      %v6829 = vrot.slane %v6827, 5
      %v6830 = vor.u32 %v6826, %v6829
      %v6831 = vrot.slane %v6830, 4
      %v6833 = vshll.u32 %v6622, 16
      %v6835 = vrot.slane %v6833, 5
      %v6836 = vsel %vm771, %v6831, %v6835
      %v6837 = vshrl.u32 %v6622, 16
      %v6839 = vrot.slane %v6837, 4
      %v6840 = vor.u32 %v6839, %v6835
      %v6841 = vrot.slane %v6840, 4
      %v6843 = vshll.u32 %v6646, 16
      %v6845 = vrot.slane %v6843, 5
      %v6846 = vsel %vm771, %v6841, %v6845
      %v6848 = vshrl.u32 %v6623, 16
      %v6850 = vrot.slane %v6848, 4
      %v6851 = vshll.u32 %v6623, 16
      %v6853 = vrot.slane %v6851, 5
      %v6854 = vor.u32 %v6850, %v6853
      %v6855 = vrot.slane %v6854, 4
      %v6857 = vshll.u32 %v6624, 16
      %v6859 = vrot.slane %v6857, 5
      %v6860 = vsel %vm771, %v6855, %v6859
      %v6861 = vshrl.u32 %v6624, 16
      %v6863 = vrot.slane %v6861, 4
      %v6864 = vor.u32 %v6863, %v6859
      %v6865 = vrot.slane %v6864, 4
      %v6867 = vshll.u32 %v6647, 16
      %v6869 = vrot.slane %v6867, 5
      %v6870 = vsel %vm771, %v6865, %v6869
      %v6872 = vshrl.u32 %v6625, 16
      %v6874 = vrot.slane %v6872, 4
      %v6875 = vshll.u32 %v6625, 16
      %v6877 = vrot.slane %v6875, 5
      %v6878 = vor.u32 %v6874, %v6877
      %v6879 = vrot.slane %v6878, 4
      %v6881 = vshll.u32 %v6626, 16
      %v6883 = vrot.slane %v6881, 5
      %v6884 = vsel %vm771, %v6879, %v6883
      %v6885 = vshrl.u32 %v6626, 16
      %v6887 = vrot.slane %v6885, 4
      %v6888 = vor.u32 %v6887, %v6883
      %v6889 = vrot.slane %v6888, 4
      %v6891 = vshll.u32 %v6648, 16
      %v6893 = vrot.slane %v6891, 5
      %v6894 = vsel %vm771, %v6889, %v6893
      %v6896 = vshrl.u32 %v6627, 16
      %v6898 = vrot.slane %v6896, 4
      %v6899 = vshll.u32 %v6627, 16
      %v6901 = vrot.slane %v6899, 5
      %v6902 = vor.u32 %v6898, %v6901
      %v6903 = vrot.slane %v6902, 4
      %v6905 = vshll.u32 %v6628, 16
      %v6907 = vrot.slane %v6905, 5
      %v6908 = vsel %vm771, %v6903, %v6907
      %v6909 = vshrl.u32 %v6628, 16
      %v6911 = vrot.slane %v6909, 4
      %v6912 = vor.u32 %v6911, %v6907
      %v6913 = vrot.slane %v6912, 4
      %v6915 = vshll.u32 %v6649, 16
      %v6917 = vrot.slane %v6915, 5
      %v6918 = vsel %vm771, %v6913, %v6917
      %v6920 = vshrl.u32 %v6629, 16
      %v6922 = vrot.slane %v6920, 4
      %v6923 = vshll.u32 %v6629, 16
      %v6925 = vrot.slane %v6923, 5
      %v6926 = vor.u32 %v6922, %v6925
      %v6927 = vrot.slane %v6926, 4
      %v6929 = vshll.u32 %v6630, 16
      %v6931 = vrot.slane %v6929, 5
      %v6932 = vsel %vm771, %v6927, %v6931
      %v6933 = vshrl.u32 %v6630, 16
      %v6935 = vrot.slane %v6933, 4
      %v6936 = vor.u32 %v6935, %v6931
      %v6937 = vrot.slane %v6936, 4
      %v6939 = vshll.u32 %v6650, 16
      %v6941 = vrot.slane %v6939, 5
      %v6942 = vsel %vm771, %v6937, %v6941
      %v6944 = vshrl.u32 %v6631, 16
      %v6946 = vrot.slane %v6944, 4
      %v6947 = vshll.u32 %v6631, 16
      %v6949 = vrot.slane %v6947, 5
      %v6950 = vor.u32 %v6946, %v6949
      %v6951 = vrot.slane %v6950, 4
      %v6953 = vshll.u32 %v6632, 16
      %v6955 = vrot.slane %v6953, 5
      %v6956 = vsel %vm771, %v6951, %v6955
      %v6957 = vshrl.u32 %v6632, 16
      %v6959 = vrot.slane %v6957, 4
      %v6960 = vor.u32 %v6959, %v6955
      %v6961 = vrot.slane %v6960, 4
      %v6963 = vshll.u32 %v6651, 16
      %v6965 = vrot.slane %v6963, 5
      %v6966 = vsel %vm771, %v6961, %v6965
      %v6968 = vshrl.u32 %v6633, 16
      %v6970 = vrot.slane %v6968, 4
      %v6971 = vshll.u32 %v6633, 16
      %v6973 = vrot.slane %v6971, 5
      %v6974 = vor.u32 %v6970, %v6973
      %v6975 = vrot.slane %v6974, 4
      %v6977 = vshll.u32 %v6634, 16
      %v6979 = vrot.slane %v6977, 5
      %v6980 = vsel %vm771, %v6975, %v6979
      %v6981 = vshrl.u32 %v6634, 16
      %v6983 = vrot.slane %v6981, 4
      %v6984 = vor.u32 %v6983, %v6979
      %v6985 = vrot.slane %v6984, 4
      %v6987 = vshll.u32 %v6652, 16
      %v6989 = vrot.slane %v6987, 5
      %v6990 = vsel %vm771, %v6985, %v6989
      %v6992 = vshrl.u32 %v6635, 16
      %v6994 = vrot.slane %v6992, 4
      %v6995 = vshll.u32 %v6635, 16
      %v6997 = vrot.slane %v6995, 5
      %v6998 = vor.u32 %v6994, %v6997
      %v6999 = vrot.slane %v6998, 4
      %v7001 = vshll.u32 %v6636, 16
      %v7003 = vrot.slane %v7001, 5
      %v7004 = vsel %vm771, %v6999, %v7003
      %v7005 = vshrl.u32 %v6636, 16
      %v7007 = vrot.slane %v7005, 4
      %v7008 = vor.u32 %v7007, %v7003
      %v7009 = vrot.slane %v7008, 4
      %v7011 = vshll.u32 %v6653, 16
      %v7013 = vrot.slane %v7011, 5
      %v7014 = vsel %vm771, %v7009, %v7013
      %v7016 = vshrl.u32 %v6637, 16
      %v7018 = vrot.slane %v7016, 4
      %v7019 = vshll.u32 %v6637, 16
      %v7021 = vrot.slane %v7019, 5
      %v7022 = vor.u32 %v7018, %v7021
      %v7023 = vrot.slane %v7022, 4
      %v7025 = vshll.u32 %v6638, 16
      %v7027 = vrot.slane %v7025, 5
      %v7028 = vsel %vm771, %v7023, %v7027
      %v7029 = vshrl.u32 %v6638, 16
      %v7031 = vrot.slane %v7029, 4
      %v7032 = vor.u32 %v7031, %v7027
      %v7033 = vrot.slane %v7032, 4
      %v7035 = vshll.u32 %v6654, 16
      %v7037 = vrot.slane %v7035, 5
      %v7038 = vsel %vm771, %v7033, %v7037
      %v7071 = vunpack.c.l.b16 %v6607
      %v7072 = vunpack.c.l.b16 %v6608
      %v7073 = vunpack.c.l.b16 %v6609
      %v7074 = vunpack.c.l.b16 %v6610
      %v7075 = vunpack.c.l.b16 %v6611
      %v7076 = vunpack.c.l.b16 %v6612
      %v7077 = vunpack.c.l.b16 %v6613
      %v7078 = vunpack.c.l.b16 %v6614
      %v7079 = vunpack.c.l.b16 %v6615
      %v7080 = vunpack.c.l.b16 %v6616
      %v7081 = vunpack.c.l.b16 %v6617
      %v7082 = vunpack.c.l.b16 %v6618
      %v7083 = vunpack.c.l.b16 %v6619
      %v7084 = vunpack.c.l.b16 %v6620
      %v7085 = vunpack.c.l.b16 %v6621
      %v7086 = vunpack.c.l.b16 %v6622
      %v7087 = vunpack.c.l.b16 %v6623
      %v7088 = vunpack.c.l.b16 %v6624
      %v7089 = vunpack.c.l.b16 %v6625
      %v7090 = vunpack.c.l.b16 %v6626
      %v7091 = vunpack.c.l.b16 %v6627
      %v7092 = vunpack.c.l.b16 %v6628
      %v7093 = vunpack.c.l.b16 %v6629
      %v7094 = vunpack.c.l.b16 %v6630
      %v7095 = vunpack.c.l.b16 %v6631
      %v7096 = vunpack.c.l.b16 %v6632
      %v7097 = vunpack.c.l.b16 %v6633
      %v7098 = vunpack.c.l.b16 %v6634
      %v7099 = vunpack.c.l.b16 %v6635
      %v7100 = vunpack.c.l.b16 %v6636
      %v7101 = vunpack.c.l.b16 %v6637
      %v7102 = vunpack.c.l.b16 %v6638
      %v7103 = vpack.c.b16 %v7072, %v7071
      %v7104 = vpack.c.b16 %v7074, %v7073
      %v7105 = vpack.c.b16 %v7076, %v7075
      %v7106 = vpack.c.b16 %v7078, %v7077
      %v7107 = vpack.c.b16 %v7080, %v7079
      %v7108 = vpack.c.b16 %v7082, %v7081
      %v7109 = vpack.c.b16 %v7084, %v7083
      %v7110 = vpack.c.b16 %v7086, %v7085
      %v7111 = vpack.c.b16 %v7088, %v7087
      %v7112 = vpack.c.b16 %v7090, %v7089
      %v7113 = vpack.c.b16 %v7092, %v7091
      %v7114 = vpack.c.b16 %v7094, %v7093
      %v7115 = vpack.c.b16 %v7096, %v7095
      %v7116 = vpack.c.b16 %v7098, %v7097
      %v7117 = vpack.c.b16 %v7100, %v7099
      %v7118 = vpack.c.b16 %v7102, %v7101
      %v7119 = vunpack.c.l.b16 %v6668
      %v7120 = vunpack.c.l.b16 %v6678
      %v7121 = vunpack.c.l.b16 %v6692
      %v7122 = vunpack.c.l.b16 %v6702
      %v7123 = vunpack.c.l.b16 %v6716
      %v7124 = vunpack.c.l.b16 %v6726
      %v7125 = vunpack.c.l.b16 %v6740
      %v7126 = vunpack.c.l.b16 %v6750
      %v7127 = vunpack.c.l.b16 %v6764
      %v7128 = vunpack.c.l.b16 %v6774
      %v7129 = vunpack.c.l.b16 %v6788
      %v7130 = vunpack.c.l.b16 %v6798
      %v7131 = vunpack.c.l.b16 %v6812
      %v7132 = vunpack.c.l.b16 %v6822
      %v7133 = vunpack.c.l.b16 %v6836
      %v7134 = vunpack.c.l.b16 %v6846
      %v7135 = vunpack.c.l.b16 %v6860
      %v7136 = vunpack.c.l.b16 %v6870
      %v7137 = vunpack.c.l.b16 %v6884
      %v7138 = vunpack.c.l.b16 %v6894
      %v7139 = vunpack.c.l.b16 %v6908
      %v7140 = vunpack.c.l.b16 %v6918
      %v7141 = vunpack.c.l.b16 %v6932
      %v7142 = vunpack.c.l.b16 %v6942
      %v7143 = vunpack.c.l.b16 %v6956
      %v7144 = vunpack.c.l.b16 %v6966
      %v7145 = vunpack.c.l.b16 %v6980
      %v7146 = vunpack.c.l.b16 %v6990
      %v7147 = vunpack.c.l.b16 %v7004
      %v7148 = vunpack.c.l.b16 %v7014
      %v7149 = vunpack.c.l.b16 %v7028
      %v7150 = vunpack.c.l.b16 %v7038
      %v7151 = vpack.c.b16 %v7120, %v7119
      %v7152 = vpack.c.b16 %v7122, %v7121
      %v7153 = vpack.c.b16 %v7124, %v7123
      %v7154 = vpack.c.b16 %v7126, %v7125
      %v7155 = vpack.c.b16 %v7128, %v7127
      %v7156 = vpack.c.b16 %v7130, %v7129
      %v7157 = vpack.c.b16 %v7132, %v7131
      %v7158 = vpack.c.b16 %v7134, %v7133
      %v7159 = vpack.c.b16 %v7136, %v7135
      %v7160 = vpack.c.b16 %v7138, %v7137
      %v7161 = vpack.c.b16 %v7140, %v7139
      %v7162 = vpack.c.b16 %v7142, %v7141
      %v7163 = vpack.c.b16 %v7144, %v7143
      %v7164 = vpack.c.b16 %v7146, %v7145
      %v7165 = vpack.c.b16 %v7148, %v7147
      %v7166 = vpack.c.b16 %v7150, %v7149
      %7167 = vrot.lane.b32.xlu0 %v7151, 4
      %v7168 = vpop.permute.xlu0 %7167
      %7169 = vrot.lane.b32.xlu0 %v7152, 4
      %v7170 = vpop.permute.xlu0 %7169
      %7171 = vrot.lane.b32.xlu0 %v7153, 4
      %v7172 = vpop.permute.xlu0 %7171
      %7173 = vrot.lane.b32.xlu0 %v7154, 4
      %v7174 = vpop.permute.xlu0 %7173
      %7175 = vrot.lane.b32.xlu0 %v7155, 4
      %v7176 = vpop.permute.xlu0 %7175
      %7177 = vrot.lane.b32.xlu0 %v7156, 4
      %v7178 = vpop.permute.xlu0 %7177
      %7179 = vrot.lane.b32.xlu0 %v7157, 4
      %v7180 = vpop.permute.xlu0 %7179
      %7181 = vrot.lane.b32.xlu0 %v7158, 4
      %v7182 = vpop.permute.xlu0 %7181
      %7183 = vrot.lane.b32.xlu0 %v7159, 4
      %v7184 = vpop.permute.xlu0 %7183
      %7185 = vrot.lane.b32.xlu0 %v7160, 4
      %v7186 = vpop.permute.xlu0 %7185
      %7187 = vrot.lane.b32.xlu0 %v7161, 4
      %v7188 = vpop.permute.xlu0 %7187
      %7189 = vrot.lane.b32.xlu0 %v7162, 4
      %v7190 = vpop.permute.xlu0 %7189
      %7191 = vrot.lane.b32.xlu0 %v7163, 4
      %v7192 = vpop.permute.xlu0 %7191
      %7193 = vrot.lane.b32.xlu0 %v7164, 4
      %v7194 = vpop.permute.xlu0 %7193
      %7195 = vrot.lane.b32.xlu0 %v7165, 4
      %v7196 = vpop.permute.xlu0 %7195
      %7197 = vrot.lane.b32.xlu0 %v7166, 4
      %v7198 = vpop.permute.xlu0 %7197
      %v7201 = vsel %vm1316, %v7103, %v7168
      %v7204 = vsel %vm1316, %v7104, %v7170
      %v7207 = vsel %vm1316, %v7105, %v7172
      %v7210 = vsel %vm1316, %v7106, %v7174
      %v7213 = vsel %vm1316, %v7107, %v7176
      %v7216 = vsel %vm1316, %v7108, %v7178
      %v7219 = vsel %vm1316, %v7109, %v7180
      %v7222 = vsel %vm1316, %v7110, %v7182
      %v7225 = vsel %vm1316, %v7111, %v7184
      %v7228 = vsel %vm1316, %v7112, %v7186
      %v7231 = vsel %vm1316, %v7113, %v7188
      %v7234 = vsel %vm1316, %v7114, %v7190
      %v7237 = vsel %vm1316, %v7115, %v7192
      %v7240 = vsel %vm1316, %v7116, %v7194
      %v7243 = vsel %vm1316, %v7117, %v7196
      %v7246 = vsel %vm1316, %v7118, %v7198
      %7263 = vrot.lane.b32.xlu0 %v7201, 24
      %v7264 = vpop.permute.xlu0 %7263
      %7265 = vrot.lane.b32.xlu0 %v7204, 24
      %v7266 = vpop.permute.xlu0 %7265
      %7267 = vrot.lane.b32.xlu0 %v7207, 24
      %v7268 = vpop.permute.xlu0 %7267
      %7269 = vrot.lane.b32.xlu0 %v7210, 24
      %v7270 = vpop.permute.xlu0 %7269
      %7271 = vrot.lane.b32.xlu0 %v7213, 24
      %v7272 = vpop.permute.xlu0 %7271
      %7273 = vrot.lane.b32.xlu0 %v7216, 24
      %v7274 = vpop.permute.xlu0 %7273
      %7275 = vrot.lane.b32.xlu0 %v7219, 24
      %v7276 = vpop.permute.xlu0 %7275
      %7277 = vrot.lane.b32.xlu0 %v7222, 24
      %v7278 = vpop.permute.xlu0 %7277
      %7279 = vrot.lane.b32.xlu0 %v7225, 24
      %v7280 = vpop.permute.xlu0 %7279
      %7281 = vrot.lane.b32.xlu0 %v7228, 24
      %v7282 = vpop.permute.xlu0 %7281
      %7283 = vrot.lane.b32.xlu0 %v7231, 24
      %v7284 = vpop.permute.xlu0 %7283
      %7285 = vrot.lane.b32.xlu0 %v7234, 24
      %v7286 = vpop.permute.xlu0 %7285
      %7287 = vrot.lane.b32.xlu0 %v7237, 24
      %v7288 = vpop.permute.xlu0 %7287
      %7289 = vrot.lane.b32.xlu0 %v7240, 24
      %v7290 = vpop.permute.xlu0 %7289
      %7291 = vrot.lane.b32.xlu0 %v7243, 24
      %v7292 = vpop.permute.xlu0 %7291
      %7293 = vrot.lane.b32.xlu0 %v7246, 24
      %v7294 = vpop.permute.xlu0 %7293
      %7311 = vst.msk [vmem:[#allocation3] sm:$0xff] %vm3500, %v7264
      %7312 = vst.msk [vmem:[#allocation3 + $0x8] sm:$0xff] %vm3500, %v7266
      %7313 = vst.msk [vmem:[#allocation3 + $0x10] sm:$0xff] %vm3500, %v7268
      %7314 = vst.msk [vmem:[#allocation3 + $0x18] sm:$0xff] %vm3500, %v7270
      %7315 = vst.msk [vmem:[#allocation3 + $0x20] sm:$0xff] %vm3500, %v7272
      %7316 = vst.msk [vmem:[#allocation3 + $0x28] sm:$0xff] %vm3500, %v7274
      %7317 = vst.msk [vmem:[#allocation3 + $0x30] sm:$0xff] %vm3500, %v7276
      %7318 = vst.msk [vmem:[#allocation3 + $0x38] sm:$0xff] %vm3500, %v7278
      %7319 = vst.msk [vmem:[#allocation3 + $0x40] sm:$0xff] %vm3500, %v7280
      %7320 = vst.msk [vmem:[#allocation3 + $0x48] sm:$0xff] %vm3500, %v7282
      %7321 = vst.msk [vmem:[#allocation3 + $0x50] sm:$0xff] %vm3500, %v7284
      %7322 = vst.msk [vmem:[#allocation3 + $0x58] sm:$0xff] %vm3500, %v7286
      %7323 = vst.msk [vmem:[#allocation3 + $0x60] sm:$0xff] %vm3500, %v7288
      %7324 = vst.msk [vmem:[#allocation3 + $0x68] sm:$0xff] %vm3500, %v7290
      %7325 = vst.msk [vmem:[#allocation3 + $0x70] sm:$0xff] %vm3500, %v7292
      %7326 = vst.msk [vmem:[#allocation3 + $0x78] sm:$0xff] %vm3500, %v7294
      %v7327 = vld [vmem:[%s2795] sm:$0xe]
      %v7328 = vld [vmem:[%s2795 + $0x4] sm:$0xf]
      %v7329 = vld [vmem:[%s2795 + $0x8] sm:$0x1]
      %v7330 = vld [vmem:[%s2795 + $0xc] sm:$0xe]
      %v7331 = vld [vmem:[%s2795 + $0x10] sm:$0xf]
      %v7332 = vld [vmem:[%s2795 + $0x14] sm:$0x1]
      %v7333 = vld [vmem:[%s2795 + $0x18] sm:$0xe]
      %v7334 = vld [vmem:[%s2795 + $0x1c] sm:$0xf]
      %v7335 = vld [vmem:[%s2795 + $0x20] sm:$0x1]
      %v7336 = vld [vmem:[%s2795 + $0x24] sm:$0xe]
      %v7337 = vld [vmem:[%s2795 + $0x28] sm:$0xf]
      %v7338 = vld [vmem:[%s2795 + $0x2c] sm:$0x1]
      %v7339 = vld [vmem:[%s2795 + $0x30] sm:$0xe]
      %v7340 = vld [vmem:[%s2795 + $0x34] sm:$0xf]
      %v7341 = vld [vmem:[%s2795 + $0x38] sm:$0x1]
      %v7342 = vld [vmem:[%s2795 + $0x3c] sm:$0xe]
      %v7343 = vld [vmem:[%s2795 + $0x40] sm:$0xf]
      %v7344 = vld [vmem:[%s2795 + $0x44] sm:$0x1]
      %v7345 = vld [vmem:[%s2795 + $0x48] sm:$0xe]
      %v7346 = vld [vmem:[%s2795 + $0x4c] sm:$0xf]
      %v7347 = vld [vmem:[%s2795 + $0x50] sm:$0x1]
      %v7348 = vld [vmem:[%s2795 + $0x54] sm:$0xe]
      %v7349 = vld [vmem:[%s2795 + $0x58] sm:$0xf]
      %v7350 = vld [vmem:[%s2795 + $0x5c] sm:$0x1]
      %v7351 = vld [vmem:[%s2795 + $0x60] sm:$0xe]
      %v7352 = vld [vmem:[%s2795 + $0x64] sm:$0xf]
      %v7353 = vld [vmem:[%s2795 + $0x68] sm:$0x1]
      %v7354 = vld [vmem:[%s2795 + $0x6c] sm:$0xe]
      %v7355 = vld [vmem:[%s2795 + $0x70] sm:$0xf]
      %v7356 = vld [vmem:[%s2795 + $0x74] sm:$0x1]
      %v7357 = vld [vmem:[%s2795 + $0x78] sm:$0xe]
      %v7358 = vld [vmem:[%s2795 + $0x7c] sm:$0xf]
      %v7359 = vld [vmem:[%s2795 + $0x80] sm:$0x1]
      %v7360 = vld [vmem:[%s2795 + $0x84] sm:$0xe]
      %v7361 = vld [vmem:[%s2795 + $0x88] sm:$0xf]
      %v7362 = vld [vmem:[%s2795 + $0x8c] sm:$0x1]
      %v7363 = vld [vmem:[%s2795 + $0x90] sm:$0xe]
      %v7364 = vld [vmem:[%s2795 + $0x94] sm:$0xf]
      %v7365 = vld [vmem:[%s2795 + $0x98] sm:$0x1]
      %v7366 = vld [vmem:[%s2795 + $0x9c] sm:$0xe]
      %v7367 = vld [vmem:[%s2795 + $0xa0] sm:$0xf]
      %v7368 = vld [vmem:[%s2795 + $0xa4] sm:$0x1]
      %v7369 = vld [vmem:[%s2795 + $0xa8] sm:$0xe]
      %v7370 = vld [vmem:[%s2795 + $0xac] sm:$0xf]
      %v7371 = vld [vmem:[%s2795 + $0xb0] sm:$0x1]
      %v7372 = vld [vmem:[%s2795 + $0xb4] sm:$0xe]
      %v7373 = vld [vmem:[%s2795 + $0xb8] sm:$0xf]
      %v7374 = vld [vmem:[%s2795 + $0xbc] sm:$0x1]
      %v7423 = vrot.slane %v7327, 5
      %v7424 = vrot.slane %v7423, 4
      %v7425 = vrot.slane %v7328, 5
      %v7426 = vsel %vm1496, %v7424, %v7425
      %v7427 = vrot.slane %v7425, 4
      %v7428 = vrot.slane %v7329, 5
      %v7429 = vsel %vm1496, %v7427, %v7428
      %v7430 = vrot.slane %v7330, 5
      %v7431 = vrot.slane %v7430, 4
      %v7432 = vrot.slane %v7331, 5
      %v7433 = vsel %vm1496, %v7431, %v7432
      %v7434 = vrot.slane %v7432, 4
      %v7435 = vrot.slane %v7332, 5
      %v7436 = vsel %vm1496, %v7434, %v7435
      %v7437 = vrot.slane %v7333, 5
      %v7438 = vrot.slane %v7437, 4
      %v7439 = vrot.slane %v7334, 5
      %v7440 = vsel %vm1496, %v7438, %v7439
      %v7441 = vrot.slane %v7439, 4
      %v7442 = vrot.slane %v7335, 5
      %v7443 = vsel %vm1496, %v7441, %v7442
      %v7444 = vrot.slane %v7336, 5
      %v7445 = vrot.slane %v7444, 4
      %v7446 = vrot.slane %v7337, 5
      %v7447 = vsel %vm1496, %v7445, %v7446
      %v7448 = vrot.slane %v7446, 4
      %v7449 = vrot.slane %v7338, 5
      %v7450 = vsel %vm1496, %v7448, %v7449
      %v7451 = vrot.slane %v7339, 5
      %v7452 = vrot.slane %v7451, 4
      %v7453 = vrot.slane %v7340, 5
      %v7454 = vsel %vm1496, %v7452, %v7453
      %v7455 = vrot.slane %v7453, 4
      %v7456 = vrot.slane %v7341, 5
      %v7457 = vsel %vm1496, %v7455, %v7456
      %v7458 = vrot.slane %v7342, 5
      %v7459 = vrot.slane %v7458, 4
      %v7460 = vrot.slane %v7343, 5
      %v7461 = vsel %vm1496, %v7459, %v7460
      %v7462 = vrot.slane %v7460, 4
      %v7463 = vrot.slane %v7344, 5
      %v7464 = vsel %vm1496, %v7462, %v7463
      %v7465 = vrot.slane %v7345, 5
      %v7466 = vrot.slane %v7465, 4
      %v7467 = vrot.slane %v7346, 5
      %v7468 = vsel %vm1496, %v7466, %v7467
      %v7469 = vrot.slane %v7467, 4
      %v7470 = vrot.slane %v7347, 5
      %v7471 = vsel %vm1496, %v7469, %v7470
      %v7472 = vrot.slane %v7348, 5
      %v7473 = vrot.slane %v7472, 4
      %v7474 = vrot.slane %v7349, 5
      %v7475 = vsel %vm1496, %v7473, %v7474
      %v7476 = vrot.slane %v7474, 4
      %v7477 = vrot.slane %v7350, 5
      %v7478 = vsel %vm1496, %v7476, %v7477
      %v7479 = vrot.slane %v7351, 5
      %v7480 = vrot.slane %v7479, 4
      %v7481 = vrot.slane %v7352, 5
      %v7482 = vsel %vm1496, %v7480, %v7481
      %v7483 = vrot.slane %v7481, 4
      %v7484 = vrot.slane %v7353, 5
      %v7485 = vsel %vm1496, %v7483, %v7484
      %v7486 = vrot.slane %v7354, 5
      %v7487 = vrot.slane %v7486, 4
      %v7488 = vrot.slane %v7355, 5
      %v7489 = vsel %vm1496, %v7487, %v7488
      %v7490 = vrot.slane %v7488, 4
      %v7491 = vrot.slane %v7356, 5
      %v7492 = vsel %vm1496, %v7490, %v7491
      %v7493 = vrot.slane %v7357, 5
      %v7494 = vrot.slane %v7493, 4
      %v7495 = vrot.slane %v7358, 5
      %v7496 = vsel %vm1496, %v7494, %v7495
      %v7497 = vrot.slane %v7495, 4
      %v7498 = vrot.slane %v7359, 5
      %v7499 = vsel %vm1496, %v7497, %v7498
      %v7500 = vrot.slane %v7360, 5
      %v7501 = vrot.slane %v7500, 4
      %v7502 = vrot.slane %v7361, 5
      %v7503 = vsel %vm1496, %v7501, %v7502
      %v7504 = vrot.slane %v7502, 4
      %v7505 = vrot.slane %v7362, 5
      %v7506 = vsel %vm1496, %v7504, %v7505
      %v7507 = vrot.slane %v7363, 5
      %v7508 = vrot.slane %v7507, 4
      %v7509 = vrot.slane %v7364, 5
      %v7510 = vsel %vm1496, %v7508, %v7509
      %v7511 = vrot.slane %v7509, 4
      %v7512 = vrot.slane %v7365, 5
      %v7513 = vsel %vm1496, %v7511, %v7512
      %v7514 = vrot.slane %v7366, 5
      %v7515 = vrot.slane %v7514, 4
      %v7516 = vrot.slane %v7367, 5
      %v7517 = vsel %vm1496, %v7515, %v7516
      %v7518 = vrot.slane %v7516, 4
      %v7519 = vrot.slane %v7368, 5
      %v7520 = vsel %vm1496, %v7518, %v7519
      %v7521 = vrot.slane %v7369, 5
      %v7522 = vrot.slane %v7521, 4
      %v7523 = vrot.slane %v7370, 5
      %v7524 = vsel %vm1496, %v7522, %v7523
      %v7525 = vrot.slane %v7523, 4
      %v7526 = vrot.slane %v7371, 5
      %v7527 = vsel %vm1496, %v7525, %v7526
      %v7528 = vrot.slane %v7372, 5
      %v7529 = vrot.slane %v7528, 4
      %v7530 = vrot.slane %v7373, 5
      %v7531 = vsel %vm1496, %v7529, %v7530
      %v7532 = vrot.slane %v7530, 4
      %v7533 = vrot.slane %v7374, 5
      %v7534 = vsel %vm1496, %v7532, %v7533
      %v7535 = vunpack.c.l.b16 %v7426
      %v7536 = vunpack.c.l.b16 %v7429
      %v7537 = vunpack.c.l.b16 %v7433
      %v7538 = vunpack.c.l.b16 %v7436
      %v7539 = vunpack.c.l.b16 %v7440
      %v7540 = vunpack.c.l.b16 %v7443
      %v7541 = vunpack.c.l.b16 %v7447
      %v7542 = vunpack.c.l.b16 %v7450
      %v7543 = vunpack.c.l.b16 %v7454
      %v7544 = vunpack.c.l.b16 %v7457
      %v7545 = vunpack.c.l.b16 %v7461
      %v7546 = vunpack.c.l.b16 %v7464
      %v7547 = vunpack.c.l.b16 %v7468
      %v7548 = vunpack.c.l.b16 %v7471
      %v7549 = vunpack.c.l.b16 %v7475
      %v7550 = vunpack.c.l.b16 %v7478
      %v7551 = vunpack.c.l.b16 %v7482
      %v7552 = vunpack.c.l.b16 %v7485
      %v7553 = vunpack.c.l.b16 %v7489
      %v7554 = vunpack.c.l.b16 %v7492
      %v7555 = vunpack.c.l.b16 %v7496
      %v7556 = vunpack.c.l.b16 %v7499
      %v7557 = vunpack.c.l.b16 %v7503
      %v7558 = vunpack.c.l.b16 %v7506
      %v7559 = vunpack.c.l.b16 %v7510
      %v7560 = vunpack.c.l.b16 %v7513
      %v7561 = vunpack.c.l.b16 %v7517
      %v7562 = vunpack.c.l.b16 %v7520
      %v7563 = vunpack.c.l.b16 %v7524
      %v7564 = vunpack.c.l.b16 %v7527
      %v7565 = vunpack.c.l.b16 %v7531
      %v7566 = vunpack.c.l.b16 %v7534
      %v7567 = vpack.c.b16 %v7536, %v7535
      %v7568 = vpack.c.b16 %v7538, %v7537
      %v7569 = vpack.c.b16 %v7540, %v7539
      %v7570 = vpack.c.b16 %v7542, %v7541
      %v7571 = vpack.c.b16 %v7544, %v7543
      %v7572 = vpack.c.b16 %v7546, %v7545
      %v7573 = vpack.c.b16 %v7548, %v7547
      %v7574 = vpack.c.b16 %v7550, %v7549
      %v7575 = vpack.c.b16 %v7552, %v7551
      %v7576 = vpack.c.b16 %v7554, %v7553
      %v7577 = vpack.c.b16 %v7556, %v7555
      %v7578 = vpack.c.b16 %v7558, %v7557
      %v7579 = vpack.c.b16 %v7560, %v7559
      %v7580 = vpack.c.b16 %v7562, %v7561
      %v7581 = vpack.c.b16 %v7564, %v7563
      %v7582 = vpack.c.b16 %v7566, %v7565
      %7583 = vrot.lane.b32.xlu0 %v7567, 32
      %v7584 = vpop.permute.xlu0 %7583
      %7585 = vrot.lane.b32.xlu0 %v7568, 32
      %v7586 = vpop.permute.xlu0 %7585
      %7587 = vrot.lane.b32.xlu0 %v7569, 32
      %v7588 = vpop.permute.xlu0 %7587
      %7589 = vrot.lane.b32.xlu0 %v7570, 32
      %v7590 = vpop.permute.xlu0 %7589
      %7591 = vrot.lane.b32.xlu0 %v7571, 32
      %v7592 = vpop.permute.xlu0 %7591
      %7593 = vrot.lane.b32.xlu0 %v7572, 32
      %v7594 = vpop.permute.xlu0 %7593
      %7595 = vrot.lane.b32.xlu0 %v7573, 32
      %v7596 = vpop.permute.xlu0 %7595
      %7597 = vrot.lane.b32.xlu0 %v7574, 32
      %v7598 = vpop.permute.xlu0 %7597
      %7599 = vrot.lane.b32.xlu0 %v7575, 32
      %v7600 = vpop.permute.xlu0 %7599
      %7601 = vrot.lane.b32.xlu0 %v7576, 32
      %v7602 = vpop.permute.xlu0 %7601
      %7603 = vrot.lane.b32.xlu0 %v7577, 32
      %v7604 = vpop.permute.xlu0 %7603
      %7605 = vrot.lane.b32.xlu0 %v7578, 32
      %v7606 = vpop.permute.xlu0 %7605
      %7607 = vrot.lane.b32.xlu0 %v7579, 32
      %v7608 = vpop.permute.xlu0 %7607
      %7609 = vrot.lane.b32.xlu0 %v7580, 32
      %v7610 = vpop.permute.xlu0 %7609
      %7611 = vrot.lane.b32.xlu0 %v7581, 32
      %v7612 = vpop.permute.xlu0 %7611
      %7613 = vrot.lane.b32.xlu0 %v7582, 32
      %v7614 = vpop.permute.xlu0 %7613
      %7631 = vst.msk [vmem:[#allocation3] sm:$0xff] %vm3821, %v7584
      %7632 = vst.msk [vmem:[#allocation3 + $0x8] sm:$0xff] %vm3821, %v7586
      %7633 = vst.msk [vmem:[#allocation3 + $0x10] sm:$0xff] %vm3821, %v7588
      %7634 = vst.msk [vmem:[#allocation3 + $0x18] sm:$0xff] %vm3821, %v7590
      %7635 = vst.msk [vmem:[#allocation3 + $0x20] sm:$0xff] %vm3821, %v7592
      %7636 = vst.msk [vmem:[#allocation3 + $0x28] sm:$0xff] %vm3821, %v7594
      %7637 = vst.msk [vmem:[#allocation3 + $0x30] sm:$0xff] %vm3821, %v7596
      %7638 = vst.msk [vmem:[#allocation3 + $0x38] sm:$0xff] %vm3821, %v7598
      %7639 = vst.msk [vmem:[#allocation3 + $0x40] sm:$0xff] %vm3821, %v7600
      %7640 = vst.msk [vmem:[#allocation3 + $0x48] sm:$0xff] %vm3821, %v7602
      %7641 = vst.msk [vmem:[#allocation3 + $0x50] sm:$0xff] %vm3821, %v7604
      %7642 = vst.msk [vmem:[#allocation3 + $0x58] sm:$0xff] %vm3821, %v7606
      %7643 = vst.msk [vmem:[#allocation3 + $0x60] sm:$0xff] %vm3821, %v7608
      %7644 = vst.msk [vmem:[#allocation3 + $0x68] sm:$0xff] %vm3821, %v7610
      %7645 = vst.msk [vmem:[#allocation3 + $0x70] sm:$0xff] %vm3821, %v7612
      %7646 = vst.msk [vmem:[#allocation3 + $0x78] sm:$0xff] %vm3821, %v7614
      %v7647 = vld [vmem:[#allocation3] sm:$0xff]
      %v7648 = vld [vmem:[#allocation3 + $0x8] sm:$0xff]
      %v7649 = vld [vmem:[#allocation3 + $0x10] sm:$0xff]
      %v7650 = vld [vmem:[#allocation3 + $0x18] sm:$0xff]
      %v7651 = vld [vmem:[#allocation3 + $0x20] sm:$0xff]
      %v7652 = vld [vmem:[#allocation3 + $0x28] sm:$0xff]
      %v7653 = vld [vmem:[#allocation3 + $0x30] sm:$0xff]
      %v7654 = vld [vmem:[#allocation3 + $0x38] sm:$0xff]
      %v7655 = vld [vmem:[#allocation3 + $0x40] sm:$0xff]
      %v7656 = vld [vmem:[#allocation3 + $0x48] sm:$0xff]
      %v7657 = vld [vmem:[#allocation3 + $0x50] sm:$0xff]
      %v7658 = vld [vmem:[#allocation3 + $0x58] sm:$0xff]
      %v7659 = vld [vmem:[#allocation3 + $0x60] sm:$0xff]
      %v7660 = vld [vmem:[#allocation3 + $0x68] sm:$0xff]
      %v7661 = vld [vmem:[#allocation3 + $0x70] sm:$0xff]
      %v7662 = vld [vmem:[#allocation3 + $0x78] sm:$0xff]
      %v7663 = vld [vmem:[%s2] sm:$0xf]
      %v7664 = vld [vmem:[%s2 + $0x4] sm:$0xf]
      %v7665 = vld [vmem:[%s2 + $0x8] sm:$0xf]
      %v7666 = vld [vmem:[%s2 + $0xc] sm:$0xf]
      %v7667 = vld [vmem:[%s2 + $0x10] sm:$0x3]
      %v7668 = vld [vmem:[%s4] sm:$0x1]
      %v7670 = vlaneseq
      %v7671 = vshrl.u32 %v7670, 7
      %v7672 = vsub.s32 0, %v7671
      %v7673 = vrot.slane %v7668, %v7672
      %v7680 = vunpack.c.l.b16 %v7663
      %v7681 = vunpack.c.l.b16 %v7664
      %v7682 = vunpack.c.l.b16 %v7665
      %v7683 = vunpack.c.l.b16 %v7666
      %v7684 = vunpack.c.l.b16 %v7667
      %v7685 = vpack.c.b16 %v7681, %v7680
      %v7686 = vpack.c.b16 %v7683, %v7682
      %v7687 = vpack.c.b16 %v7684, %v7684
      %v7691 = vsel %vm3881, %v7647, 0
      %v7694 = vsel %vm3881, %v7648, 0
      %v7697 = vsel %vm3881, %v7649, 0
      %v7700 = vsel %vm3881, %v7650, 0
      %v7703 = vsel %vm3881, %v7651, 0
      %v7706 = vsel %vm3881, %v7652, 0
      %v7709 = vsel %vm3881, %v7653, 0
      %v7712 = vsel %vm3881, %v7654, 0
      %v7715 = vsel %vm3881, %v7655, 0
      %v7718 = vsel %vm3881, %v7656, 0
      %v7721 = vsel %vm3881, %v7657, 0
      %v7724 = vsel %vm3881, %v7658, 0
      %v7727 = vsel %vm3881, %v7659, 0
      %v7730 = vsel %vm3881, %v7660, 0
      %v7733 = vsel %vm3881, %v7661, 0
      %v7736 = vsel %vm3881, %v7662, 0
      %v7739 = vsel %vm3930, %v7687, 0
      %7741 = vmatprep.subr.bf16.mxu0 0
      %7742 = vmatpush1.bf16.msra.mxu0 %v7685
      %7743 = vmatprep.subr.bf16.mxu0 0
      %7744 = vmatpush1.bf16.msra.mxu0 %v7686
      %7745 = vmatprep.subr.bf16.mxu0 0
      %7746 = vmatpush1.bf16.msra.mxu0 %v7739
      %7747 = vmatprep.subr.bf16.mxu0 0
      %7748 = vmatpush1.bf16.msra.mxu0 0
      %7749 = vmatprep.subr.bf16.mxu0 0
      %7750 = vmatpush1.bf16.msra.mxu0 0
      %7751 = vmatprep.subr.bf16.mxu0 0
      %7752 = vmatpush1.bf16.msra.mxu0 0
      %7753 = vmatprep.subr.bf16.mxu0 0
      %7754 = vmatpush1.bf16.msra.mxu0 0
      %7755 = vmatprep.subr.bf16.mxu0 0
      %7756 = vmatpush1.bf16.msra.mxu0 0
      %7757 = vmatprep.subr.bf16.mxu0 0
      %7758 = vmatpush1.bf16.msra.mxu0 0
      %7759 = vmatprep.subr.bf16.mxu0 0
      %7760 = vmatpush1.bf16.msra.mxu0 0
      %7761 = vmatprep.subr.bf16.mxu0 0
      %7762 = vmatpush1.bf16.msra.mxu0 0
      %7763 = vmatprep.subr.bf16.mxu0 0
      %7764 = vmatpush1.bf16.msra.mxu0 0
      %7765 = vmatprep.subr.bf16.mxu0 0
      %7766 = vmatpush1.bf16.msra.mxu0 0
      %7767 = vmatprep.subr.bf16.mxu0 0
      %7768 = vmatpush1.bf16.msra.mxu0 0
      %7769 = vmatprep.subr.bf16.mxu0 0
      %7770 = vmatpush1.bf16.msra.mxu0 0
      %7771 = vmatprep.subr.bf16.mxu0 0
      %7772 = vmatpush1.bf16.msra.mxu0 0
      %7773 = vmatprep.mubr.bf16.mxu0 0
      %7774 = vmatmul.mubr.bf16.gmra.mrb[0].mxu0 %v7691
      %v7775 = vpop.f32.mrb[0].mxu0
      %v7776 = vadd.f32 %v7673, %v7775
      %v7777 = vpop.f32.mrb[0].mxu0
      %v7778 = vpop.f32.mrb[0].mxu0
      %v7779 = vadd.f32 %v7673, %v7778
      %v7780 = vpop.f32.mrb[0].mxu0
      %7781 = vmatprep.mubr.bf16.mxu0 0
      %7782 = vmatmul.mubr.bf16.gmra.mrb[0].mxu0 %v7694
      %v7783 = vpop.f32.mrb[0].mxu0
      %v7784 = vadd.f32 %v7673, %v7783
      %v7785 = vpop.f32.mrb[0].mxu0
      %v7786 = vpop.f32.mrb[0].mxu0
      %v7787 = vadd.f32 %v7673, %v7786
      %v7788 = vpop.f32.mrb[0].mxu0
      %7789 = vmatprep.mubr.bf16.mxu0 0
      %7790 = vmatmul.mubr.bf16.gmra.mrb[0].mxu0 %v7697
      %v7791 = vpop.f32.mrb[0].mxu0
      %v7792 = vadd.f32 %v7673, %v7791
      %v7793 = vpop.f32.mrb[0].mxu0
      %v7794 = vpop.f32.mrb[0].mxu0
      %v7795 = vadd.f32 %v7673, %v7794
      %v7796 = vpop.f32.mrb[0].mxu0
      %7797 = vmatprep.mubr.bf16.mxu0 0
      %7798 = vmatmul.mubr.bf16.gmra.mrb[0].mxu0 %v7700
      %v7799 = vpop.f32.mrb[0].mxu0
      %v7800 = vadd.f32 %v7673, %v7799
      %v7801 = vpop.f32.mrb[0].mxu0
      %v7802 = vpop.f32.mrb[0].mxu0
      %v7803 = vadd.f32 %v7673, %v7802
      %v7804 = vpop.f32.mrb[0].mxu0
      %7805 = vmatprep.mubr.bf16.mxu0 0
      %7806 = vmatmul.mubr.bf16.gmra.mrb[0].mxu0 %v7703
      %v7807 = vpop.f32.mrb[0].mxu0
      %v7808 = vadd.f32 %v7673, %v7807
      %v7809 = vpop.f32.mrb[0].mxu0
      %v7810 = vpop.f32.mrb[0].mxu0
      %v7811 = vadd.f32 %v7673, %v7810
      %v7812 = vpop.f32.mrb[0].mxu0
      %7813 = vmatprep.mubr.bf16.mxu0 0
      %7814 = vmatmul.mubr.bf16.gmra.mrb[0].mxu0 %v7706
      %v7815 = vpop.f32.mrb[0].mxu0
      %v7816 = vadd.f32 %v7673, %v7815
      %v7817 = vpop.f32.mrb[0].mxu0
      %v7818 = vpop.f32.mrb[0].mxu0
      %v7819 = vadd.f32 %v7673, %v7818
      %v7820 = vpop.f32.mrb[0].mxu0
      %7821 = vmatprep.mubr.bf16.mxu0 0
      %7822 = vmatmul.mubr.bf16.gmra.mrb[0].mxu0 %v7709
      %v7823 = vpop.f32.mrb[0].mxu0
      %v7824 = vadd.f32 %v7673, %v7823
      %v7825 = vpop.f32.mrb[0].mxu0
      %v7826 = vpop.f32.mrb[0].mxu0
      %v7827 = vadd.f32 %v7673, %v7826
      %v7828 = vpop.f32.mrb[0].mxu0
      %7829 = vmatprep.mubr.bf16.mxu0 0
      %7830 = vmatmul.mubr.bf16.gmra.mrb[0].mxu0 %v7712
      %v7831 = vpop.f32.mrb[0].mxu0
      %v7832 = vadd.f32 %v7673, %v7831
      %v7833 = vpop.f32.mrb[0].mxu0
      %v7834 = vpop.f32.mrb[0].mxu0
      %v7835 = vadd.f32 %v7673, %v7834
      %v7836 = vpop.f32.mrb[0].mxu0
      %7837 = vmatprep.mubr.bf16.mxu0 0
      %7838 = vmatmul.mubr.bf16.gmra.mrb[0].mxu0 %v7715
      %v7839 = vpop.f32.mrb[0].mxu0
      %v7840 = vadd.f32 %v7673, %v7839
      %v7841 = vpop.f32.mrb[0].mxu0
      %v7842 = vpop.f32.mrb[0].mxu0
      %v7843 = vadd.f32 %v7673, %v7842
      %v7844 = vpop.f32.mrb[0].mxu0
      %7845 = vmatprep.mubr.bf16.mxu0 0
      %7846 = vmatmul.mubr.bf16.gmra.mrb[0].mxu0 %v7718
      %v7847 = vpop.f32.mrb[0].mxu0
      %v7848 = vadd.f32 %v7673, %v7847
      %v7849 = vpop.f32.mrb[0].mxu0
      %v7850 = vpop.f32.mrb[0].mxu0
      %v7851 = vadd.f32 %v7673, %v7850
      %v7852 = vpop.f32.mrb[0].mxu0
      %7853 = vmatprep.mubr.bf16.mxu0 0
      %7854 = vmatmul.mubr.bf16.gmra.mrb[0].mxu0 %v7721
      %v7855 = vpop.f32.mrb[0].mxu0
      %v7856 = vadd.f32 %v7673, %v7855
      %v7857 = vpop.f32.mrb[0].mxu0
      %v7858 = vpop.f32.mrb[0].mxu0
      %v7859 = vadd.f32 %v7673, %v7858
      %v7860 = vpop.f32.mrb[0].mxu0
      %7861 = vmatprep.mubr.bf16.mxu0 0
      %7862 = vmatmul.mubr.bf16.gmra.mrb[0].mxu0 %v7724
      %v7863 = vpop.f32.mrb[0].mxu0
      %v7864 = vadd.f32 %v7673, %v7863
      %v7865 = vpop.f32.mrb[0].mxu0
      %v7866 = vpop.f32.mrb[0].mxu0
      %v7867 = vadd.f32 %v7673, %v7866
      %v7868 = vpop.f32.mrb[0].mxu0
      %7869 = vmatprep.mubr.bf16.mxu0 0
      %7870 = vmatmul.mubr.bf16.gmra.mrb[0].mxu0 %v7727
      %v7871 = vpop.f32.mrb[0].mxu0
      %v7872 = vadd.f32 %v7673, %v7871
      %v7873 = vpop.f32.mrb[0].mxu0
      %v7874 = vpop.f32.mrb[0].mxu0
      %v7875 = vadd.f32 %v7673, %v7874
      %v7876 = vpop.f32.mrb[0].mxu0
      %7877 = vmatprep.mubr.bf16.mxu0 0
      %7878 = vmatmul.mubr.bf16.gmra.mrb[0].mxu0 %v7730
      %v7879 = vpop.f32.mrb[0].mxu0
      %v7880 = vadd.f32 %v7673, %v7879
      %v7881 = vpop.f32.mrb[0].mxu0
      %v7882 = vpop.f32.mrb[0].mxu0
      %v7883 = vadd.f32 %v7673, %v7882
      %v7884 = vpop.f32.mrb[0].mxu0
      %7885 = vmatprep.mubr.bf16.mxu0 0
      %7886 = vmatmul.mubr.bf16.gmra.mrb[0].mxu0 %v7733
      %v7887 = vpop.f32.mrb[0].mxu0
      %v7888 = vadd.f32 %v7673, %v7887
      %v7889 = vpop.f32.mrb[0].mxu0
      %v7890 = vpop.f32.mrb[0].mxu0
      %v7891 = vadd.f32 %v7673, %v7890
      %v7892 = vpop.f32.mrb[0].mxu0
      %7893 = vmatprep.mubr.bf16.mxu0 0
      %7894 = vmatmul.mubr.bf16.gmra.mrb[0].mxu0 %v7736
      %v7895 = vpop.f32.mrb[0].mxu0
      %v7896 = vadd.f32 %v7673, %v7895
      %v7897 = vpop.f32.mrb[0].mxu0
      %v7898 = vpop.f32.mrb[0].mxu0
      %v7899 = vadd.f32 %v7673, %v7898
      %v7900 = vpop.f32.mrb[0].mxu0
      %7901 = vdwg.mxu0
      %v7902 = vadd.f32 %v7776, %v255
      %v7903 = vadd.f32 %v7779, %v256
      %v7904 = vadd.f32 %v7784, %v257
      %v7905 = vadd.f32 %v7787, %v258
      %v7906 = vadd.f32 %v7792, %v259
      %v7907 = vadd.f32 %v7795, %v260
      %v7908 = vadd.f32 %v7800, %v261
      %v7909 = vadd.f32 %v7803, %v262
      %v7910 = vadd.f32 %v7808, %v263
      %v7911 = vadd.f32 %v7811, %v264
      %v7912 = vadd.f32 %v7816, %v265
      %v7913 = vadd.f32 %v7819, %v266
      %v7914 = vadd.f32 %v7824, %v267
      %v7915 = vadd.f32 %v7827, %v268
      %v7916 = vadd.f32 %v7832, %v269
      %v7917 = vadd.f32 %v7835, %v270
      %v7918 = vadd.f32 %v7840, %v287
      %v7919 = vadd.f32 %v7843, %v288
      %v7920 = vadd.f32 %v7848, %v289
      %v7921 = vadd.f32 %v7851, %v290
      %v7922 = vadd.f32 %v7856, %v291
      %v7923 = vadd.f32 %v7859, %v292
      %v7924 = vadd.f32 %v7864, %v293
      %v7925 = vadd.f32 %v7867, %v294
      %v7926 = vadd.f32 %v7872, %v295
      %v7927 = vadd.f32 %v7875, %v296
      %v7928 = vadd.f32 %v7880, %v297
      %v7929 = vadd.f32 %v7883, %v298
      %v7930 = vadd.f32 %v7888, %v299
      %v7931 = vadd.f32 %v7891, %v300
      %v7932 = vadd.f32 %v7896, %v301
      %v7933 = vadd.f32 %v7899, %v302
      %v7934 = vmax.f32 %v7902, 0.0
      %v7935 = vmax.f32 %v7903, 0.0
      %v7936 = vmax.f32 %v7904, 0.0
      %v7937 = vmax.f32 %v7905, 0.0
      %v7938 = vmax.f32 %v7906, 0.0
      %v7939 = vmax.f32 %v7907, 0.0
      %v7940 = vmax.f32 %v7908, 0.0
      %v7941 = vmax.f32 %v7909, 0.0
      %v7942 = vmax.f32 %v7910, 0.0
      %v7943 = vmax.f32 %v7911, 0.0
      %v7944 = vmax.f32 %v7912, 0.0
      %v7945 = vmax.f32 %v7913, 0.0
      %v7946 = vmax.f32 %v7914, 0.0
      %v7947 = vmax.f32 %v7915, 0.0
      %v7948 = vmax.f32 %v7916, 0.0
      %v7949 = vmax.f32 %v7917, 0.0
      %v7950 = vmax.f32 %v7918, 0.0
      %v7951 = vmax.f32 %v7919, 0.0
      %v7952 = vmax.f32 %v7920, 0.0
      %v7953 = vmax.f32 %v7921, 0.0
      %v7954 = vmax.f32 %v7922, 0.0
      %v7955 = vmax.f32 %v7923, 0.0
      %v7956 = vmax.f32 %v7924, 0.0
      %v7957 = vmax.f32 %v7925, 0.0
      %v7958 = vmax.f32 %v7926, 0.0
      %v7959 = vmax.f32 %v7927, 0.0
      %v7960 = vmax.f32 %v7928, 0.0
      %v7961 = vmax.f32 %v7929, 0.0
      %v7962 = vmax.f32 %v7930, 0.0
      %v7963 = vmax.f32 %v7931, 0.0
      %v7964 = vmax.f32 %v7932, 0.0
      %v7965 = vmax.f32 %v7933, 0.0
      %7966 = vxpose.xlu0.b32.start [1/16] %v7934, 128
      %7967 = vxpose.xlu0.b32.cont [2/16] %v7935, 128
      %7968 = vxpose.xlu0.b32.cont [3/16] %v7936, 128
      %7969 = vxpose.xlu0.b32.cont [4/16] %v7937, 128
      %7970 = vxpose.xlu0.b32.cont [5/16] %v7938, 128
      %7971 = vxpose.xlu0.b32.cont [6/16] %v7939, 128
      %7972 = vxpose.xlu0.b32.cont [7/16] %v7940, 128
      %7973 = vxpose.xlu0.b32.cont [8/16] %v7941, 128
      %7974 = vxpose.xlu0.b32.cont [9/16] %v7942, 128
      %7975 = vxpose.xlu0.b32.cont [10/16] %v7943, 128
      %7976 = vxpose.xlu0.b32.cont [11/16] %v7944, 128
      %7977 = vxpose.xlu0.b32.cont [12/16] %v7945, 128
      %7978 = vxpose.xlu0.b32.cont [13/16] %v7946, 128
      %7979 = vxpose.xlu0.b32.cont [14/16] %v7947, 128
      %7980 = vxpose.xlu0.b32.cont [15/16] %v7948, 128
      %7981 = vxpose.xlu0.b32.end [16/16] %v7949, 128
      %v7982 = vpop.trf.xlu0
      %v7983 = vpop.trf.xlu0
      %v7984 = vpop.trf.xlu0
      %v7985 = vpop.trf.xlu0
      %v7986 = vpop.trf.xlu0
      %v7987 = vpop.trf.xlu0
      %v7988 = vpop.trf.xlu0
      %v7989 = vpop.trf.xlu0
      %v7990 = vpop.trf.xlu0
      %v7991 = vpop.trf.xlu0
      %v7992 = vpop.trf.xlu0
      %v7993 = vpop.trf.xlu0
      %v7994 = vpop.trf.xlu0
      %v7995 = vpop.trf.xlu0
      %v7996 = vpop.trf.xlu0
      %v7997 = vpop.trf.xlu0
      %7998 = vxpose.xlu0.b32.start [1/16] %v7950, 128
      %7999 = vxpose.xlu0.b32.cont [2/16] %v7951, 128
      %8000 = vxpose.xlu0.b32.cont [3/16] %v7952, 128
      %8001 = vxpose.xlu0.b32.cont [4/16] %v7953, 128
      %8002 = vxpose.xlu0.b32.cont [5/16] %v7954, 128
      %8003 = vxpose.xlu0.b32.cont [6/16] %v7955, 128
      %8004 = vxpose.xlu0.b32.cont [7/16] %v7956, 128
      %8005 = vxpose.xlu0.b32.cont [8/16] %v7957, 128
      %8006 = vxpose.xlu0.b32.cont [9/16] %v7958, 128
      %8007 = vxpose.xlu0.b32.cont [10/16] %v7959, 128
      %8008 = vxpose.xlu0.b32.cont [11/16] %v7960, 128
      %8009 = vxpose.xlu0.b32.cont [12/16] %v7961, 128
      %8010 = vxpose.xlu0.b32.cont [13/16] %v7962, 128
      %8011 = vxpose.xlu0.b32.cont [14/16] %v7963, 128
      %8012 = vxpose.xlu0.b32.cont [15/16] %v7964, 128
      %8013 = vxpose.xlu0.b32.end [16/16] %v7965, 128
      %v8014 = vpop.trf.xlu0
      %v8015 = vpop.trf.xlu0
      %v8016 = vpop.trf.xlu0
      %v8017 = vpop.trf.xlu0
      %v8018 = vpop.trf.xlu0
      %v8019 = vpop.trf.xlu0
      %v8020 = vpop.trf.xlu0
      %v8021 = vpop.trf.xlu0
      %v8022 = vpop.trf.xlu0
      %v8023 = vpop.trf.xlu0
      %v8024 = vpop.trf.xlu0
      %v8025 = vpop.trf.xlu0
      %v8026 = vpop.trf.xlu0
      %v8027 = vpop.trf.xlu0
      %v8028 = vpop.trf.xlu0
      %v8029 = vpop.trf.xlu0
      %v8032 = vcombine.low %v7982, %v8014
      %8034 = vst [vmem:[%s224] sm:$0xff] %v8032
      %p8035 = scmp.lt.s32.totalorder %s16, 1
      %s8036 = scalar_select %p8035, %s16, 1
      %s8037 = smul.addr %s8036, 2
      %s8038 = smul.addr %s8037, 4
      %s8039 = scalar_lea.vmem %s5, %s8038
      // Predicated region
      $region41: #{basic_block.1} parent=39 // pred_check
        %p8040 = pneg %p144
      $region42: #{basic_block.1} parent=39 // pred_check_branch
        %8042 = sbr.rel (%p8040) target = $region44
      $region43: #{basic_block.1} parent=39 // pred_region
        _
      $region44: #{basic_block.1} parent=39 // pred_fallthru
        _
    $region40: #{basic_block.1} parent=5 // pred_fallthru
      _
    %p8043 = scmp.le.s32.totalorder 2, %s11
    // Predicated region
    $region45: #{basic_block.1} parent=5 // pred_check
      %p8044 = pneg %p8043
    $region46: #{basic_block.1} parent=5 // pred_check_branch
      %8046 = sbr.rel (%p8044) target = $region48
    $region47: #{basic_block.1} parent=5 // pred_region
      %s8047 = ssub.s32 %s11, 2
      // Predicated region
      $region49: #{basic_block.1} parent=47 // pred_check
        %p8048 = pneg %p150
      $region50: #{basic_block.1} parent=47 // pred_check_branch
        %8050 = sbr.rel (%p8048) target = $region52
      $region51: #{basic_block.1} parent=47 // pred_region
        %p8051 = scmp.lt.s32.totalorder %s17, 1
        %s8052 = scalar_select %p8051, %s17, 1
        %s8053 = smul.addr %s8052, 2
        %s8054 = smul.addr %s8053, 4
        %s8055 = scalar_lea.vmem %s5, %s8054
      $region52: #{basic_block.1} parent=47 // pred_fallthru
        _
    $region48: #{basic_block.1} parent=5 // pred_fallthru
      _
  $region6: #{basic_block.1} parent=0 // loop_footer
    %s15 = sadd.s32 1, %s11
  $region7: #{basic_block.1} parent=0 // loop_footer_branch
    %10 = sbr.rel target = $region3
  $region8: #{basic_block.1} parent=0 // loop_exit
    _

</llo_original>
